<compile_context>
chip_gen: v6e
topology: v6e:2x2x1
jax: 0.10.0
libtpu: 0.0.40
codegen_flags: <defaults>
</compile_context>

<pallas_src>
import math
from functools import partial

import jax
import jax.numpy as jnp
from jax.experimental import pallas as pl
from jax.experimental.pallas import tpu as pltpu


# ----------------------------------------------------------------------------------
# Fused residual-block kernel (one batch element per grid step)
# ----------------------------------------------------------------------------------
def _resblock_kernel(xpad_ref, xid_ref, w1_ref, b1_ref, w2_ref, b2_ref, o_ref, *,
                     H, W, C, res_scale):
    # xpad_ref: (H+2, W+2, C) bf16   zero-padded input (conv operand)
    # xid_ref : (H,   W,   C) f32    identity / skip path (kept exact in f32)
    # w*_ref  : (9*C, C)      bf16   conv weights with taps folded into K (ky, kx, cin)
    # b*_ref  : (1, C)        f32
    # o_ref   : (H, W, C)     f32

    def conv3x3(src, w, b):
        # src: (H+2, W+2, C) bf16 array. Build the im2col patch by concatenating the
        # 9 shifted slices along the channel axis -> (H*W, 9*C), then one MXU matmul.
        cols = [src[ky:ky + H, kx:kx + W, :].reshape(H * W, C)
                for ky in range(3) for kx in range(3)]
        patch = jnp.concatenate(cols, axis=-1)                    # (H*W, 9C) bf16
        acc = jnp.dot(patch, w, preferred_element_type=jnp.float32)  # (H*W, C) f32
        return acc + b                                            # bias broadcast (1, C)

    xp = xpad_ref[...]                                            # (H+2, W+2, C) bf16

    # conv1 + ReLU
    y1 = jnp.maximum(conv3x3(xp, w1_ref[...], b1_ref[...]), 0.0)  # (H*W, C) f32
    y1 = y1.reshape(H, W, C).astype(jnp.bfloat16)

    # zero-pad conv1 output by 1 on each spatial side (built by concatenation; no scratch
    # state is carried across grid steps, so the "parallel" batch axis stays safe).
    zrow = jnp.zeros((1, W, C), jnp.bfloat16)
    zcol = jnp.zeros((H + 2, 1, C), jnp.bfloat16)
    y1p = jnp.concatenate([zcol, jnp.concatenate([zrow, y1, zrow], axis=0), zcol], axis=1)

    # conv2
    y2 = conv3x3(y1p, w2_ref[...], b2_ref[...])                   # (H*W, C) f32

    # residual add (identity path exact f32)
    res = y2 if res_scale == 1.0 else res_scale * y2
    out = xid_ref[...].reshape(H * W, C) + res
    o_ref[...] = out.reshape(H, W, C).astype(o_ref.dtype)


def _fold_weight(w):
    """(Cout, Cin, 3, 3) -> (9*Cin, Cout) bf16 with K ordered (ky, kx, cin)."""
    cout = w.shape[0]
    return jnp.transpose(w, (2, 3, 1, 0)).reshape(-1, cout).astype(jnp.bfloat16)


@partial(jax.jit, static_argnames=("res_scale",))
def residual_block_nobn(x, w1, b1, w2, b2, res_scale=1.0):
    """x: (N, C, H, W) f32; w*: (C, C, 3, 3); b*: (C,). Returns (N, C, H, W) f32."""
    N, C, H, W = x.shape
    x_nhwc = jnp.transpose(x, (0, 2, 3, 1)).astype(jnp.float32)       # once per forward
    xpad = jnp.pad(x_nhwc, ((0, 0), (1, 1), (1, 1), (0, 0))).astype(jnp.bfloat16)

    w1f, w2f = _fold_weight(w1), _fold_weight(w2)
    b1r = b1.reshape(1, C).astype(jnp.float32)
    b2r = b2.reshape(1, C).astype(jnp.float32)

    kern = partial(_resblock_kernel, H=H, W=W, C=C, res_scale=float(res_scale))
    out_nhwc = pl.pallas_call(
        kern,
        grid=(N,),
        in_specs=[
            pl.BlockSpec((None, H + 2, W + 2, C), lambda n: (n, 0, 0, 0)),  # xpad (bf16)
            pl.BlockSpec((None, H, W, C), lambda n: (n, 0, 0, 0)),          # identity (f32)
            pl.BlockSpec((9 * C, C), lambda n: (0, 0)),                     # w1 folded
            pl.BlockSpec((1, C), lambda n: (0, 0)),                         # b1
            pl.BlockSpec((9 * C, C), lambda n: (0, 0)),                     # w2 folded
            pl.BlockSpec((1, C), lambda n: (0, 0)),                         # b2
        ],
        out_specs=pl.BlockSpec((None, H, W, C), lambda n: (n, 0, 0, 0)),
        out_shape=jax.ShapeDtypeStruct((N, H, W, C), jnp.float32),
        compiler_params=pltpu.CompilerParams(dimension_semantics=("parallel",)),
    )(xpad, x_nhwc, w1f, b1r, w2f, b2r)
    return jnp.transpose(out_nhwc, (0, 3, 1, 2))


# ----------------------------------------------------------------------------------
# Pure-JAX f32 reference (semantics check)
# ----------------------------------------------------------------------------------
def _ref_forward(x, w1, b1, w2, b2, res_scale=1.0):
    def conv(z, w, b):
        y = jax.lax.conv_general_dilated(
            z, w, window_strides=(1, 1), padding=((1, 1), (1, 1)),
            dimension_numbers=("NCHW", "OIHW", "NCHW"))
        return y + b[None, :, None, None]

    y = jax.nn.relu(conv(x, w1, b1))
    y = conv(y, w2, b2)
    return x + res_scale * y


# ----------------------------------------------------------------------------------
if __name__ == "__main__":
    # ResidualBlockNoBN(mid_channels=64, res_scale=1.0) at a small spatial size.
    B, C, H, W = 2, 64, 16, 16
    res_scale = 1.0

    key = jax.random.PRNGKey(0)
    kx, kw1, kw2, kb1, kb2 = jax.random.split(key, 5)
    x = jax.random.uniform(kx, (B, C, H, W), jnp.float32)

    # Kaiming(fan_in) scaled by 0.1, as in init_weights(); small random biases to
    # exercise the bias path.
    std = 0.1 * math.sqrt(2.0 / (C * 3 * 3))
    w1 = std * jax.random.normal(kw1, (C, C, 3, 3), jnp.float32)
    w2 = std * jax.random.normal(kw2, (C, C, 3, 3), jnp.float32)
    b1 = 0.01 * jax.random.normal(kb1, (C,), jnp.float32)
    b2 = 0.01 * jax.random.normal(kb2, (C,), jnp.float32)

    out = residual_block_nobn(x, w1, b1, w2, b2, res_scale=res_scale)
    out = jax.block_until_ready(out)

    ref = _ref_forward(x, w1, b1, w2, b2, res_scale)
    max_err = float(jnp.max(jnp.abs(out - ref)))

    assert out.shape == (B, C, H, W), out.shape
    assert bool(jnp.all(jnp.isfinite(out)))
    assert max_err < 2e-2, f"max abs err {max_err}"
    print("KERNEL_OK")
</pallas_src>

<mosaic_0001>
module attributes {stable_mosaic.version = 11 : i64} {
  func.func @_resblock_kernel(%arg0: i32, %arg1: memref<1x18x18x64xbf16, #tpu.memory_space<vmem>>, %arg2: memref<1x16x16x64xf32, #tpu.memory_space<vmem>>, %arg3: memref<576x64xbf16, #tpu.memory_space<vmem>>, %arg4: memref<1x64xf32, #tpu.memory_space<vmem>>, %arg5: memref<576x64xbf16, #tpu.memory_space<vmem>>, %arg6: memref<1x64xf32, #tpu.memory_space<vmem>>, %arg7: memref<1x16x16x64xf32, #tpu.memory_space<vmem>>) attributes {dimension_semantics = [#tpu.dimension_semantics<parallel>], iteration_bounds = array<i64: 2>, scalar_prefetch = 0 : i64, scratch_operands = 0 : i64, tpu.core_type = #tpu.core_type<tc>, window_params = [{transform_indices = @transform_0, window_bounds = array<i64: 1, 18, 18, 64>}, {transform_indices = @transform_1, window_bounds = array<i64: 1, 16, 16, 64>}, {pipeline_mode = #tpu.pipeline_mode<synchronous>, transform_indices = @transform_2, window_bounds = array<i64: 576, 64>}, {pipeline_mode = #tpu.pipeline_mode<synchronous>, transform_indices = @transform_3, window_bounds = array<i64: 1, 64>}, {pipeline_mode = #tpu.pipeline_mode<synchronous>, transform_indices = @transform_4, window_bounds = array<i64: 576, 64>}, {pipeline_mode = #tpu.pipeline_mode<synchronous>, transform_indices = @transform_5, window_bounds = array<i64: 1, 64>}, {transform_indices = @transform_6, window_bounds = array<i64: 1, 16, 16, 64>}]} {
    %c0 = arith.constant 0 : index
    %c0_0 = arith.constant 0 : index
    %c0_1 = arith.constant 0 : index
    %c0_2 = arith.constant 0 : index
    %0 = vector.load %arg1[%c0, %c0_0, %c0_1, %c0_2] : memref<1x18x18x64xbf16, #tpu.memory_space<vmem>>, vector<1x18x18x64xbf16>
    %1 = vector.shape_cast %0 : vector<1x18x18x64xbf16> to vector<18x18x64xbf16>
    %c0_3 = arith.constant 0 : index
    %c0_4 = arith.constant 0 : index
    %2 = vector.load %arg3[%c0_3, %c0_4] : memref<576x64xbf16, #tpu.memory_space<vmem>>, vector<576x64xbf16>
    %c0_5 = arith.constant 0 : index
    %c0_6 = arith.constant 0 : index
    %3 = vector.load %arg4[%c0_5, %c0_6] : memref<1x64xf32, #tpu.memory_space<vmem>>, vector<1x64xf32>
    %4 = vector.extract_strided_slice %1 {offsets = [0, 0, 0], sizes = [16, 16, 64], strides = [1, 1, 1]} : vector<18x18x64xbf16> to vector<16x16x64xbf16>
    %5 = vector.shape_cast %4 : vector<16x16x64xbf16> to vector<256x64xbf16>
    %6 = vector.extract_strided_slice %1 {offsets = [0, 1, 0], sizes = [16, 16, 64], strides = [1, 1, 1]} : vector<18x18x64xbf16> to vector<16x16x64xbf16>
    %7 = vector.shape_cast %6 : vector<16x16x64xbf16> to vector<256x64xbf16>
    %8 = vector.extract_strided_slice %1 {offsets = [0, 2, 0], sizes = [16, 16, 64], strides = [1, 1, 1]} : vector<18x18x64xbf16> to vector<16x16x64xbf16>
    %9 = vector.shape_cast %8 : vector<16x16x64xbf16> to vector<256x64xbf16>
    %10 = vector.extract_strided_slice %1 {offsets = [1, 0, 0], sizes = [16, 16, 64], strides = [1, 1, 1]} : vector<18x18x64xbf16> to vector<16x16x64xbf16>
    %11 = vector.shape_cast %10 : vector<16x16x64xbf16> to vector<256x64xbf16>
    %12 = vector.extract_strided_slice %1 {offsets = [1, 1, 0], sizes = [16, 16, 64], strides = [1, 1, 1]} : vector<18x18x64xbf16> to vector<16x16x64xbf16>
    %13 = vector.shape_cast %12 : vector<16x16x64xbf16> to vector<256x64xbf16>
    %14 = vector.extract_strided_slice %1 {offsets = [1, 2, 0], sizes = [16, 16, 64], strides = [1, 1, 1]} : vector<18x18x64xbf16> to vector<16x16x64xbf16>
    %15 = vector.shape_cast %14 : vector<16x16x64xbf16> to vector<256x64xbf16>
    %16 = vector.extract_strided_slice %1 {offsets = [2, 0, 0], sizes = [16, 16, 64], strides = [1, 1, 1]} : vector<18x18x64xbf16> to vector<16x16x64xbf16>
    %17 = vector.shape_cast %16 : vector<16x16x64xbf16> to vector<256x64xbf16>
    %18 = vector.extract_strided_slice %1 {offsets = [2, 1, 0], sizes = [16, 16, 64], strides = [1, 1, 1]} : vector<18x18x64xbf16> to vector<16x16x64xbf16>
    %19 = vector.shape_cast %18 : vector<16x16x64xbf16> to vector<256x64xbf16>
    %20 = vector.extract_strided_slice %1 {offsets = [2, 2, 0], sizes = [16, 16, 64], strides = [1, 1, 1]} : vector<18x18x64xbf16> to vector<16x16x64xbf16>
    %21 = vector.shape_cast %20 : vector<16x16x64xbf16> to vector<256x64xbf16>
    %22 = tpu.concatenate %5, %7, %9, %11, %13, %15, %17, %19, %21 in 1 : vector<256x64xbf16>, vector<256x64xbf16>, vector<256x64xbf16>, vector<256x64xbf16>, vector<256x64xbf16>, vector<256x64xbf16>, vector<256x64xbf16>, vector<256x64xbf16>, vector<256x64xbf16> -> vector<256x576xbf16>
    %cst = arith.constant dense<0.000000e+00> : vector<256x64xf32>
    %23 = tpu.matmul %22, %2, %cst {dimension_numbers = #tpu.dot_dimension_numbers<[1], [0], [0], [1], [0, 0, 1, 1], [], []>} : vector<256x576xbf16>, vector<576x64xbf16>, vector<256x64xf32> -> vector<256x64xf32>
    %24 = vector.broadcast %3 : vector<1x64xf32> to vector<256x64xf32>
    %25 = arith.addf %23, %24 : vector<256x64xf32>
    %cst_7 = arith.constant 0.000000e+00 : f32
    %26 = vector.broadcast %cst_7 : f32 to vector<256x64xf32>
    %27 = arith.maximumf %25, %26 : vector<256x64xf32>
    %28 = vector.shape_cast %27 : vector<256x64xf32> to vector<16x16x64xf32>
    %29 = arith.truncf %28 : vector<16x16x64xf32> to vector<16x16x64xbf16>
    %cst_8 = arith.constant 0.000000e+00 : bf16
    %30 = vector.broadcast %cst_8 : bf16 to vector<1x16x64xbf16>
    %cst_9 = arith.constant 0.000000e+00 : bf16
    %31 = vector.broadcast %cst_9 : bf16 to vector<18x1x64xbf16>
    %32 = tpu.concatenate %30, %29, %30 in 0 : vector<1x16x64xbf16>, vector<16x16x64xbf16>, vector<1x16x64xbf16> -> vector<18x16x64xbf16>
    %33 = tpu.concatenate %31, %32, %31 in 1 : vector<18x1x64xbf16>, vector<18x16x64xbf16>, vector<18x1x64xbf16> -> vector<18x18x64xbf16>
    %c0_10 = arith.constant 0 : index
    %c0_11 = arith.constant 0 : index
    %34 = vector.load %arg5[%c0_10, %c0_11] : memref<576x64xbf16, #tpu.memory_space<vmem>>, vector<576x64xbf16>
    %c0_12 = arith.constant 0 : index
    %c0_13 = arith.constant 0 : index
    %35 = vector.load %arg6[%c0_12, %c0_13] : memref<1x64xf32, #tpu.memory_space<vmem>>, vector<1x64xf32>
    %36 = vector.extract_strided_slice %33 {offsets = [0, 0, 0], sizes = [16, 16, 64], strides = [1, 1, 1]} : vector<18x18x64xbf16> to vector<16x16x64xbf16>
    %37 = vector.shape_cast %36 : vector<16x16x64xbf16> to vector<256x64xbf16>
    %38 = vector.extract_strided_slice %33 {offsets = [0, 1, 0], sizes = [16, 16, 64], strides = [1, 1, 1]} : vector<18x18x64xbf16> to vector<16x16x64xbf16>
    %39 = vector.shape_cast %38 : vector<16x16x64xbf16> to vector<256x64xbf16>
    %40 = vector.extract_strided_slice %33 {offsets = [0, 2, 0], sizes = [16, 16, 64], strides = [1, 1, 1]} : vector<18x18x64xbf16> to vector<16x16x64xbf16>
    %41 = vector.shape_cast %40 : vector<16x16x64xbf16> to vector<256x64xbf16>
    %42 = vector.extract_strided_slice %33 {offsets = [1, 0, 0], sizes = [16, 16, 64], strides = [1, 1, 1]} : vector<18x18x64xbf16> to vector<16x16x64xbf16>
    %43 = vector.shape_cast %42 : vector<16x16x64xbf16> to vector<256x64xbf16>
    %44 = vector.extract_strided_slice %33 {offsets = [1, 1, 0], sizes = [16, 16, 64], strides = [1, 1, 1]} : vector<18x18x64xbf16> to vector<16x16x64xbf16>
    %45 = vector.shape_cast %44 : vector<16x16x64xbf16> to vector<256x64xbf16>
    %46 = vector.extract_strided_slice %33 {offsets = [1, 2, 0], sizes = [16, 16, 64], strides = [1, 1, 1]} : vector<18x18x64xbf16> to vector<16x16x64xbf16>
    %47 = vector.shape_cast %46 : vector<16x16x64xbf16> to vector<256x64xbf16>
    %48 = vector.extract_strided_slice %33 {offsets = [2, 0, 0], sizes = [16, 16, 64], strides = [1, 1, 1]} : vector<18x18x64xbf16> to vector<16x16x64xbf16>
    %49 = vector.shape_cast %48 : vector<16x16x64xbf16> to vector<256x64xbf16>
    %50 = vector.extract_strided_slice %33 {offsets = [2, 1, 0], sizes = [16, 16, 64], strides = [1, 1, 1]} : vector<18x18x64xbf16> to vector<16x16x64xbf16>
    %51 = vector.shape_cast %50 : vector<16x16x64xbf16> to vector<256x64xbf16>
    %52 = vector.extract_strided_slice %33 {offsets = [2, 2, 0], sizes = [16, 16, 64], strides = [1, 1, 1]} : vector<18x18x64xbf16> to vector<16x16x64xbf16>
    %53 = vector.shape_cast %52 : vector<16x16x64xbf16> to vector<256x64xbf16>
    %54 = tpu.concatenate %37, %39, %41, %43, %45, %47, %49, %51, %53 in 1 : vector<256x64xbf16>, vector<256x64xbf16>, vector<256x64xbf16>, vector<256x64xbf16>, vector<256x64xbf16>, vector<256x64xbf16>, vector<256x64xbf16>, vector<256x64xbf16>, vector<256x64xbf16> -> vector<256x576xbf16>
    %cst_14 = arith.constant dense<0.000000e+00> : vector<256x64xf32>
    %55 = tpu.matmul %54, %34, %cst_14 {dimension_numbers = #tpu.dot_dimension_numbers<[1], [0], [0], [1], [0, 0, 1, 1], [], []>} : vector<256x576xbf16>, vector<576x64xbf16>, vector<256x64xf32> -> vector<256x64xf32>
    %56 = vector.broadcast %35 : vector<1x64xf32> to vector<256x64xf32>
    %57 = arith.addf %55, %56 : vector<256x64xf32>
    %c0_15 = arith.constant 0 : index
    %c0_16 = arith.constant 0 : index
    %c0_17 = arith.constant 0 : index
    %c0_18 = arith.constant 0 : index
    %58 = vector.load %arg2[%c0_15, %c0_16, %c0_17, %c0_18] : memref<1x16x16x64xf32, #tpu.memory_space<vmem>>, vector<1x16x16x64xf32>
    %59 = vector.shape_cast %58 : vector<1x16x16x64xf32> to vector<16x16x64xf32>
    %60 = vector.shape_cast %59 : vector<16x16x64xf32> to vector<256x64xf32>
    %61 = arith.addf %60, %57 : vector<256x64xf32>
    %62 = vector.shape_cast %61 : vector<256x64xf32> to vector<16x16x64xf32>
    %c0_19 = arith.constant 0 : index
    %c0_20 = arith.constant 0 : index
    %c0_21 = arith.constant 0 : index
    %c0_22 = arith.constant 0 : index
    %63 = vector.load %arg7[%c0_19, %c0_20, %c0_21, %c0_22] : memref<1x16x16x64xf32, #tpu.memory_space<vmem>>, vector<1x16x16x64xf32>
    %64 = vector.shape_cast %63 : vector<1x16x16x64xf32> to vector<16x16x64xf32>
    %65 = vector.shape_cast %62 : vector<16x16x64xf32> to vector<1x16x16x64xf32>
    tpu.vector_store %arg7[%c0_19, %c0_20, %c0_21, %c0_22], %65 {strides = array<i32>} : memref<1x16x16x64xf32, #tpu.memory_space<vmem>>, vector<1x16x16x64xf32>,
    return
  }
  func.func @transform_0(%arg0: i32) -> (i32, i32, i32, i32) {
    %c0_i32 = arith.constant 0 : i32
    %c0_i32_0 = arith.constant 0 : i32
    %c0_i32_1 = arith.constant 0 : i32
    %c0_i32_2 = arith.constant 0 : i32
    return %arg0, %c0_i32, %c0_i32_0, %c0_i32_1 : i32, i32, i32, i32
  }
  func.func @transform_1(%arg0: i32) -> (i32, i32, i32, i32) {
    %c0_i32 = arith.constant 0 : i32
    %c0_i32_0 = arith.constant 0 : i32
    %c0_i32_1 = arith.constant 0 : i32
    %c0_i32_2 = arith.constant 0 : i32
    return %arg0, %c0_i32, %c0_i32_0, %c0_i32_1 : i32, i32, i32, i32
  }
  func.func @transform_2(%arg0: i32) -> (i32, i32) {
    %c0_i32 = arith.constant 0 : i32
    %c0_i32_0 = arith.constant 0 : i32
    %c0_i32_1 = arith.constant 0 : i32
    return %c0_i32, %c0_i32_0 : i32, i32
  }
  func.func @transform_3(%arg0: i32) -> (i32, i32) {
    %c0_i32 = arith.constant 0 : i32
    %c0_i32_0 = arith.constant 0 : i32
    %c0_i32_1 = arith.constant 0 : i32
    return %c0_i32, %c0_i32_0 : i32, i32
  }
  func.func @transform_4(%arg0: i32) -> (i32, i32) {
    %c0_i32 = arith.constant 0 : i32
    %c0_i32_0 = arith.constant 0 : i32
    %c0_i32_1 = arith.constant 0 : i32
    return %c0_i32, %c0_i32_0 : i32, i32
  }
  func.func @transform_5(%arg0: i32) -> (i32, i32) {
    %c0_i32 = arith.constant 0 : i32
    %c0_i32_0 = arith.constant 0 : i32
    %c0_i32_1 = arith.constant 0 : i32
    return %c0_i32, %c0_i32_0 : i32, i32
  }
  func.func @transform_6(%arg0: i32) -> (i32, i32, i32, i32) {
    %c0_i32 = arith.constant 0 : i32
    %c0_i32_0 = arith.constant 0 : i32
    %c0_i32_1 = arith.constant 0 : i32
    %c0_i32_2 = arith.constant 0 : i32
    return %arg0, %c0_i32, %c0_i32_0, %c0_i32_1 : i32, i32, i32, i32
  }
}

</mosaic_0001>

<llo_original>
// kernel: residual_block_nobn.1
$region0: #{residual_block_nobn.1}
  #allocation0 [shape = 'u32[]', space=smem, size = 0x4, offset = 0x4, fixed_abs, tag = 'smem constant byte address 0x4 - core index']
  #allocation1 [shape = 'u32[144,128]{1,0:T(1,128)}', space=vmem, size = 0x12000, scoped, tag = 'internal scratch']
  %s0 = inlined_call_operand.vmem [shape: bf16[2,18,18,64], index: 0, kind: input, shape index: {}]
  %s1 = inlined_call_operand.vmem [shape: f32[2,16,16,64], index: 1, kind: input, shape index: {}]
  %s2 = inlined_call_operand.vmem [shape: bf16[576,64], index: 2, kind: input, shape index: {}]
  %s3 = inlined_call_operand.vmem [shape: f32[1,64], index: 3, kind: input, shape index: {}]
  %s4 = inlined_call_operand.vmem [shape: bf16[576,64], index: 4, kind: input, shape index: {}]
  %s5 = inlined_call_operand.vmem [shape: f32[1,64], index: 5, kind: input, shape index: {}]
  %s6 = inlined_call_operand.hbm [shape: f32[2,16,16,64], index: 6, kind: output, shape index: {}]
  %s7 = sld [smem:[#allocation0]]
  $region57: #{residual_block_nobn.1} parent=0
    _
  %s9 = ssub.s32 1, %s7
  %s10 = scalar_select 0, %s9, %s7
  $region1: #{residual_block_nobn.1} parent=0
    #allocation2 [shape = 'u8[262144]{0}', space=vmem, size = 0x40000, scoped, tag = 'output window, operand 0']
    #allocation3 [shape = 's32[2]{0}', space=sflag, size = 0x8, scoped, tag = 'scoped memory for residual_block_nobn.1']
    %11 = vsyncpa [#allocation3], 0
    %s12 = scalar_lea.sflag [#allocation3], 1
    %13 = vsyncpa %s12, 0
    loop: start=0, step=1, limit=4
    $region2: #{residual_block_nobn.1} parent=1 // loop_pre_header
      _
    $region3: #{residual_block_nobn.1} parent=1 // loop_header
      %s15 = sphi 0, %s19
      %p16 = scmp.ge.s32.totalorder %s15, 4
      %s25 = sphi 0, %s27
      %s28 = sphi 0, %s25
      %s29 = sphi 0, %s28
      %s45 = sphi 0, %s29
      %s51 = sphi 0, %s53
      %s54 = sphi 0, %s51
      %s55 = sphi 0, %s54
      %s71 = sphi 0, %s55
      %s75 = sphi 0, %s75
      %s77 = sphi 0, %s75
      %s78 = sphi 0, %s77
      %s92 = sphi 0, %s78
      %s96 = sphi 0, %s96
      %s98 = sphi 0, %s96
      %s99 = sphi 0, %s98
      %s113 = sphi 0, %s99
      %s117 = sphi 0, %s117
      %s119 = sphi 0, %s117
      %s120 = sphi 0, %s119
      %s134 = sphi 0, %s120
      %s138 = sphi 0, %s138
      %s140 = sphi 0, %s138
      %s141 = sphi 0, %s140
      %s155 = sphi 0, %s141
      %s161 = sphi 0, %s163
      %s164 = sphi 0, %s161
      %s165 = sphi 0, %s164
      %s181 = sphi 0, %s165
    $region4: #{residual_block_nobn.1} parent=1 // loop_header_branch
      %18 = sbr.rel (%p16) target = $region8
    $region5: #{residual_block_nobn.1} parent=1 // loop_body
      %s20 = ssub.s32 %s15, 1
      %s21 = ssub.s32 %s15, 2
      %s22 = sadd.s32 %s15, 1
      %s23 = ssub.s32 %s15, %s22
      %p24 = scmp.eq.s32.totalorder %s23, 0
      %s26 = sadd.s32 %s25, 1
      %s27 = scalar_select %p24, %s25, %s26
      %p30 = pneg %p24
      %p31 = scmp.eq.s32.totalorder %s15, 1
      %p32 = por %p30, %p31
      %p33 = scmp.ne.s32.totalorder %s25, %s28
      %p34 = scmp.eq.s32.totalorder %s15, 0
      %p35 = por %p33, %p34
      %p36 = scmp.ne.s32.totalorder %s25, %s28
      %p37 = scmp.eq.s32.totalorder %s20, 1
      %p38 = por %p36, %p37
      %p39 = scmp.ne.s32.totalorder %s28, %s29
      %p40 = scmp.eq.s32.totalorder %s20, 0
      %p41 = por %p39, %p40
      %p42 = scmp.ne.s32.totalorder %s28, %s29
      %p43 = scmp.eq.s32.totalorder %s21, 1
      %p44 = por %p42, %p43
      %p46 = scmp.ne.s32.totalorder %s29, %s45
      %p47 = scmp.eq.s32.totalorder %s21, 0
      %p48 = por %p46, %p47
      %s49 = ssub.s32 %s15, %s22
      %p50 = scmp.eq.s32.totalorder %s49, 0
      %s52 = sadd.s32 %s51, 1
      %s53 = scalar_select %p50, %s51, %s52
      %p56 = pneg %p50
      %p57 = scmp.eq.s32.totalorder %s15, 1
      %p58 = por %p56, %p57
      %p59 = scmp.ne.s32.totalorder %s51, %s54
      %p60 = scmp.eq.s32.totalorder %s15, 0
      %p61 = por %p59, %p60
      %p62 = scmp.ne.s32.totalorder %s51, %s54
      %p63 = scmp.eq.s32.totalorder %s20, 1
      %p64 = por %p62, %p63
      %p65 = scmp.ne.s32.totalorder %s54, %s55
      %p66 = scmp.eq.s32.totalorder %s20, 0
      %p67 = por %p65, %p66
      %p68 = scmp.ne.s32.totalorder %s54, %s55
      %p69 = scmp.eq.s32.totalorder %s21, 1
      %p70 = por %p68, %p69
      %p72 = scmp.ne.s32.totalorder %s55, %s71
      %p73 = scmp.eq.s32.totalorder %s21, 0
      %p74 = por %p72, %p73
      %s76 = sadd.s32 %s75, 1
      %p79 = scmp.eq.s32.totalorder %s15, 1
      %p80 = scmp.ne.s32.totalorder %s75, %s77
      %p81 = scmp.eq.s32.totalorder %s15, 0
      %p82 = por %p80, %p81
      %p83 = scmp.ne.s32.totalorder %s75, %s77
      %p84 = scmp.eq.s32.totalorder %s20, 1
      %p85 = por %p83, %p84
      %p86 = scmp.ne.s32.totalorder %s77, %s78
      %p87 = scmp.eq.s32.totalorder %s20, 0
      %p88 = por %p86, %p87
      %p89 = scmp.ne.s32.totalorder %s77, %s78
      %p90 = scmp.eq.s32.totalorder %s21, 1
      %p91 = por %p89, %p90
      %p93 = scmp.ne.s32.totalorder %s78, %s92
      %p94 = scmp.eq.s32.totalorder %s21, 0
      %p95 = por %p93, %p94
      %s97 = sadd.s32 %s96, 1
      %p100 = scmp.eq.s32.totalorder %s15, 1
      %p101 = scmp.ne.s32.totalorder %s96, %s98
      %p102 = scmp.eq.s32.totalorder %s15, 0
      %p103 = por %p101, %p102
      %p104 = scmp.ne.s32.totalorder %s96, %s98
      %p105 = scmp.eq.s32.totalorder %s20, 1
      %p106 = por %p104, %p105
      %p107 = scmp.ne.s32.totalorder %s98, %s99
      %p108 = scmp.eq.s32.totalorder %s20, 0
      %p109 = por %p107, %p108
      %p110 = scmp.ne.s32.totalorder %s98, %s99
      %p111 = scmp.eq.s32.totalorder %s21, 1
      %p112 = por %p110, %p111
      %p114 = scmp.ne.s32.totalorder %s99, %s113
      %p115 = scmp.eq.s32.totalorder %s21, 0
      %p116 = por %p114, %p115
      %s118 = sadd.s32 %s117, 1
      %p121 = scmp.eq.s32.totalorder %s15, 1
      %p122 = scmp.ne.s32.totalorder %s117, %s119
      %p123 = scmp.eq.s32.totalorder %s15, 0
      %p124 = por %p122, %p123
      %p125 = scmp.ne.s32.totalorder %s117, %s119
      %p126 = scmp.eq.s32.totalorder %s20, 1
      %p127 = por %p125, %p126
      %p128 = scmp.ne.s32.totalorder %s119, %s120
      %p129 = scmp.eq.s32.totalorder %s20, 0
      %p130 = por %p128, %p129
      %p131 = scmp.ne.s32.totalorder %s119, %s120
      %p132 = scmp.eq.s32.totalorder %s21, 1
      %p133 = por %p131, %p132
      %p135 = scmp.ne.s32.totalorder %s120, %s134
      %p136 = scmp.eq.s32.totalorder %s21, 0
      %p137 = por %p135, %p136
      %s139 = sadd.s32 %s138, 1
      %p142 = scmp.eq.s32.totalorder %s15, 1
      %p143 = scmp.ne.s32.totalorder %s138, %s140
      %p144 = scmp.eq.s32.totalorder %s15, 0
      %p145 = por %p143, %p144
      %p146 = scmp.ne.s32.totalorder %s138, %s140
      %p147 = scmp.eq.s32.totalorder %s20, 1
      %p148 = por %p146, %p147
      %p149 = scmp.ne.s32.totalorder %s140, %s141
      %p150 = scmp.eq.s32.totalorder %s20, 0
      %p151 = por %p149, %p150
      %p152 = scmp.ne.s32.totalorder %s140, %s141
      %p153 = scmp.eq.s32.totalorder %s21, 1
      %p154 = por %p152, %p153
      %p156 = scmp.ne.s32.totalorder %s141, %s155
      %p157 = scmp.eq.s32.totalorder %s21, 0
      %p158 = por %p156, %p157
      %s159 = ssub.s32 %s15, %s22
      %p160 = scmp.eq.s32.totalorder %s159, 0
      %s162 = sadd.s32 %s161, 1
      %s163 = scalar_select %p160, %s161, %s162
      %p166 = pneg %p160
      %p167 = scmp.eq.s32.totalorder %s15, 1
      %p168 = por %p166, %p167
      %p169 = scmp.ne.s32.totalorder %s161, %s164
      %p170 = scmp.eq.s32.totalorder %s15, 0
      %p171 = por %p169, %p170
      %p172 = scmp.ne.s32.totalorder %s161, %s164
      %p173 = scmp.eq.s32.totalorder %s20, 1
      %p174 = por %p172, %p173
      %p175 = scmp.ne.s32.totalorder %s164, %s165
      %p176 = scmp.eq.s32.totalorder %s20, 0
      %p177 = por %p175, %p176
      %p178 = scmp.ne.s32.totalorder %s164, %s165
      %p179 = scmp.eq.s32.totalorder %s21, 1
      %p180 = por %p178, %p179
      %p182 = scmp.ne.s32.totalorder %s165, %s181
      %p183 = scmp.eq.s32.totalorder %s21, 0
      %p184 = por %p182, %p183
      %p185 = scmp.le.s32.totalorder 1, %s15
      %p186 = scmp.lt.s32.totalorder %s15, 3
      %p187 = pnand %p185, %p186
      %p188 = pneg %p187
      // Predicated region
      $region9: #{residual_block_nobn.1} parent=5 // pred_check
        _
      $region10: #{residual_block_nobn.1} parent=5 // pred_check_branch
        %190 = sbr.rel (%p187) target = $region12
      $region11: #{residual_block_nobn.1} parent=5 // pred_region
        %s191 = ssub.s32 %s15, 1
        // Predicated region
        $region13: #{residual_block_nobn.1} parent=11 // pred_check
          %p192 = pneg %p88
        $region14: #{residual_block_nobn.1} parent=11 // pred_check_branch
          %194 = sbr.rel (%p192) target = $region16
        $region15: #{residual_block_nobn.1} parent=11 // pred_region
          _
        $region16: #{residual_block_nobn.1} parent=11 // pred_fallthru
          _
        // Predicated region
        $region17: #{residual_block_nobn.1} parent=11 // pred_check
          %p195 = pneg %p109
        $region18: #{residual_block_nobn.1} parent=11 // pred_check_branch
          %197 = sbr.rel (%p195) target = $region20
        $region19: #{residual_block_nobn.1} parent=11 // pred_region
          _
        $region20: #{residual_block_nobn.1} parent=11 // pred_fallthru
          _
        // Predicated region
        $region21: #{residual_block_nobn.1} parent=11 // pred_check
          %p198 = pneg %p130
        $region22: #{residual_block_nobn.1} parent=11 // pred_check_branch
          %200 = sbr.rel (%p198) target = $region24
        $region23: #{residual_block_nobn.1} parent=11 // pred_region
          _
        $region24: #{residual_block_nobn.1} parent=11 // pred_fallthru
          _
        // Predicated region
        $region25: #{residual_block_nobn.1} parent=11 // pred_check
          %p201 = pneg %p151
        $region26: #{residual_block_nobn.1} parent=11 // pred_check_branch
          %203 = sbr.rel (%p201) target = $region28
        $region27: #{residual_block_nobn.1} parent=11 // pred_region
          _
        $region28: #{residual_block_nobn.1} parent=11 // pred_fallthru
          _
      $region12: #{residual_block_nobn.1} parent=5 // pred_fallthru
        _
      %p204 = scmp.lt.s32.totalorder %s15, 2
      // Predicated region
      $region29: #{residual_block_nobn.1} parent=5 // pred_check
        %p205 = pneg %p204
      $region30: #{residual_block_nobn.1} parent=5 // pred_check_branch
        %207 = sbr.rel (%p205) target = $region32
      $region31: #{residual_block_nobn.1} parent=5 // pred_region
        // Predicated region
        $region33: #{residual_block_nobn.1} parent=31 // pred_check
          %p208 = pneg %p35
        $region34: #{residual_block_nobn.1} parent=31 // pred_check_branch
          %210 = sbr.rel (%p208) target = $region36
        $region35: #{residual_block_nobn.1} parent=31 // pred_region
          %p211 = scmp.lt.s32.totalorder %s15, 1
          %s212 = scalar_select %p211, %s15, 1
          %s213 = smul.addr %s212, 54
          %s214 = smul.addr %s213, 4
          %s215 = scalar_lea.vmem %s0, %s214
        $region36: #{residual_block_nobn.1} parent=31 // pred_fallthru
          _
        // Predicated region
        $region37: #{residual_block_nobn.1} parent=31 // pred_check
          %p216 = pneg %p61
        $region38: #{residual_block_nobn.1} parent=31 // pred_check_branch
          %218 = sbr.rel (%p216) target = $region40
        $region39: #{residual_block_nobn.1} parent=31 // pred_region
          %p219 = scmp.lt.s32.totalorder %s15, 1
          %s220 = scalar_select %p219, %s15, 1
          %s221 = smul.addr %s220, 32
          %s222 = smul.addr %s221, 8
          %s223 = scalar_lea.vmem %s1, %s222
        $region40: #{residual_block_nobn.1} parent=31 // pred_fallthru
          _
      $region32: #{residual_block_nobn.1} parent=5 // pred_fallthru
        _
      %p224 = scmp.le.s32.totalorder 1, %s15
      %p225 = scmp.lt.s32.totalorder %s15, 3
      %p226 = pnand %p224, %p225
      %p227 = pneg %p226
      // Predicated region
      $region41: #{residual_block_nobn.1} parent=5 // pred_check
        _
      $region42: #{residual_block_nobn.1} parent=5 // pred_check_branch
        %229 = sbr.rel (%p226) target = $region44
      $region43: #{residual_block_nobn.1} parent=5 // pred_region
        %s230 = ssub.s32 %s15, 1
        %p231 = scmp.lt.s32.totalorder %s20, 1
        %s232 = scalar_select %p231, %s20, 1
        %s233 = smul.addr %s232, 54
        %s234 = smul.addr %s233, 4
        %s235 = scalar_lea.vmem %s0, %s234
        %p236 = pneg %p41
        %p237 = pneg %p38
        %p238 = scmp.lt.s32.totalorder %s20, 1
        %s239 = scalar_select %p238, %s20, 1
        %s240 = smul.addr %s239, 32
        %s241 = smul.addr %s240, 8
        %s242 = scalar_lea.vmem %s1, %s241
        %p243 = pneg %p67
        %p244 = pneg %p64
        %p245 = pneg %p88
        %p246 = pneg %p85
        %p247 = pneg %p109
        %p248 = pneg %p106
        %p249 = pneg %p130
        %p250 = pneg %p127
        %p251 = pneg %p151
        %p252 = pneg %p148
        %p253 = pneg %p177
        %p254 = pneg %p174
        %s255 = sand.u32 %s164, 1
        %s256 = scalar_lea.sflag [#allocation3], %s255
        %s257 = sand.u32 %s164, 1
        %s258 = smul.addr %s257, 256
        %s259 = scalar_lea.vmem [#allocation2], %s258
        %p260 = scmp.lt.s32.totalorder %s20, 1
        %s261 = scalar_select %p260, %s20, 1
        %s262 = smul.addr %s261, 54
        %s263 = smul.addr %s262, 4
        %s264 = scalar_lea.vmem %s0, %s263
        %p265 = scmp.lt.s32.totalorder %s20, 1
        %s266 = scalar_select %p265, %s20, 1
        %s267 = smul.addr %s266, 32
        %s268 = smul.addr %s267, 8
        %s269 = scalar_lea.vmem %s1, %s268
        %v271 = vld [vmem:[%s264] sm:$0xf]
        %v272 = vld [vmem:[%s264 + $0x4] sm:$0xf]
        %v273 = vld [vmem:[%s264 + $0x8] sm:$0x1]
        %v274 = vld [vmem:[%s264 + $0xc] sm:$0xf]
        %v275 = vld [vmem:[%s264 + $0x10] sm:$0xf]
        %v276 = vld [vmem:[%s264 + $0x14] sm:$0x1]
        %v277 = vld [vmem:[%s264 + $0x18] sm:$0xf]
        %v278 = vld [vmem:[%s264 + $0x1c] sm:$0xf]
        %v279 = vld [vmem:[%s264 + $0x20] sm:$0x1]
        %v280 = vld [vmem:[%s264 + $0x24] sm:$0xf]
        %v281 = vld [vmem:[%s264 + $0x28] sm:$0xf]
        %v282 = vld [vmem:[%s264 + $0x2c] sm:$0x1]
        %v283 = vld [vmem:[%s264 + $0x30] sm:$0xf]
        %v284 = vld [vmem:[%s264 + $0x34] sm:$0xf]
        %v285 = vld [vmem:[%s264 + $0x38] sm:$0x1]
        %v286 = vld [vmem:[%s264 + $0x3c] sm:$0xf]
        %v287 = vld [vmem:[%s264 + $0x40] sm:$0xf]
        %v288 = vld [vmem:[%s264 + $0x44] sm:$0x1]
        %v289 = vld [vmem:[%s264 + $0x48] sm:$0xf]
        %v290 = vld [vmem:[%s264 + $0x4c] sm:$0xf]
        %v291 = vld [vmem:[%s264 + $0x50] sm:$0x1]
        %v292 = vld [vmem:[%s264 + $0x54] sm:$0xf]
        %v293 = vld [vmem:[%s264 + $0x58] sm:$0xf]
        %v294 = vld [vmem:[%s264 + $0x5c] sm:$0x1]
        %v295 = vld [vmem:[%s264 + $0x60] sm:$0xf]
        %v296 = vld [vmem:[%s264 + $0x64] sm:$0xf]
        %v297 = vld [vmem:[%s264 + $0x68] sm:$0x1]
        %v298 = vld [vmem:[%s264 + $0x6c] sm:$0xf]
        %v299 = vld [vmem:[%s264 + $0x70] sm:$0xf]
        %v300 = vld [vmem:[%s264 + $0x74] sm:$0x1]
        %v301 = vld [vmem:[%s264 + $0x78] sm:$0xf]
        %v302 = vld [vmem:[%s264 + $0x7c] sm:$0xf]
        %v303 = vld [vmem:[%s264 + $0x80] sm:$0x1]
        %v304 = vld [vmem:[%s264 + $0x84] sm:$0xf]
        %v305 = vld [vmem:[%s264 + $0x88] sm:$0xf]
        %v306 = vld [vmem:[%s264 + $0x8c] sm:$0x1]
        %v307 = vld [vmem:[%s264 + $0x90] sm:$0xf]
        %v308 = vld [vmem:[%s264 + $0x94] sm:$0xf]
        %v309 = vld [vmem:[%s264 + $0x98] sm:$0x1]
        %v310 = vld [vmem:[%s264 + $0x9c] sm:$0xf]
        %v311 = vld [vmem:[%s264 + $0xa0] sm:$0xf]
        %v312 = vld [vmem:[%s264 + $0xa4] sm:$0x1]
        %v313 = vld [vmem:[%s264 + $0xa8] sm:$0xf]
        %v314 = vld [vmem:[%s264 + $0xac] sm:$0xf]
        %v315 = vld [vmem:[%s264 + $0xb0] sm:$0x1]
        %v316 = vld [vmem:[%s264 + $0xb4] sm:$0xf]
        %v317 = vld [vmem:[%s264 + $0xb8] sm:$0xf]
        %v318 = vld [vmem:[%s264 + $0xbc] sm:$0x1]
        %v319 = vld [vmem:[%s264 + $0xc0] sm:$0xf]
        %v320 = vld [vmem:[%s264 + $0xc4] sm:$0xf]
        %v321 = vld [vmem:[%s264 + $0xc8] sm:$0x1]
        %v322 = vld [vmem:[%s264 + $0xcc] sm:$0xf]
        %v323 = vld [vmem:[%s264 + $0xd0] sm:$0xf]
        %v324 = vld [vmem:[%s264 + $0xd4] sm:$0x1]
        %v325 = vld [vmem:[%s2] sm:$0xf]
        %v326 = vld [vmem:[%s2 + $0x4] sm:$0xf]
        %v327 = vld [vmem:[%s2 + $0x8] sm:$0xf]
        %v328 = vld [vmem:[%s2 + $0xc] sm:$0xf]
        %v329 = vld [vmem:[%s2 + $0x10] sm:$0xf]
        %v330 = vld [vmem:[%s2 + $0x14] sm:$0xf]
        %v331 = vld [vmem:[%s2 + $0x18] sm:$0xf]
        %v332 = vld [vmem:[%s2 + $0x1c] sm:$0xf]
        %v333 = vld [vmem:[%s2 + $0x20] sm:$0xf]
        %v334 = vld [vmem:[%s2 + $0x24] sm:$0xf]
        %v335 = vld [vmem:[%s2 + $0x28] sm:$0xf]
        %v336 = vld [vmem:[%s2 + $0x2c] sm:$0xf]
        %v337 = vld [vmem:[%s2 + $0x30] sm:$0xf]
        %v338 = vld [vmem:[%s2 + $0x34] sm:$0xf]
        %v339 = vld [vmem:[%s2 + $0x38] sm:$0xf]
        %v340 = vld [vmem:[%s2 + $0x3c] sm:$0xf]
        %v341 = vld [vmem:[%s2 + $0x40] sm:$0xf]
        %v342 = vld [vmem:[%s2 + $0x44] sm:$0xf]
        %v343 = vld [vmem:[%s2 + $0x48] sm:$0xf]
        %v344 = vld [vmem:[%s2 + $0x4c] sm:$0xf]
        %v345 = vld [vmem:[%s2 + $0x50] sm:$0xf]
        %v346 = vld [vmem:[%s2 + $0x54] sm:$0xf]
        %v347 = vld [vmem:[%s2 + $0x58] sm:$0xf]
        %v348 = vld [vmem:[%s2 + $0x5c] sm:$0xf]
        %v349 = vld [vmem:[%s2 + $0x60] sm:$0xf]
        %v350 = vld [vmem:[%s2 + $0x64] sm:$0xf]
        %v351 = vld [vmem:[%s2 + $0x68] sm:$0xf]
        %v352 = vld [vmem:[%s2 + $0x6c] sm:$0xf]
        %v353 = vld [vmem:[%s2 + $0x70] sm:$0xf]
        %v354 = vld [vmem:[%s2 + $0x74] sm:$0xf]
        %v355 = vld [vmem:[%s2 + $0x78] sm:$0xf]
        %v356 = vld [vmem:[%s2 + $0x7c] sm:$0xf]
        %v357 = vld [vmem:[%s2 + $0x80] sm:$0xf]
        %v358 = vld [vmem:[%s2 + $0x84] sm:$0xf]
        %v359 = vld [vmem:[%s2 + $0x88] sm:$0xf]
        %v360 = vld [vmem:[%s2 + $0x8c] sm:$0xf]
        %v361 = vld [vmem:[%s2 + $0x90] sm:$0xf]
        %v362 = vld [vmem:[%s2 + $0x94] sm:$0xf]
        %v363 = vld [vmem:[%s2 + $0x98] sm:$0xf]
        %v364 = vld [vmem:[%s2 + $0x9c] sm:$0xf]
        %v365 = vld [vmem:[%s2 + $0xa0] sm:$0xf]
        %v366 = vld [vmem:[%s2 + $0xa4] sm:$0xf]
        %v367 = vld [vmem:[%s2 + $0xa8] sm:$0xf]
        %v368 = vld [vmem:[%s2 + $0xac] sm:$0xf]
        %v369 = vld [vmem:[%s2 + $0xb0] sm:$0xf]
        %v370 = vld [vmem:[%s2 + $0xb4] sm:$0xf]
        %v371 = vld [vmem:[%s2 + $0xb8] sm:$0xf]
        %v372 = vld [vmem:[%s2 + $0xbc] sm:$0xf]
        %v373 = vld [vmem:[%s2 + $0xc0] sm:$0xf]
        %v374 = vld [vmem:[%s2 + $0xc4] sm:$0xf]
        %v375 = vld [vmem:[%s2 + $0xc8] sm:$0xf]
        %v376 = vld [vmem:[%s2 + $0xcc] sm:$0xf]
        %v377 = vld [vmem:[%s2 + $0xd0] sm:$0xf]
        %v378 = vld [vmem:[%s2 + $0xd4] sm:$0xf]
        %v379 = vld [vmem:[%s2 + $0xd8] sm:$0xf]
        %v380 = vld [vmem:[%s2 + $0xdc] sm:$0xf]
        %v381 = vld [vmem:[%s2 + $0xe0] sm:$0xf]
        %v382 = vld [vmem:[%s2 + $0xe4] sm:$0xf]
        %v383 = vld [vmem:[%s2 + $0xe8] sm:$0xf]
        %v384 = vld [vmem:[%s2 + $0xec] sm:$0xf]
        %v385 = vld [vmem:[%s2 + $0xf0] sm:$0xf]
        %v386 = vld [vmem:[%s2 + $0xf4] sm:$0xf]
        %v387 = vld [vmem:[%s2 + $0xf8] sm:$0xf]
        %v388 = vld [vmem:[%s2 + $0xfc] sm:$0xf]
        %v389 = vld [vmem:[%s2 + $0x100] sm:$0xf]
        %v390 = vld [vmem:[%s2 + $0x104] sm:$0xf]
        %v391 = vld [vmem:[%s2 + $0x108] sm:$0xf]
        %v392 = vld [vmem:[%s2 + $0x10c] sm:$0xf]
        %v393 = vld [vmem:[%s2 + $0x110] sm:$0xf]
        %v394 = vld [vmem:[%s2 + $0x114] sm:$0xf]
        %v395 = vld [vmem:[%s2 + $0x118] sm:$0xf]
        %v396 = vld [vmem:[%s2 + $0x11c] sm:$0xf]
        %v397 = vld [vmem:[%s3] sm:$0x1]
        %vm398 = vsmask.f32 3328
        %vm399 = vsmask.f32 7440
        %vm400 = vmor %vm398, %vm399
        %v402 = vshrl.u32 %v271, 16
        %v404 = vrot.slane %v402, 4
        %v405 = vshll.u32 %v271, 16
        %v407 = vrot.slane %v405, 5
        %v408 = vor.u32 %v404, %v407
        %v409 = vrot.slane %v408, 4
        %v411 = vshll.u32 %v272, 16
        %v413 = vrot.slane %v411, 5
        %v414 = vsel %vm400, %v409, %v413
        %v415 = vshrl.u32 %v272, 16
        %v417 = vrot.slane %v415, 4
        %v418 = vor.u32 %v417, %v413
        %v419 = vrot.slane %v418, 4
        %v421 = vshll.u32 %v273, 16
        %v423 = vrot.slane %v421, 5
        %v424 = vsel %vm400, %v419, %v423
        %v426 = vshrl.u32 %v274, 16
        %v428 = vrot.slane %v426, 4
        %v429 = vshll.u32 %v274, 16
        %v431 = vrot.slane %v429, 5
        %v432 = vor.u32 %v428, %v431
        %v433 = vrot.slane %v432, 4
        %v435 = vshll.u32 %v275, 16
        %v437 = vrot.slane %v435, 5
        %v438 = vsel %vm400, %v433, %v437
        %v439 = vshrl.u32 %v275, 16
        %v441 = vrot.slane %v439, 4
        %v442 = vor.u32 %v441, %v437
        %v443 = vrot.slane %v442, 4
        %v445 = vshll.u32 %v276, 16
        %v447 = vrot.slane %v445, 5
        %v448 = vsel %vm400, %v443, %v447
        %v450 = vshrl.u32 %v277, 16
        %v452 = vrot.slane %v450, 4
        %v453 = vshll.u32 %v277, 16
        %v455 = vrot.slane %v453, 5
        %v456 = vor.u32 %v452, %v455
        %v457 = vrot.slane %v456, 4
        %v459 = vshll.u32 %v278, 16
        %v461 = vrot.slane %v459, 5
        %v462 = vsel %vm400, %v457, %v461
        %v463 = vshrl.u32 %v278, 16
        %v465 = vrot.slane %v463, 4
        %v466 = vor.u32 %v465, %v461
        %v467 = vrot.slane %v466, 4
        %v469 = vshll.u32 %v279, 16
        %v471 = vrot.slane %v469, 5
        %v472 = vsel %vm400, %v467, %v471
        %v474 = vshrl.u32 %v280, 16
        %v476 = vrot.slane %v474, 4
        %v477 = vshll.u32 %v280, 16
        %v479 = vrot.slane %v477, 5
        %v480 = vor.u32 %v476, %v479
        %v481 = vrot.slane %v480, 4
        %v483 = vshll.u32 %v281, 16
        %v485 = vrot.slane %v483, 5
        %v486 = vsel %vm400, %v481, %v485
        %v487 = vshrl.u32 %v281, 16
        %v489 = vrot.slane %v487, 4
        %v490 = vor.u32 %v489, %v485
        %v491 = vrot.slane %v490, 4
        %v493 = vshll.u32 %v282, 16
        %v495 = vrot.slane %v493, 5
        %v496 = vsel %vm400, %v491, %v495
        %v498 = vshrl.u32 %v283, 16
        %v500 = vrot.slane %v498, 4
        %v501 = vshll.u32 %v283, 16
        %v503 = vrot.slane %v501, 5
        %v504 = vor.u32 %v500, %v503
        %v505 = vrot.slane %v504, 4
        %v507 = vshll.u32 %v284, 16
        %v509 = vrot.slane %v507, 5
        %v510 = vsel %vm400, %v505, %v509
        %v511 = vshrl.u32 %v284, 16
        %v513 = vrot.slane %v511, 4
        %v514 = vor.u32 %v513, %v509
        %v515 = vrot.slane %v514, 4
        %v517 = vshll.u32 %v285, 16
        %v519 = vrot.slane %v517, 5
        %v520 = vsel %vm400, %v515, %v519
        %v522 = vshrl.u32 %v286, 16
        %v524 = vrot.slane %v522, 4
        %v525 = vshll.u32 %v286, 16
        %v527 = vrot.slane %v525, 5
        %v528 = vor.u32 %v524, %v527
        %v529 = vrot.slane %v528, 4
        %v531 = vshll.u32 %v287, 16
        %v533 = vrot.slane %v531, 5
        %v534 = vsel %vm400, %v529, %v533
        %v535 = vshrl.u32 %v287, 16
        %v537 = vrot.slane %v535, 4
        %v538 = vor.u32 %v537, %v533
        %v539 = vrot.slane %v538, 4
        %v541 = vshll.u32 %v288, 16
        %v543 = vrot.slane %v541, 5
        %v544 = vsel %vm400, %v539, %v543
        %v546 = vshrl.u32 %v289, 16
        %v548 = vrot.slane %v546, 4
        %v549 = vshll.u32 %v289, 16
        %v551 = vrot.slane %v549, 5
        %v552 = vor.u32 %v548, %v551
        %v553 = vrot.slane %v552, 4
        %v555 = vshll.u32 %v290, 16
        %v557 = vrot.slane %v555, 5
        %v558 = vsel %vm400, %v553, %v557
        %v559 = vshrl.u32 %v290, 16
        %v561 = vrot.slane %v559, 4
        %v562 = vor.u32 %v561, %v557
        %v563 = vrot.slane %v562, 4
        %v565 = vshll.u32 %v291, 16
        %v567 = vrot.slane %v565, 5
        %v568 = vsel %vm400, %v563, %v567
        %v570 = vshrl.u32 %v292, 16
        %v572 = vrot.slane %v570, 4
        %v573 = vshll.u32 %v292, 16
        %v575 = vrot.slane %v573, 5
        %v576 = vor.u32 %v572, %v575
        %v577 = vrot.slane %v576, 4
        %v579 = vshll.u32 %v293, 16
        %v581 = vrot.slane %v579, 5
        %v582 = vsel %vm400, %v577, %v581
        %v583 = vshrl.u32 %v293, 16
        %v585 = vrot.slane %v583, 4
        %v586 = vor.u32 %v585, %v581
        %v587 = vrot.slane %v586, 4
        %v589 = vshll.u32 %v294, 16
        %v591 = vrot.slane %v589, 5
        %v592 = vsel %vm400, %v587, %v591
        %v594 = vshrl.u32 %v295, 16
        %v596 = vrot.slane %v594, 4
        %v597 = vshll.u32 %v295, 16
        %v599 = vrot.slane %v597, 5
        %v600 = vor.u32 %v596, %v599
        %v601 = vrot.slane %v600, 4
        %v603 = vshll.u32 %v296, 16
        %v605 = vrot.slane %v603, 5
        %v606 = vsel %vm400, %v601, %v605
        %v607 = vshrl.u32 %v296, 16
        %v609 = vrot.slane %v607, 4
        %v610 = vor.u32 %v609, %v605
        %v611 = vrot.slane %v610, 4
        %v613 = vshll.u32 %v297, 16
        %v615 = vrot.slane %v613, 5
        %v616 = vsel %vm400, %v611, %v615
        %v618 = vshrl.u32 %v298, 16
        %v620 = vrot.slane %v618, 4
        %v621 = vshll.u32 %v298, 16
        %v623 = vrot.slane %v621, 5
        %v624 = vor.u32 %v620, %v623
        %v625 = vrot.slane %v624, 4
        %v627 = vshll.u32 %v299, 16
        %v629 = vrot.slane %v627, 5
        %v630 = vsel %vm400, %v625, %v629
        %v631 = vshrl.u32 %v299, 16
        %v633 = vrot.slane %v631, 4
        %v634 = vor.u32 %v633, %v629
        %v635 = vrot.slane %v634, 4
        %v637 = vshll.u32 %v300, 16
        %v639 = vrot.slane %v637, 5
        %v640 = vsel %vm400, %v635, %v639
        %v642 = vshrl.u32 %v301, 16
        %v644 = vrot.slane %v642, 4
        %v645 = vshll.u32 %v301, 16
        %v647 = vrot.slane %v645, 5
        %v648 = vor.u32 %v644, %v647
        %v649 = vrot.slane %v648, 4
        %v651 = vshll.u32 %v302, 16
        %v653 = vrot.slane %v651, 5
        %v654 = vsel %vm400, %v649, %v653
        %v655 = vshrl.u32 %v302, 16
        %v657 = vrot.slane %v655, 4
        %v658 = vor.u32 %v657, %v653
        %v659 = vrot.slane %v658, 4
        %v661 = vshll.u32 %v303, 16
        %v663 = vrot.slane %v661, 5
        %v664 = vsel %vm400, %v659, %v663
        %v666 = vshrl.u32 %v304, 16
        %v668 = vrot.slane %v666, 4
        %v669 = vshll.u32 %v304, 16
        %v671 = vrot.slane %v669, 5
        %v672 = vor.u32 %v668, %v671
        %v673 = vrot.slane %v672, 4
        %v675 = vshll.u32 %v305, 16
        %v677 = vrot.slane %v675, 5
        %v678 = vsel %vm400, %v673, %v677
        %v679 = vshrl.u32 %v305, 16
        %v681 = vrot.slane %v679, 4
        %v682 = vor.u32 %v681, %v677
        %v683 = vrot.slane %v682, 4
        %v685 = vshll.u32 %v306, 16
        %v687 = vrot.slane %v685, 5
        %v688 = vsel %vm400, %v683, %v687
        %v690 = vshrl.u32 %v307, 16
        %v692 = vrot.slane %v690, 4
        %v693 = vshll.u32 %v307, 16
        %v695 = vrot.slane %v693, 5
        %v696 = vor.u32 %v692, %v695
        %v697 = vrot.slane %v696, 4
        %v699 = vshll.u32 %v308, 16
        %v701 = vrot.slane %v699, 5
        %v702 = vsel %vm400, %v697, %v701
        %v703 = vshrl.u32 %v308, 16
        %v705 = vrot.slane %v703, 4
        %v706 = vor.u32 %v705, %v701
        %v707 = vrot.slane %v706, 4
        %v709 = vshll.u32 %v309, 16
        %v711 = vrot.slane %v709, 5
        %v712 = vsel %vm400, %v707, %v711
        %v714 = vshrl.u32 %v310, 16
        %v716 = vrot.slane %v714, 4
        %v717 = vshll.u32 %v310, 16
        %v719 = vrot.slane %v717, 5
        %v720 = vor.u32 %v716, %v719
        %v721 = vrot.slane %v720, 4
        %v723 = vshll.u32 %v311, 16
        %v725 = vrot.slane %v723, 5
        %v726 = vsel %vm400, %v721, %v725
        %v727 = vshrl.u32 %v311, 16
        %v729 = vrot.slane %v727, 4
        %v730 = vor.u32 %v729, %v725
        %v731 = vrot.slane %v730, 4
        %v733 = vshll.u32 %v312, 16
        %v735 = vrot.slane %v733, 5
        %v736 = vsel %vm400, %v731, %v735
        %v738 = vshrl.u32 %v313, 16
        %v740 = vrot.slane %v738, 4
        %v741 = vshll.u32 %v313, 16
        %v743 = vrot.slane %v741, 5
        %v744 = vor.u32 %v740, %v743
        %v745 = vrot.slane %v744, 4
        %v747 = vshll.u32 %v314, 16
        %v749 = vrot.slane %v747, 5
        %v750 = vsel %vm400, %v745, %v749
        %v751 = vshrl.u32 %v314, 16
        %v753 = vrot.slane %v751, 4
        %v754 = vor.u32 %v753, %v749
        %v755 = vrot.slane %v754, 4
        %v757 = vshll.u32 %v315, 16
        %v759 = vrot.slane %v757, 5
        %v760 = vsel %vm400, %v755, %v759
        %v762 = vshrl.u32 %v316, 16
        %v764 = vrot.slane %v762, 4
        %v765 = vshll.u32 %v316, 16
        %v767 = vrot.slane %v765, 5
        %v768 = vor.u32 %v764, %v767
        %v769 = vrot.slane %v768, 4
        %v771 = vshll.u32 %v317, 16
        %v773 = vrot.slane %v771, 5
        %v774 = vsel %vm400, %v769, %v773
        %v775 = vshrl.u32 %v317, 16
        %v777 = vrot.slane %v775, 4
        %v778 = vor.u32 %v777, %v773
        %v779 = vrot.slane %v778, 4
        %v781 = vshll.u32 %v318, 16
        %v783 = vrot.slane %v781, 5
        %v784 = vsel %vm400, %v779, %v783
        %vm833 = vcmask 1042432
        %vm834 = vcmask 1046532
        %vm835 = vmor %vm833, %vm834
        %v836 = vrot.slane %v271, 5
        %v837 = vrot.slane %v836, 4
        %v838 = vrot.slane %v272, 5
        %v839 = vsel %vm835, %v837, %v838
        %v840 = vrot.slane %v838, 4
        %v841 = vrot.slane %v273, 5
        %v842 = vsel %vm835, %v840, %v841
        %v843 = vrot.slane %v274, 5
        %v844 = vrot.slane %v843, 4
        %v845 = vrot.slane %v275, 5
        %v846 = vsel %vm835, %v844, %v845
        %v847 = vrot.slane %v845, 4
        %v848 = vrot.slane %v276, 5
        %v849 = vsel %vm835, %v847, %v848
        %v850 = vrot.slane %v277, 5
        %v851 = vrot.slane %v850, 4
        %v852 = vrot.slane %v278, 5
        %v853 = vsel %vm835, %v851, %v852
        %v854 = vrot.slane %v852, 4
        %v855 = vrot.slane %v279, 5
        %v856 = vsel %vm835, %v854, %v855
        %v857 = vrot.slane %v280, 5
        %v858 = vrot.slane %v857, 4
        %v859 = vrot.slane %v281, 5
        %v860 = vsel %vm835, %v858, %v859
        %v861 = vrot.slane %v859, 4
        %v862 = vrot.slane %v282, 5
        %v863 = vsel %vm835, %v861, %v862
        %v864 = vrot.slane %v283, 5
        %v865 = vrot.slane %v864, 4
        %v866 = vrot.slane %v284, 5
        %v867 = vsel %vm835, %v865, %v866
        %v868 = vrot.slane %v866, 4
        %v869 = vrot.slane %v285, 5
        %v870 = vsel %vm835, %v868, %v869
        %v871 = vrot.slane %v286, 5
        %v872 = vrot.slane %v871, 4
        %v873 = vrot.slane %v287, 5
        %v874 = vsel %vm835, %v872, %v873
        %v875 = vrot.slane %v873, 4
        %v876 = vrot.slane %v288, 5
        %v877 = vsel %vm835, %v875, %v876
        %v878 = vrot.slane %v289, 5
        %v879 = vrot.slane %v878, 4
        %v880 = vrot.slane %v290, 5
        %v881 = vsel %vm835, %v879, %v880
        %v882 = vrot.slane %v880, 4
        %v883 = vrot.slane %v291, 5
        %v884 = vsel %vm835, %v882, %v883
        %v885 = vrot.slane %v292, 5
        %v886 = vrot.slane %v885, 4
        %v887 = vrot.slane %v293, 5
        %v888 = vsel %vm835, %v886, %v887
        %v889 = vrot.slane %v887, 4
        %v890 = vrot.slane %v294, 5
        %v891 = vsel %vm835, %v889, %v890
        %v892 = vrot.slane %v295, 5
        %v893 = vrot.slane %v892, 4
        %v894 = vrot.slane %v296, 5
        %v895 = vsel %vm835, %v893, %v894
        %v896 = vrot.slane %v894, 4
        %v897 = vrot.slane %v297, 5
        %v898 = vsel %vm835, %v896, %v897
        %v899 = vrot.slane %v298, 5
        %v900 = vrot.slane %v899, 4
        %v901 = vrot.slane %v299, 5
        %v902 = vsel %vm835, %v900, %v901
        %v903 = vrot.slane %v901, 4
        %v904 = vrot.slane %v300, 5
        %v905 = vsel %vm835, %v903, %v904
        %v906 = vrot.slane %v301, 5
        %v907 = vrot.slane %v906, 4
        %v908 = vrot.slane %v302, 5
        %v909 = vsel %vm835, %v907, %v908
        %v910 = vrot.slane %v908, 4
        %v911 = vrot.slane %v303, 5
        %v912 = vsel %vm835, %v910, %v911
        %v913 = vrot.slane %v304, 5
        %v914 = vrot.slane %v913, 4
        %v915 = vrot.slane %v305, 5
        %v916 = vsel %vm835, %v914, %v915
        %v917 = vrot.slane %v915, 4
        %v918 = vrot.slane %v306, 5
        %v919 = vsel %vm835, %v917, %v918
        %v920 = vrot.slane %v307, 5
        %v921 = vrot.slane %v920, 4
        %v922 = vrot.slane %v308, 5
        %v923 = vsel %vm835, %v921, %v922
        %v924 = vrot.slane %v922, 4
        %v925 = vrot.slane %v309, 5
        %v926 = vsel %vm835, %v924, %v925
        %v927 = vrot.slane %v310, 5
        %v928 = vrot.slane %v927, 4
        %v929 = vrot.slane %v311, 5
        %v930 = vsel %vm835, %v928, %v929
        %v931 = vrot.slane %v929, 4
        %v932 = vrot.slane %v312, 5
        %v933 = vsel %vm835, %v931, %v932
        %v934 = vrot.slane %v313, 5
        %v935 = vrot.slane %v934, 4
        %v936 = vrot.slane %v314, 5
        %v937 = vsel %vm835, %v935, %v936
        %v938 = vrot.slane %v936, 4
        %v939 = vrot.slane %v315, 5
        %v940 = vsel %vm835, %v938, %v939
        %v941 = vrot.slane %v316, 5
        %v942 = vrot.slane %v941, 4
        %v943 = vrot.slane %v317, 5
        %v944 = vsel %vm835, %v942, %v943
        %v945 = vrot.slane %v943, 4
        %v946 = vrot.slane %v318, 5
        %v947 = vsel %vm835, %v945, %v946
        %v949 = vshrl.u32 %v319, 16
        %v951 = vrot.slane %v949, 4
        %v952 = vshll.u32 %v319, 16
        %v954 = vrot.slane %v952, 5
        %v955 = vor.u32 %v951, %v954
        %v956 = vrot.slane %v955, 4
        %v958 = vshll.u32 %v320, 16
        %v960 = vrot.slane %v958, 5
        %v961 = vsel %vm400, %v956, %v960
        %v962 = vshrl.u32 %v320, 16
        %v964 = vrot.slane %v962, 4
        %v965 = vor.u32 %v964, %v960
        %v966 = vrot.slane %v965, 4
        %v968 = vshll.u32 %v321, 16
        %v970 = vrot.slane %v968, 5
        %v971 = vsel %vm400, %v966, %v970
        %v975 = vrot.slane %v319, 5
        %v976 = vrot.slane %v975, 4
        %v977 = vrot.slane %v320, 5
        %v978 = vsel %vm835, %v976, %v977
        %v979 = vrot.slane %v977, 4
        %v980 = vrot.slane %v321, 5
        %v981 = vsel %vm835, %v979, %v980
        %v983 = vshrl.u32 %v322, 16
        %v985 = vrot.slane %v983, 4
        %v986 = vshll.u32 %v322, 16
        %v988 = vrot.slane %v986, 5
        %v989 = vor.u32 %v985, %v988
        %v990 = vrot.slane %v989, 4
        %v992 = vshll.u32 %v323, 16
        %v994 = vrot.slane %v992, 5
        %v995 = vsel %vm400, %v990, %v994
        %v996 = vshrl.u32 %v323, 16
        %v998 = vrot.slane %v996, 4
        %v999 = vor.u32 %v998, %v994
        %v1000 = vrot.slane %v999, 4
        %v1002 = vshll.u32 %v324, 16
        %v1004 = vrot.slane %v1002, 5
        %v1005 = vsel %vm400, %v1000, %v1004
        %v1009 = vrot.slane %v322, 5
        %v1010 = vrot.slane %v1009, 4
        %v1011 = vrot.slane %v323, 5
        %v1012 = vsel %vm835, %v1010, %v1011
        %v1013 = vrot.slane %v1011, 4
        %v1014 = vrot.slane %v324, 5
        %v1015 = vsel %vm835, %v1013, %v1014
        %v1016 = vunpack.c.l.b16 %v271
        %v1017 = vunpack.c.l.b16 %v272
        %v1018 = vunpack.c.l.b16 %v274
        %v1019 = vunpack.c.l.b16 %v275
        %v1020 = vunpack.c.l.b16 %v277
        %v1021 = vunpack.c.l.b16 %v278
        %v1022 = vunpack.c.l.b16 %v280
        %v1023 = vunpack.c.l.b16 %v281
        %v1024 = vunpack.c.l.b16 %v283
        %v1025 = vunpack.c.l.b16 %v284
        %v1026 = vunpack.c.l.b16 %v286
        %v1027 = vunpack.c.l.b16 %v287
        %v1028 = vunpack.c.l.b16 %v289
        %v1029 = vunpack.c.l.b16 %v290
        %v1030 = vunpack.c.l.b16 %v292
        %v1031 = vunpack.c.l.b16 %v293
        %v1032 = vunpack.c.l.b16 %v295
        %v1033 = vunpack.c.l.b16 %v296
        %v1034 = vunpack.c.l.b16 %v298
        %v1035 = vunpack.c.l.b16 %v299
        %v1036 = vunpack.c.l.b16 %v301
        %v1037 = vunpack.c.l.b16 %v302
        %v1038 = vunpack.c.l.b16 %v304
        %v1039 = vunpack.c.l.b16 %v305
        %v1040 = vunpack.c.l.b16 %v307
        %v1041 = vunpack.c.l.b16 %v308
        %v1042 = vunpack.c.l.b16 %v310
        %v1043 = vunpack.c.l.b16 %v311
        %v1044 = vunpack.c.l.b16 %v313
        %v1045 = vunpack.c.l.b16 %v314
        %v1046 = vunpack.c.l.b16 %v316
        %v1047 = vunpack.c.l.b16 %v317
        %v1048 = vpack.c.b16 %v1017, %v1016
        %v1049 = vpack.c.b16 %v1019, %v1018
        %v1050 = vpack.c.b16 %v1021, %v1020
        %v1051 = vpack.c.b16 %v1023, %v1022
        %v1052 = vpack.c.b16 %v1025, %v1024
        %v1053 = vpack.c.b16 %v1027, %v1026
        %v1054 = vpack.c.b16 %v1029, %v1028
        %v1055 = vpack.c.b16 %v1031, %v1030
        %v1056 = vpack.c.b16 %v1033, %v1032
        %v1057 = vpack.c.b16 %v1035, %v1034
        %v1058 = vpack.c.b16 %v1037, %v1036
        %v1059 = vpack.c.b16 %v1039, %v1038
        %v1060 = vpack.c.b16 %v1041, %v1040
        %v1061 = vpack.c.b16 %v1043, %v1042
        %v1062 = vpack.c.b16 %v1045, %v1044
        %v1063 = vpack.c.b16 %v1047, %v1046
        %v1064 = vunpack.c.l.b16 %v414
        %v1065 = vunpack.c.l.b16 %v424
        %v1066 = vunpack.c.l.b16 %v438
        %v1067 = vunpack.c.l.b16 %v448
        %v1068 = vunpack.c.l.b16 %v462
        %v1069 = vunpack.c.l.b16 %v472
        %v1070 = vunpack.c.l.b16 %v486
        %v1071 = vunpack.c.l.b16 %v496
        %v1072 = vunpack.c.l.b16 %v510
        %v1073 = vunpack.c.l.b16 %v520
        %v1074 = vunpack.c.l.b16 %v534
        %v1075 = vunpack.c.l.b16 %v544
        %v1076 = vunpack.c.l.b16 %v558
        %v1077 = vunpack.c.l.b16 %v568
        %v1078 = vunpack.c.l.b16 %v582
        %v1079 = vunpack.c.l.b16 %v592
        %v1080 = vunpack.c.l.b16 %v606
        %v1081 = vunpack.c.l.b16 %v616
        %v1082 = vunpack.c.l.b16 %v630
        %v1083 = vunpack.c.l.b16 %v640
        %v1084 = vunpack.c.l.b16 %v654
        %v1085 = vunpack.c.l.b16 %v664
        %v1086 = vunpack.c.l.b16 %v678
        %v1087 = vunpack.c.l.b16 %v688
        %v1088 = vunpack.c.l.b16 %v702
        %v1089 = vunpack.c.l.b16 %v712
        %v1090 = vunpack.c.l.b16 %v726
        %v1091 = vunpack.c.l.b16 %v736
        %v1092 = vunpack.c.l.b16 %v750
        %v1093 = vunpack.c.l.b16 %v760
        %v1094 = vunpack.c.l.b16 %v774
        %v1095 = vunpack.c.l.b16 %v784
        %v1096 = vpack.c.b16 %v1065, %v1064
        %v1097 = vpack.c.b16 %v1067, %v1066
        %v1098 = vpack.c.b16 %v1069, %v1068
        %v1099 = vpack.c.b16 %v1071, %v1070
        %v1100 = vpack.c.b16 %v1073, %v1072
        %v1101 = vpack.c.b16 %v1075, %v1074
        %v1102 = vpack.c.b16 %v1077, %v1076
        %v1103 = vpack.c.b16 %v1079, %v1078
        %v1104 = vpack.c.b16 %v1081, %v1080
        %v1105 = vpack.c.b16 %v1083, %v1082
        %v1106 = vpack.c.b16 %v1085, %v1084
        %v1107 = vpack.c.b16 %v1087, %v1086
        %v1108 = vpack.c.b16 %v1089, %v1088
        %v1109 = vpack.c.b16 %v1091, %v1090
        %v1110 = vpack.c.b16 %v1093, %v1092
        %v1111 = vpack.c.b16 %v1095, %v1094
        %1112 = vrot.lane.b32.xlu0 %v1096, 64
        %v1113 = vpop.permute.xlu0 %1112
        %1114 = vrot.lane.b32.xlu0 %v1097, 64
        %v1115 = vpop.permute.xlu0 %1114
        %1116 = vrot.lane.b32.xlu0 %v1098, 64
        %v1117 = vpop.permute.xlu0 %1116
        %1118 = vrot.lane.b32.xlu0 %v1099, 64
        %v1119 = vpop.permute.xlu0 %1118
        %1120 = vrot.lane.b32.xlu0 %v1100, 64
        %v1121 = vpop.permute.xlu0 %1120
        %1122 = vrot.lane.b32.xlu0 %v1101, 64
        %v1123 = vpop.permute.xlu0 %1122
        %1124 = vrot.lane.b32.xlu0 %v1102, 64
        %v1125 = vpop.permute.xlu0 %1124
        %1126 = vrot.lane.b32.xlu0 %v1103, 64
        %v1127 = vpop.permute.xlu0 %1126
        %1128 = vrot.lane.b32.xlu0 %v1104, 64
        %v1129 = vpop.permute.xlu0 %1128
        %1130 = vrot.lane.b32.xlu0 %v1105, 64
        %v1131 = vpop.permute.xlu0 %1130
        %1132 = vrot.lane.b32.xlu0 %v1106, 64
        %v1133 = vpop.permute.xlu0 %1132
        %1134 = vrot.lane.b32.xlu0 %v1107, 64
        %v1135 = vpop.permute.xlu0 %1134
        %1136 = vrot.lane.b32.xlu0 %v1108, 64
        %v1137 = vpop.permute.xlu0 %1136
        %1138 = vrot.lane.b32.xlu0 %v1109, 64
        %v1139 = vpop.permute.xlu0 %1138
        %1140 = vrot.lane.b32.xlu0 %v1110, 64
        %v1141 = vpop.permute.xlu0 %1140
        %1142 = vrot.lane.b32.xlu0 %v1111, 64
        %v1143 = vpop.permute.xlu0 %1142
        %v1144 = vunpack.c.l.b16 %v839
        %v1145 = vunpack.c.l.b16 %v842
        %v1146 = vunpack.c.l.b16 %v846
        %v1147 = vunpack.c.l.b16 %v849
        %v1148 = vunpack.c.l.b16 %v853
        %v1149 = vunpack.c.l.b16 %v856
        %v1150 = vunpack.c.l.b16 %v860
        %v1151 = vunpack.c.l.b16 %v863
        %v1152 = vunpack.c.l.b16 %v867
        %v1153 = vunpack.c.l.b16 %v870
        %v1154 = vunpack.c.l.b16 %v874
        %v1155 = vunpack.c.l.b16 %v877
        %v1156 = vunpack.c.l.b16 %v881
        %v1157 = vunpack.c.l.b16 %v884
        %v1158 = vunpack.c.l.b16 %v888
        %v1159 = vunpack.c.l.b16 %v891
        %v1160 = vunpack.c.l.b16 %v895
        %v1161 = vunpack.c.l.b16 %v898
        %v1162 = vunpack.c.l.b16 %v902
        %v1163 = vunpack.c.l.b16 %v905
        %v1164 = vunpack.c.l.b16 %v909
        %v1165 = vunpack.c.l.b16 %v912
        %v1166 = vunpack.c.l.b16 %v916
        %v1167 = vunpack.c.l.b16 %v919
        %v1168 = vunpack.c.l.b16 %v923
        %v1169 = vunpack.c.l.b16 %v926
        %v1170 = vunpack.c.l.b16 %v930
        %v1171 = vunpack.c.l.b16 %v933
        %v1172 = vunpack.c.l.b16 %v937
        %v1173 = vunpack.c.l.b16 %v940
        %v1174 = vunpack.c.l.b16 %v944
        %v1175 = vunpack.c.l.b16 %v947
        %v1176 = vpack.c.b16 %v1145, %v1144
        %v1177 = vpack.c.b16 %v1147, %v1146
        %v1178 = vpack.c.b16 %v1149, %v1148
        %v1179 = vpack.c.b16 %v1151, %v1150
        %v1180 = vpack.c.b16 %v1153, %v1152
        %v1181 = vpack.c.b16 %v1155, %v1154
        %v1182 = vpack.c.b16 %v1157, %v1156
        %v1183 = vpack.c.b16 %v1159, %v1158
        %v1184 = vpack.c.b16 %v1161, %v1160
        %v1185 = vpack.c.b16 %v1163, %v1162
        %v1186 = vpack.c.b16 %v1165, %v1164
        %v1187 = vpack.c.b16 %v1167, %v1166
        %v1188 = vpack.c.b16 %v1169, %v1168
        %v1189 = vpack.c.b16 %v1171, %v1170
        %v1190 = vpack.c.b16 %v1173, %v1172
        %v1191 = vpack.c.b16 %v1175, %v1174
        %v1192 = vunpack.c.l.b16 %v319
        %v1193 = vunpack.c.l.b16 %v320
        %v1194 = vpack.c.b16 %v1193, %v1192
        %1195 = vrot.lane.b32.xlu0 %v1049, 64
        %v1196 = vpop.permute.xlu0 %1195
        %1197 = vrot.lane.b32.xlu0 %v1050, 64
        %v1198 = vpop.permute.xlu0 %1197
        %1199 = vrot.lane.b32.xlu0 %v1051, 64
        %v1200 = vpop.permute.xlu0 %1199
        %1201 = vrot.lane.b32.xlu0 %v1052, 64
        %v1202 = vpop.permute.xlu0 %1201
        %1203 = vrot.lane.b32.xlu0 %v1053, 64
        %v1204 = vpop.permute.xlu0 %1203
        %1205 = vrot.lane.b32.xlu0 %v1054, 64
        %v1206 = vpop.permute.xlu0 %1205
        %1207 = vrot.lane.b32.xlu0 %v1055, 64
        %v1208 = vpop.permute.xlu0 %1207
        %1209 = vrot.lane.b32.xlu0 %v1056, 64
        %v1210 = vpop.permute.xlu0 %1209
        %1211 = vrot.lane.b32.xlu0 %v1057, 64
        %v1212 = vpop.permute.xlu0 %1211
        %1213 = vrot.lane.b32.xlu0 %v1058, 64
        %v1214 = vpop.permute.xlu0 %1213
        %1215 = vrot.lane.b32.xlu0 %v1059, 64
        %v1216 = vpop.permute.xlu0 %1215
        %1217 = vrot.lane.b32.xlu0 %v1060, 64
        %v1218 = vpop.permute.xlu0 %1217
        %1219 = vrot.lane.b32.xlu0 %v1061, 64
        %v1220 = vpop.permute.xlu0 %1219
        %1221 = vrot.lane.b32.xlu0 %v1062, 64
        %v1222 = vpop.permute.xlu0 %1221
        %1223 = vrot.lane.b32.xlu0 %v1063, 64
        %v1224 = vpop.permute.xlu0 %1223
        %1225 = vrot.lane.b32.xlu0 %v1194, 64
        %v1226 = vpop.permute.xlu0 %1225
        %v1227 = vunpack.c.l.b16 %v961
        %v1228 = vunpack.c.l.b16 %v971
        %v1229 = vpack.c.b16 %v1228, %v1227
        %v1230 = vunpack.c.l.b16 %v978
        %v1231 = vunpack.c.l.b16 %v981
        %v1232 = vpack.c.b16 %v1231, %v1230
        %1233 = vrot.lane.b32.xlu0 %v1177, 64
        %v1234 = vpop.permute.xlu0 %1233
        %1235 = vrot.lane.b32.xlu0 %v1178, 64
        %v1236 = vpop.permute.xlu0 %1235
        %1237 = vrot.lane.b32.xlu0 %v1179, 64
        %v1238 = vpop.permute.xlu0 %1237
        %1239 = vrot.lane.b32.xlu0 %v1180, 64
        %v1240 = vpop.permute.xlu0 %1239
        %1241 = vrot.lane.b32.xlu0 %v1181, 64
        %v1242 = vpop.permute.xlu0 %1241
        %1243 = vrot.lane.b32.xlu0 %v1182, 64
        %v1244 = vpop.permute.xlu0 %1243
        %1245 = vrot.lane.b32.xlu0 %v1183, 64
        %v1246 = vpop.permute.xlu0 %1245
        %1247 = vrot.lane.b32.xlu0 %v1184, 64
        %v1248 = vpop.permute.xlu0 %1247
        %1249 = vrot.lane.b32.xlu0 %v1185, 64
        %v1250 = vpop.permute.xlu0 %1249
        %1251 = vrot.lane.b32.xlu0 %v1186, 64
        %v1252 = vpop.permute.xlu0 %1251
        %1253 = vrot.lane.b32.xlu0 %v1187, 64
        %v1254 = vpop.permute.xlu0 %1253
        %1255 = vrot.lane.b32.xlu0 %v1188, 64
        %v1256 = vpop.permute.xlu0 %1255
        %1257 = vrot.lane.b32.xlu0 %v1189, 64
        %v1258 = vpop.permute.xlu0 %1257
        %1259 = vrot.lane.b32.xlu0 %v1190, 64
        %v1260 = vpop.permute.xlu0 %1259
        %1261 = vrot.lane.b32.xlu0 %v1191, 64
        %v1262 = vpop.permute.xlu0 %1261
        %1263 = vrot.lane.b32.xlu0 %v1232, 64
        %v1264 = vpop.permute.xlu0 %1263
        %v1265 = vunpack.c.l.b16 %v322
        %v1266 = vunpack.c.l.b16 %v323
        %v1267 = vpack.c.b16 %v1266, %v1265
        %v1268 = vunpack.c.l.b16 %v995
        %v1269 = vunpack.c.l.b16 %v1005
        %v1270 = vpack.c.b16 %v1269, %v1268
        %1271 = vrot.lane.b32.xlu0 %v1229, 64
        %v1272 = vpop.permute.xlu0 %1271
        %1273 = vrot.lane.b32.xlu0 %v1270, 64
        %v1274 = vpop.permute.xlu0 %1273
        %v1275 = vunpack.c.l.b16 %v1012
        %v1276 = vunpack.c.l.b16 %v1015
        %v1277 = vpack.c.b16 %v1276, %v1275
        %vm1278 = vcmask 523264
        %v1281 = vsel %vm1278, %v1048, %v1113
        %v1285 = vsel %vm1278, %v1049, %v1115
        %v1289 = vsel %vm1278, %v1050, %v1117
        %v1293 = vsel %vm1278, %v1051, %v1119
        %v1297 = vsel %vm1278, %v1052, %v1121
        %v1301 = vsel %vm1278, %v1053, %v1123
        %v1305 = vsel %vm1278, %v1054, %v1125
        %v1309 = vsel %vm1278, %v1055, %v1127
        %v1313 = vsel %vm1278, %v1056, %v1129
        %v1317 = vsel %vm1278, %v1057, %v1131
        %v1321 = vsel %vm1278, %v1058, %v1133
        %v1325 = vsel %vm1278, %v1059, %v1135
        %v1329 = vsel %vm1278, %v1060, %v1137
        %v1333 = vsel %vm1278, %v1061, %v1139
        %v1337 = vsel %vm1278, %v1062, %v1141
        %v1341 = vsel %vm1278, %v1063, %v1143
        %v1345 = vsel %vm1278, %v1176, %v1196
        %v1349 = vsel %vm1278, %v1177, %v1198
        %v1353 = vsel %vm1278, %v1178, %v1200
        %v1357 = vsel %vm1278, %v1179, %v1202
        %v1361 = vsel %vm1278, %v1180, %v1204
        %v1365 = vsel %vm1278, %v1181, %v1206
        %v1369 = vsel %vm1278, %v1182, %v1208
        %v1373 = vsel %vm1278, %v1183, %v1210
        %v1377 = vsel %vm1278, %v1184, %v1212
        %v1381 = vsel %vm1278, %v1185, %v1214
        %v1385 = vsel %vm1278, %v1186, %v1216
        %v1389 = vsel %vm1278, %v1187, %v1218
        %v1393 = vsel %vm1278, %v1188, %v1220
        %v1397 = vsel %vm1278, %v1189, %v1222
        %v1401 = vsel %vm1278, %v1190, %v1224
        %v1405 = vsel %vm1278, %v1191, %v1226
        %v1409 = vsel %vm1278, %v1097, %v1234
        %v1413 = vsel %vm1278, %v1098, %v1236
        %v1417 = vsel %vm1278, %v1099, %v1238
        %v1421 = vsel %vm1278, %v1100, %v1240
        %v1425 = vsel %vm1278, %v1101, %v1242
        %v1429 = vsel %vm1278, %v1102, %v1244
        %v1433 = vsel %vm1278, %v1103, %v1246
        %v1437 = vsel %vm1278, %v1104, %v1248
        %v1441 = vsel %vm1278, %v1105, %v1250
        %v1445 = vsel %vm1278, %v1106, %v1252
        %v1449 = vsel %vm1278, %v1107, %v1254
        %v1453 = vsel %vm1278, %v1108, %v1256
        %v1457 = vsel %vm1278, %v1109, %v1258
        %v1461 = vsel %vm1278, %v1110, %v1260
        %v1465 = vsel %vm1278, %v1111, %v1262
        %v1469 = vsel %vm1278, %v1229, %v1264
        %v1473 = vsel %vm1278, %v1194, %v1272
        %v1477 = vsel %vm1278, %v1267, %v1274
        %v1480 = vlaneseq
        %v1481 = vshrl.u32 %v1480, 7
        %v1482 = vsub.s32 0, %v1481
        %v1483 = vrot.slane %v397, %v1482
        %v1557 = vunpack.c.l.b16 %v325
        %v1558 = vunpack.c.l.b16 %v326
        %v1559 = vunpack.c.l.b16 %v327
        %v1560 = vunpack.c.l.b16 %v328
        %v1561 = vunpack.c.l.b16 %v329
        %v1562 = vunpack.c.l.b16 %v330
        %v1563 = vunpack.c.l.b16 %v331
        %v1564 = vunpack.c.l.b16 %v332
        %v1565 = vunpack.c.l.b16 %v333
        %v1566 = vunpack.c.l.b16 %v334
        %v1567 = vunpack.c.l.b16 %v335
        %v1568 = vunpack.c.l.b16 %v336
        %v1569 = vunpack.c.l.b16 %v337
        %v1570 = vunpack.c.l.b16 %v338
        %v1571 = vunpack.c.l.b16 %v339
        %v1572 = vunpack.c.l.b16 %v340
        %v1573 = vunpack.c.l.b16 %v341
        %v1574 = vunpack.c.l.b16 %v342
        %v1575 = vunpack.c.l.b16 %v343
        %v1576 = vunpack.c.l.b16 %v344
        %v1577 = vunpack.c.l.b16 %v345
        %v1578 = vunpack.c.l.b16 %v346
        %v1579 = vunpack.c.l.b16 %v347
        %v1580 = vunpack.c.l.b16 %v348
        %v1581 = vunpack.c.l.b16 %v349
        %v1582 = vunpack.c.l.b16 %v350
        %v1583 = vunpack.c.l.b16 %v351
        %v1584 = vunpack.c.l.b16 %v352
        %v1585 = vunpack.c.l.b16 %v353
        %v1586 = vunpack.c.l.b16 %v354
        %v1587 = vunpack.c.l.b16 %v355
        %v1588 = vunpack.c.l.b16 %v356
        %v1589 = vunpack.c.l.b16 %v357
        %v1590 = vunpack.c.l.b16 %v358
        %v1591 = vunpack.c.l.b16 %v359
        %v1592 = vunpack.c.l.b16 %v360
        %v1593 = vunpack.c.l.b16 %v361
        %v1594 = vunpack.c.l.b16 %v362
        %v1595 = vunpack.c.l.b16 %v363
        %v1596 = vunpack.c.l.b16 %v364
        %v1597 = vunpack.c.l.b16 %v365
        %v1598 = vunpack.c.l.b16 %v366
        %v1599 = vunpack.c.l.b16 %v367
        %v1600 = vunpack.c.l.b16 %v368
        %v1601 = vunpack.c.l.b16 %v369
        %v1602 = vunpack.c.l.b16 %v370
        %v1603 = vunpack.c.l.b16 %v371
        %v1604 = vunpack.c.l.b16 %v372
        %v1605 = vunpack.c.l.b16 %v373
        %v1606 = vunpack.c.l.b16 %v374
        %v1607 = vunpack.c.l.b16 %v375
        %v1608 = vunpack.c.l.b16 %v376
        %v1609 = vunpack.c.l.b16 %v377
        %v1610 = vunpack.c.l.b16 %v378
        %v1611 = vunpack.c.l.b16 %v379
        %v1612 = vunpack.c.l.b16 %v380
        %v1613 = vunpack.c.l.b16 %v381
        %v1614 = vunpack.c.l.b16 %v382
        %v1615 = vunpack.c.l.b16 %v383
        %v1616 = vunpack.c.l.b16 %v384
        %v1617 = vunpack.c.l.b16 %v385
        %v1618 = vunpack.c.l.b16 %v386
        %v1619 = vunpack.c.l.b16 %v387
        %v1620 = vunpack.c.l.b16 %v388
        %v1621 = vunpack.c.l.b16 %v389
        %v1622 = vunpack.c.l.b16 %v390
        %v1623 = vunpack.c.l.b16 %v391
        %v1624 = vunpack.c.l.b16 %v392
        %v1625 = vunpack.c.l.b16 %v393
        %v1626 = vunpack.c.l.b16 %v394
        %v1627 = vunpack.c.l.b16 %v395
        %v1628 = vunpack.c.l.b16 %v396
        %v1629 = vpack.c.b16 %v1558, %v1557
        %v1630 = vpack.c.b16 %v1560, %v1559
        %v1631 = vpack.c.b16 %v1562, %v1561
        %v1632 = vpack.c.b16 %v1564, %v1563
        %v1633 = vpack.c.b16 %v1566, %v1565
        %v1634 = vpack.c.b16 %v1568, %v1567
        %v1635 = vpack.c.b16 %v1570, %v1569
        %v1636 = vpack.c.b16 %v1572, %v1571
        %v1637 = vpack.c.b16 %v1574, %v1573
        %v1638 = vpack.c.b16 %v1576, %v1575
        %v1639 = vpack.c.b16 %v1578, %v1577
        %v1640 = vpack.c.b16 %v1580, %v1579
        %v1641 = vpack.c.b16 %v1582, %v1581
        %v1642 = vpack.c.b16 %v1584, %v1583
        %v1643 = vpack.c.b16 %v1586, %v1585
        %v1644 = vpack.c.b16 %v1588, %v1587
        %v1645 = vpack.c.b16 %v1590, %v1589
        %v1646 = vpack.c.b16 %v1592, %v1591
        %v1647 = vpack.c.b16 %v1594, %v1593
        %v1648 = vpack.c.b16 %v1596, %v1595
        %v1649 = vpack.c.b16 %v1598, %v1597
        %v1650 = vpack.c.b16 %v1600, %v1599
        %v1651 = vpack.c.b16 %v1602, %v1601
        %v1652 = vpack.c.b16 %v1604, %v1603
        %v1653 = vpack.c.b16 %v1606, %v1605
        %v1654 = vpack.c.b16 %v1608, %v1607
        %v1655 = vpack.c.b16 %v1610, %v1609
        %v1656 = vpack.c.b16 %v1612, %v1611
        %v1657 = vpack.c.b16 %v1614, %v1613
        %v1658 = vpack.c.b16 %v1616, %v1615
        %v1659 = vpack.c.b16 %v1618, %v1617
        %v1660 = vpack.c.b16 %v1620, %v1619
        %v1661 = vpack.c.b16 %v1622, %v1621
        %v1662 = vpack.c.b16 %v1624, %v1623
        %v1663 = vpack.c.b16 %v1626, %v1625
        %v1664 = vpack.c.b16 %v1628, %v1627
        %v1701 = vsel %vm1278, %v1178, 0
        %v1703 = vsel %vm1278, %v1179, 0
        %v1705 = vsel %vm1278, %v1180, 0
        %v1707 = vsel %vm1278, %v1181, 0
        %v1709 = vsel %vm1278, %v1182, 0
        %v1711 = vsel %vm1278, %v1183, 0
        %v1713 = vsel %vm1278, %v1184, 0
        %v1715 = vsel %vm1278, %v1185, 0
        %v1717 = vsel %vm1278, %v1186, 0
        %v1719 = vsel %vm1278, %v1187, 0
        %v1721 = vsel %vm1278, %v1188, 0
        %v1723 = vsel %vm1278, %v1189, 0
        %v1725 = vsel %vm1278, %v1190, 0
        %v1727 = vsel %vm1278, %v1191, 0
        %v1730 = vsel %vm1278, %v1232, 0
        %v1733 = vsel %vm1278, %v1277, 0
        %1735 = vmatprep.subr.bf16.mxu0 0
        %1736 = vmatpush1.bf16.msra.mxu0 %v1636
        %1737 = vmatprep.subr.bf16.mxu0 0
        %1738 = vmatpush1.bf16.msra.mxu0 %v1635
        %1739 = vmatprep.subr.bf16.mxu0 0
        %1740 = vmatpush1.bf16.msra.mxu0 %v1634
        %1741 = vmatprep.subr.bf16.mxu0 0
        %1742 = vmatpush1.bf16.msra.mxu0 %v1633
        %1743 = vmatprep.subr.bf16.mxu0 0
        %1744 = vmatpush1.bf16.msra.mxu0 %v1632
        %1745 = vmatprep.subr.bf16.mxu0 0
        %1746 = vmatpush1.bf16.msra.mxu0 %v1631
        %1747 = vmatprep.subr.bf16.mxu0 0
        %1748 = vmatpush1.bf16.msra.mxu0 %v1630
        %1749 = vmatprep.subr.bf16.mxu0 0
        %1750 = vmatpush1.bf16.msra.mxu0 %v1629
        %1751 = vmatprep.subr.bf16.mxu0 0
        %1752 = vmatpush2.bf16.msra.mxu0 %v1644
        %1753 = vmatprep.subr.bf16.mxu0 0
        %1754 = vmatpush2.bf16.msra.mxu0 %v1643
        %1755 = vmatprep.subr.bf16.mxu0 0
        %1756 = vmatpush2.bf16.msra.mxu0 %v1642
        %1757 = vmatprep.subr.bf16.mxu0 0
        %1758 = vmatpush2.bf16.msra.mxu0 %v1641
        %1759 = vmatprep.subr.bf16.mxu0 0
        %1760 = vmatpush2.bf16.msra.mxu0 %v1640
        %1761 = vmatprep.subr.bf16.mxu0 0
        %1762 = vmatpush2.bf16.msra.mxu0 %v1639
        %1763 = vmatprep.subr.bf16.mxu0 0
        %1764 = vmatpush2.bf16.msra.mxu0 %v1638
        %1765 = vmatprep.subr.bf16.mxu0 0
        %1766 = vmatpush2.bf16.msra.mxu0 %v1637
        %1767 = vmatprep.mubr.bf16.mxu0 %v1345
        %1768 = vmatmul.mubr.bf16.gmra.mxu0 %v1281
        %v1769 = vpop.f32.mrf.mxu0
        %v1770 = vadd.f32 %v1483, %v1769
        %v1771 = vpop.f32.mrf.mxu0
        %v1772 = vpop.f32.mrf.mxu0
        %v1773 = vadd.f32 %v1483, %v1772
        %v1774 = vpop.f32.mrf.mxu0
        %1775 = vmatprep.mubr.bf16.mxu0 %v1349
        %1776 = vmatmul.mubr.bf16.gmra.mxu0 %v1285
        %v1777 = vpop.f32.mrf.mxu0
        %v1778 = vadd.f32 %v1483, %v1777
        %v1779 = vpop.f32.mrf.mxu0
        %v1780 = vpop.f32.mrf.mxu0
        %v1781 = vadd.f32 %v1483, %v1780
        %v1782 = vpop.f32.mrf.mxu0
        %1783 = vmatprep.mubr.bf16.mxu0 %v1353
        %1784 = vmatmul.mubr.bf16.gmra.mxu0 %v1289
        %v1785 = vpop.f32.mrf.mxu0
        %v1786 = vadd.f32 %v1483, %v1785
        %v1787 = vpop.f32.mrf.mxu0
        %v1788 = vpop.f32.mrf.mxu0
        %v1789 = vadd.f32 %v1483, %v1788
        %v1790 = vpop.f32.mrf.mxu0
        %1791 = vmatprep.mubr.bf16.mxu0 %v1357
        %1792 = vmatmul.mubr.bf16.gmra.mxu0 %v1293
        %v1793 = vpop.f32.mrf.mxu0
        %v1794 = vadd.f32 %v1483, %v1793
        %v1795 = vpop.f32.mrf.mxu0
        %v1796 = vpop.f32.mrf.mxu0
        %v1797 = vadd.f32 %v1483, %v1796
        %v1798 = vpop.f32.mrf.mxu0
        %1799 = vmatprep.mubr.bf16.mxu0 %v1361
        %1800 = vmatmul.mubr.bf16.gmra.mxu0 %v1297
        %v1801 = vpop.f32.mrf.mxu0
        %v1802 = vadd.f32 %v1483, %v1801
        %v1803 = vpop.f32.mrf.mxu0
        %v1804 = vpop.f32.mrf.mxu0
        %v1805 = vadd.f32 %v1483, %v1804
        %v1806 = vpop.f32.mrf.mxu0
        %1807 = vmatprep.mubr.bf16.mxu0 %v1365
        %1808 = vmatmul.mubr.bf16.gmra.mxu0 %v1301
        %v1809 = vpop.f32.mrf.mxu0
        %v1810 = vadd.f32 %v1483, %v1809
        %v1811 = vpop.f32.mrf.mxu0
        %v1812 = vpop.f32.mrf.mxu0
        %v1813 = vadd.f32 %v1483, %v1812
        %v1814 = vpop.f32.mrf.mxu0
        %1815 = vmatprep.mubr.bf16.mxu0 %v1369
        %1816 = vmatmul.mubr.bf16.gmra.mxu0 %v1305
        %v1817 = vpop.f32.mrf.mxu0
        %v1818 = vadd.f32 %v1483, %v1817
        %v1819 = vpop.f32.mrf.mxu0
        %v1820 = vpop.f32.mrf.mxu0
        %v1821 = vadd.f32 %v1483, %v1820
        %v1822 = vpop.f32.mrf.mxu0
        %1823 = vmatprep.mubr.bf16.mxu0 %v1373
        %1824 = vmatmul.mubr.bf16.gmra.mxu0 %v1309
        %v1825 = vpop.f32.mrf.mxu0
        %v1826 = vadd.f32 %v1483, %v1825
        %v1827 = vpop.f32.mrf.mxu0
        %v1828 = vpop.f32.mrf.mxu0
        %v1829 = vadd.f32 %v1483, %v1828
        %v1830 = vpop.f32.mrf.mxu0
        %1831 = vmatprep.mubr.bf16.mxu0 %v1377
        %1832 = vmatmul.mubr.bf16.gmra.mxu0 %v1313
        %v1833 = vpop.f32.mrf.mxu0
        %v1834 = vadd.f32 %v1483, %v1833
        %v1835 = vpop.f32.mrf.mxu0
        %v1836 = vpop.f32.mrf.mxu0
        %v1837 = vadd.f32 %v1483, %v1836
        %v1838 = vpop.f32.mrf.mxu0
        %1839 = vmatprep.mubr.bf16.mxu0 %v1381
        %1840 = vmatmul.mubr.bf16.gmra.mxu0 %v1317
        %v1841 = vpop.f32.mrf.mxu0
        %v1842 = vadd.f32 %v1483, %v1841
        %v1843 = vpop.f32.mrf.mxu0
        %v1844 = vpop.f32.mrf.mxu0
        %v1845 = vadd.f32 %v1483, %v1844
        %v1846 = vpop.f32.mrf.mxu0
        %1847 = vmatprep.mubr.bf16.mxu0 %v1385
        %1848 = vmatmul.mubr.bf16.gmra.mxu0 %v1321
        %v1849 = vpop.f32.mrf.mxu0
        %v1850 = vadd.f32 %v1483, %v1849
        %v1851 = vpop.f32.mrf.mxu0
        %v1852 = vpop.f32.mrf.mxu0
        %v1853 = vadd.f32 %v1483, %v1852
        %v1854 = vpop.f32.mrf.mxu0
        %1855 = vmatprep.mubr.bf16.mxu0 %v1389
        %1856 = vmatmul.mubr.bf16.gmra.mxu0 %v1325
        %v1857 = vpop.f32.mrf.mxu0
        %v1858 = vadd.f32 %v1483, %v1857
        %v1859 = vpop.f32.mrf.mxu0
        %v1860 = vpop.f32.mrf.mxu0
        %v1861 = vadd.f32 %v1483, %v1860
        %v1862 = vpop.f32.mrf.mxu0
        %1863 = vmatprep.mubr.bf16.mxu0 %v1393
        %1864 = vmatmul.mubr.bf16.gmra.mxu0 %v1329
        %v1865 = vpop.f32.mrf.mxu0
        %v1866 = vadd.f32 %v1483, %v1865
        %v1867 = vpop.f32.mrf.mxu0
        %v1868 = vpop.f32.mrf.mxu0
        %v1869 = vadd.f32 %v1483, %v1868
        %v1870 = vpop.f32.mrf.mxu0
        %1871 = vmatprep.mubr.bf16.mxu0 %v1397
        %1872 = vmatmul.mubr.bf16.gmra.mxu0 %v1333
        %v1873 = vpop.f32.mrf.mxu0
        %v1874 = vadd.f32 %v1483, %v1873
        %v1875 = vpop.f32.mrf.mxu0
        %v1876 = vpop.f32.mrf.mxu0
        %v1877 = vadd.f32 %v1483, %v1876
        %v1878 = vpop.f32.mrf.mxu0
        %1879 = vmatprep.mubr.bf16.mxu0 %v1401
        %1880 = vmatmul.mubr.bf16.gmra.mxu0 %v1337
        %v1881 = vpop.f32.mrf.mxu0
        %v1882 = vadd.f32 %v1483, %v1881
        %v1883 = vpop.f32.mrf.mxu0
        %v1884 = vpop.f32.mrf.mxu0
        %v1885 = vadd.f32 %v1483, %v1884
        %v1886 = vpop.f32.mrf.mxu0
        %1887 = vmatprep.mubr.bf16.mxu0 %v1405
        %1888 = vmatmul.mubr.bf16.gmra.mxu0 %v1341
        %v1889 = vpop.f32.mrf.mxu0
        %v1890 = vadd.f32 %v1483, %v1889
        %v1891 = vpop.f32.mrf.mxu0
        %v1892 = vpop.f32.mrf.mxu0
        %v1893 = vadd.f32 %v1483, %v1892
        %v1894 = vpop.f32.mrf.mxu0
        %1895 = vdwg.mxu0
        %1896 = vmatprep.subr.bf16.mxu0 0
        %1897 = vmatpush1.bf16.msra.mxu0 %v1652
        %1898 = vmatprep.subr.bf16.mxu0 0
        %1899 = vmatpush1.bf16.msra.mxu0 %v1651
        %1900 = vmatprep.subr.bf16.mxu0 0
        %1901 = vmatpush1.bf16.msra.mxu0 %v1650
        %1902 = vmatprep.subr.bf16.mxu0 0
        %1903 = vmatpush1.bf16.msra.mxu0 %v1649
        %1904 = vmatprep.subr.bf16.mxu0 0
        %1905 = vmatpush1.bf16.msra.mxu0 %v1648
        %1906 = vmatprep.subr.bf16.mxu0 0
        %1907 = vmatpush1.bf16.msra.mxu0 %v1647
        %1908 = vmatprep.subr.bf16.mxu0 0
        %1909 = vmatpush1.bf16.msra.mxu0 %v1646
        %1910 = vmatprep.subr.bf16.mxu0 0
        %1911 = vmatpush1.bf16.msra.mxu0 %v1645
        %1912 = vmatprep.subr.bf16.mxu0 0
        %1913 = vmatpush2.bf16.msra.mxu0 %v1660
        %1914 = vmatprep.subr.bf16.mxu0 0
        %1915 = vmatpush2.bf16.msra.mxu0 %v1659
        %1916 = vmatprep.subr.bf16.mxu0 0
        %1917 = vmatpush2.bf16.msra.mxu0 %v1658
        %1918 = vmatprep.subr.bf16.mxu0 0
        %1919 = vmatpush2.bf16.msra.mxu0 %v1657
        %1920 = vmatprep.subr.bf16.mxu0 0
        %1921 = vmatpush2.bf16.msra.mxu0 %v1656
        %1922 = vmatprep.subr.bf16.mxu0 0
        %1923 = vmatpush2.bf16.msra.mxu0 %v1655
        %1924 = vmatprep.subr.bf16.mxu0 0
        %1925 = vmatpush2.bf16.msra.mxu0 %v1654
        %1926 = vmatprep.subr.bf16.mxu0 0
        %1927 = vmatpush2.bf16.msra.mxu0 %v1653
        %1928 = vmatprep.mubr.bf16.mxu0 %v1289
        %1929 = vmatmul.mubr.bf16.gmra.mxu0 %v1409
        %v1930 = vpop.f32.mrf.mxu0
        %v1931 = vadd.f32 %v1770, %v1930
        %v1932 = vpop.f32.mrf.mxu0
        %v1933 = vpop.f32.mrf.mxu0
        %v1934 = vadd.f32 %v1773, %v1933
        %v1935 = vpop.f32.mrf.mxu0
        %1936 = vmatprep.mubr.bf16.mxu0 %v1293
        %1937 = vmatmul.mubr.bf16.gmra.mxu0 %v1413
        %v1938 = vpop.f32.mrf.mxu0
        %v1939 = vadd.f32 %v1778, %v1938
        %v1940 = vpop.f32.mrf.mxu0
        %v1941 = vpop.f32.mrf.mxu0
        %v1942 = vadd.f32 %v1781, %v1941
        %v1943 = vpop.f32.mrf.mxu0
        %1944 = vmatprep.mubr.bf16.mxu0 %v1297
        %1945 = vmatmul.mubr.bf16.gmra.mxu0 %v1417
        %v1946 = vpop.f32.mrf.mxu0
        %v1947 = vadd.f32 %v1786, %v1946
        %v1948 = vpop.f32.mrf.mxu0
        %v1949 = vpop.f32.mrf.mxu0
        %v1950 = vadd.f32 %v1789, %v1949
        %v1951 = vpop.f32.mrf.mxu0
        %1952 = vmatprep.mubr.bf16.mxu0 %v1301
        %1953 = vmatmul.mubr.bf16.gmra.mxu0 %v1421
        %v1954 = vpop.f32.mrf.mxu0
        %v1955 = vadd.f32 %v1794, %v1954
        %v1956 = vpop.f32.mrf.mxu0
        %v1957 = vpop.f32.mrf.mxu0
        %v1958 = vadd.f32 %v1797, %v1957
        %v1959 = vpop.f32.mrf.mxu0
        %1960 = vmatprep.mubr.bf16.mxu0 %v1305
        %1961 = vmatmul.mubr.bf16.gmra.mxu0 %v1425
        %v1962 = vpop.f32.mrf.mxu0
        %v1963 = vadd.f32 %v1802, %v1962
        %v1964 = vpop.f32.mrf.mxu0
        %v1965 = vpop.f32.mrf.mxu0
        %v1966 = vadd.f32 %v1805, %v1965
        %v1967 = vpop.f32.mrf.mxu0
        %1968 = vmatprep.mubr.bf16.mxu0 %v1309
        %1969 = vmatmul.mubr.bf16.gmra.mxu0 %v1429
        %v1970 = vpop.f32.mrf.mxu0
        %v1971 = vadd.f32 %v1810, %v1970
        %v1972 = vpop.f32.mrf.mxu0
        %v1973 = vpop.f32.mrf.mxu0
        %v1974 = vadd.f32 %v1813, %v1973
        %v1975 = vpop.f32.mrf.mxu0
        %1976 = vmatprep.mubr.bf16.mxu0 %v1313
        %1977 = vmatmul.mubr.bf16.gmra.mxu0 %v1433
        %v1978 = vpop.f32.mrf.mxu0
        %v1979 = vadd.f32 %v1818, %v1978
        %v1980 = vpop.f32.mrf.mxu0
        %v1981 = vpop.f32.mrf.mxu0
        %v1982 = vadd.f32 %v1821, %v1981
        %v1983 = vpop.f32.mrf.mxu0
        %1984 = vmatprep.mubr.bf16.mxu0 %v1317
        %1985 = vmatmul.mubr.bf16.gmra.mxu0 %v1437
        %v1986 = vpop.f32.mrf.mxu0
        %v1987 = vadd.f32 %v1826, %v1986
        %v1988 = vpop.f32.mrf.mxu0
        %v1989 = vpop.f32.mrf.mxu0
        %v1990 = vadd.f32 %v1829, %v1989
        %v1991 = vpop.f32.mrf.mxu0
        %1992 = vmatprep.mubr.bf16.mxu0 %v1321
        %1993 = vmatmul.mubr.bf16.gmra.mxu0 %v1441
        %v1994 = vpop.f32.mrf.mxu0
        %v1995 = vadd.f32 %v1834, %v1994
        %v1996 = vpop.f32.mrf.mxu0
        %v1997 = vpop.f32.mrf.mxu0
        %v1998 = vadd.f32 %v1837, %v1997
        %v1999 = vpop.f32.mrf.mxu0
        %2000 = vmatprep.mubr.bf16.mxu0 %v1325
        %2001 = vmatmul.mubr.bf16.gmra.mxu0 %v1445
        %v2002 = vpop.f32.mrf.mxu0
        %v2003 = vadd.f32 %v1842, %v2002
        %v2004 = vpop.f32.mrf.mxu0
        %v2005 = vpop.f32.mrf.mxu0
        %v2006 = vadd.f32 %v1845, %v2005
        %v2007 = vpop.f32.mrf.mxu0
        %2008 = vmatprep.mubr.bf16.mxu0 %v1329
        %2009 = vmatmul.mubr.bf16.gmra.mxu0 %v1449
        %v2010 = vpop.f32.mrf.mxu0
        %v2011 = vadd.f32 %v1850, %v2010
        %v2012 = vpop.f32.mrf.mxu0
        %v2013 = vpop.f32.mrf.mxu0
        %v2014 = vadd.f32 %v1853, %v2013
        %v2015 = vpop.f32.mrf.mxu0
        %2016 = vmatprep.mubr.bf16.mxu0 %v1333
        %2017 = vmatmul.mubr.bf16.gmra.mxu0 %v1453
        %v2018 = vpop.f32.mrf.mxu0
        %v2019 = vadd.f32 %v1858, %v2018
        %v2020 = vpop.f32.mrf.mxu0
        %v2021 = vpop.f32.mrf.mxu0
        %v2022 = vadd.f32 %v1861, %v2021
        %v2023 = vpop.f32.mrf.mxu0
        %2024 = vmatprep.mubr.bf16.mxu0 %v1337
        %2025 = vmatmul.mubr.bf16.gmra.mxu0 %v1457
        %v2026 = vpop.f32.mrf.mxu0
        %v2027 = vadd.f32 %v1866, %v2026
        %v2028 = vpop.f32.mrf.mxu0
        %v2029 = vpop.f32.mrf.mxu0
        %v2030 = vadd.f32 %v1869, %v2029
        %v2031 = vpop.f32.mrf.mxu0
        %2032 = vmatprep.mubr.bf16.mxu0 %v1341
        %2033 = vmatmul.mubr.bf16.gmra.mxu0 %v1461
        %v2034 = vpop.f32.mrf.mxu0
        %v2035 = vadd.f32 %v1874, %v2034
        %v2036 = vpop.f32.mrf.mxu0
        %v2037 = vpop.f32.mrf.mxu0
        %v2038 = vadd.f32 %v1877, %v2037
        %v2039 = vpop.f32.mrf.mxu0
        %2040 = vmatprep.mubr.bf16.mxu0 %v1473
        %2041 = vmatmul.mubr.bf16.gmra.mxu0 %v1465
        %v2042 = vpop.f32.mrf.mxu0
        %v2043 = vadd.f32 %v1882, %v2042
        %v2044 = vpop.f32.mrf.mxu0
        %v2045 = vpop.f32.mrf.mxu0
        %v2046 = vadd.f32 %v1885, %v2045
        %v2047 = vpop.f32.mrf.mxu0
        %2048 = vmatprep.mubr.bf16.mxu0 %v1477
        %2049 = vmatmul.mubr.bf16.gmra.mxu0 %v1469
        %v2050 = vpop.f32.mrf.mxu0
        %v2051 = vadd.f32 %v1890, %v2050
        %v2052 = vpop.f32.mrf.mxu0
        %v2053 = vpop.f32.mrf.mxu0
        %v2054 = vadd.f32 %v1893, %v2053
        %v2055 = vpop.f32.mrf.mxu0
        %2056 = vdwg.mxu0
        %2057 = vmatprep.subr.bf16.mxu0 0
        %2058 = vmatpush1.bf16.msra.mxu0 0
        %2059 = vmatprep.subr.bf16.mxu0 0
        %2060 = vmatpush1.bf16.msra.mxu0 0
        %2061 = vmatprep.subr.bf16.mxu0 0
        %2062 = vmatpush1.bf16.msra.mxu0 0
        %2063 = vmatprep.subr.bf16.mxu0 0
        %2064 = vmatpush1.bf16.msra.mxu0 0
        %2065 = vmatprep.subr.bf16.mxu0 0
        %2066 = vmatpush1.bf16.msra.mxu0 %v1664
        %2067 = vmatprep.subr.bf16.mxu0 0
        %2068 = vmatpush1.bf16.msra.mxu0 %v1663
        %2069 = vmatprep.subr.bf16.mxu0 0
        %2070 = vmatpush1.bf16.msra.mxu0 %v1662
        %2071 = vmatprep.subr.bf16.mxu0 0
        %2072 = vmatpush1.bf16.msra.mxu0 %v1661
        %2073 = vmatprep.subr.bf16.mxu0 0
        %2074 = vmatpush2.bf16.msra.mxu0 0
        %2075 = vmatprep.subr.bf16.mxu0 0
        %2076 = vmatpush2.bf16.msra.mxu0 0
        %2077 = vmatprep.subr.bf16.mxu0 0
        %2078 = vmatpush2.bf16.msra.mxu0 0
        %2079 = vmatprep.subr.bf16.mxu0 0
        %2080 = vmatpush2.bf16.msra.mxu0 0
        %2081 = vmatprep.subr.bf16.mxu0 0
        %2082 = vmatpush2.bf16.msra.mxu0 0
        %2083 = vmatprep.subr.bf16.mxu0 0
        %2084 = vmatpush2.bf16.msra.mxu0 0
        %2085 = vmatprep.subr.bf16.mxu0 0
        %2086 = vmatpush2.bf16.msra.mxu0 0
        %2087 = vmatprep.subr.bf16.mxu0 0
        %2088 = vmatpush2.bf16.msra.mxu0 0
        %2089 = vmatprep.mubr.bf16.mxu0 0
        %2090 = vmatmul.mubr.bf16.gmra.mxu0 %v1701
        %v2091 = vpop.f32.mrf.mxu0
        %v2092 = vadd.f32 %v1931, %v2091
        %v2093 = vpop.f32.mrf.mxu0
        %v2094 = vpop.f32.mrf.mxu0
        %v2095 = vadd.f32 %v1934, %v2094
        %v2096 = vpop.f32.mrf.mxu0
        %2097 = vmatprep.mubr.bf16.mxu0 0
        %2098 = vmatmul.mubr.bf16.gmra.mxu0 %v1703
        %v2099 = vpop.f32.mrf.mxu0
        %v2100 = vadd.f32 %v1939, %v2099
        %v2101 = vpop.f32.mrf.mxu0
        %v2102 = vpop.f32.mrf.mxu0
        %v2103 = vadd.f32 %v1942, %v2102
        %v2104 = vpop.f32.mrf.mxu0
        %2105 = vmatprep.mubr.bf16.mxu0 0
        %2106 = vmatmul.mubr.bf16.gmra.mxu0 %v1705
        %v2107 = vpop.f32.mrf.mxu0
        %v2108 = vadd.f32 %v1947, %v2107
        %v2109 = vpop.f32.mrf.mxu0
        %v2110 = vpop.f32.mrf.mxu0
        %v2111 = vadd.f32 %v1950, %v2110
        %v2112 = vpop.f32.mrf.mxu0
        %2113 = vmatprep.mubr.bf16.mxu0 0
        %2114 = vmatmul.mubr.bf16.gmra.mxu0 %v1707
        %v2115 = vpop.f32.mrf.mxu0
        %v2116 = vadd.f32 %v1955, %v2115
        %v2117 = vpop.f32.mrf.mxu0
        %v2118 = vpop.f32.mrf.mxu0
        %v2119 = vadd.f32 %v1958, %v2118
        %v2120 = vpop.f32.mrf.mxu0
        %2121 = vmatprep.mubr.bf16.mxu0 0
        %2122 = vmatmul.mubr.bf16.gmra.mxu0 %v1709
        %v2123 = vpop.f32.mrf.mxu0
        %v2124 = vadd.f32 %v1963, %v2123
        %v2125 = vpop.f32.mrf.mxu0
        %v2126 = vpop.f32.mrf.mxu0
        %v2127 = vadd.f32 %v1966, %v2126
        %v2128 = vpop.f32.mrf.mxu0
        %2129 = vmatprep.mubr.bf16.mxu0 0
        %2130 = vmatmul.mubr.bf16.gmra.mxu0 %v1711
        %v2131 = vpop.f32.mrf.mxu0
        %v2132 = vadd.f32 %v1971, %v2131
        %v2133 = vpop.f32.mrf.mxu0
        %v2134 = vpop.f32.mrf.mxu0
        %v2135 = vadd.f32 %v1974, %v2134
        %v2136 = vpop.f32.mrf.mxu0
        %2137 = vmatprep.mubr.bf16.mxu0 0
        %2138 = vmatmul.mubr.bf16.gmra.mxu0 %v1713
        %v2139 = vpop.f32.mrf.mxu0
        %v2140 = vadd.f32 %v1979, %v2139
        %v2141 = vpop.f32.mrf.mxu0
        %v2142 = vpop.f32.mrf.mxu0
        %v2143 = vadd.f32 %v1982, %v2142
        %v2144 = vpop.f32.mrf.mxu0
        %2145 = vmatprep.mubr.bf16.mxu0 0
        %2146 = vmatmul.mubr.bf16.gmra.mxu0 %v1715
        %v2147 = vpop.f32.mrf.mxu0
        %v2148 = vadd.f32 %v1987, %v2147
        %v2149 = vpop.f32.mrf.mxu0
        %v2150 = vpop.f32.mrf.mxu0
        %v2151 = vadd.f32 %v1990, %v2150
        %v2152 = vpop.f32.mrf.mxu0
        %2153 = vmatprep.mubr.bf16.mxu0 0
        %2154 = vmatmul.mubr.bf16.gmra.mxu0 %v1717
        %v2155 = vpop.f32.mrf.mxu0
        %v2156 = vadd.f32 %v1995, %v2155
        %v2157 = vpop.f32.mrf.mxu0
        %v2158 = vpop.f32.mrf.mxu0
        %v2159 = vadd.f32 %v1998, %v2158
        %v2160 = vpop.f32.mrf.mxu0
        %2161 = vmatprep.mubr.bf16.mxu0 0
        %2162 = vmatmul.mubr.bf16.gmra.mxu0 %v1719
        %v2163 = vpop.f32.mrf.mxu0
        %v2164 = vadd.f32 %v2003, %v2163
        %v2165 = vpop.f32.mrf.mxu0
        %v2166 = vpop.f32.mrf.mxu0
        %v2167 = vadd.f32 %v2006, %v2166
        %v2168 = vpop.f32.mrf.mxu0
        %2169 = vmatprep.mubr.bf16.mxu0 0
        %2170 = vmatmul.mubr.bf16.gmra.mxu0 %v1721
        %v2171 = vpop.f32.mrf.mxu0
        %v2172 = vadd.f32 %v2011, %v2171
        %v2173 = vpop.f32.mrf.mxu0
        %v2174 = vpop.f32.mrf.mxu0
        %v2175 = vadd.f32 %v2014, %v2174
        %v2176 = vpop.f32.mrf.mxu0
        %2177 = vmatprep.mubr.bf16.mxu0 0
        %2178 = vmatmul.mubr.bf16.gmra.mxu0 %v1723
        %v2179 = vpop.f32.mrf.mxu0
        %v2180 = vadd.f32 %v2019, %v2179
        %v2181 = vpop.f32.mrf.mxu0
        %v2182 = vpop.f32.mrf.mxu0
        %v2183 = vadd.f32 %v2022, %v2182
        %v2184 = vpop.f32.mrf.mxu0
        %2185 = vmatprep.mubr.bf16.mxu0 0
        %2186 = vmatmul.mubr.bf16.gmra.mxu0 %v1725
        %v2187 = vpop.f32.mrf.mxu0
        %v2188 = vadd.f32 %v2027, %v2187
        %v2189 = vpop.f32.mrf.mxu0
        %v2190 = vpop.f32.mrf.mxu0
        %v2191 = vadd.f32 %v2030, %v2190
        %v2192 = vpop.f32.mrf.mxu0
        %2193 = vmatprep.mubr.bf16.mxu0 0
        %2194 = vmatmul.mubr.bf16.gmra.mxu0 %v1727
        %v2195 = vpop.f32.mrf.mxu0
        %v2196 = vadd.f32 %v2035, %v2195
        %v2197 = vpop.f32.mrf.mxu0
        %v2198 = vpop.f32.mrf.mxu0
        %v2199 = vadd.f32 %v2038, %v2198
        %v2200 = vpop.f32.mrf.mxu0
        %2201 = vmatprep.mubr.bf16.mxu0 0
        %2202 = vmatmul.mubr.bf16.gmra.mxu0 %v1730
        %v2203 = vpop.f32.mrf.mxu0
        %v2204 = vadd.f32 %v2043, %v2203
        %v2205 = vpop.f32.mrf.mxu0
        %v2206 = vpop.f32.mrf.mxu0
        %v2207 = vadd.f32 %v2046, %v2206
        %v2208 = vpop.f32.mrf.mxu0
        %2209 = vmatprep.mubr.bf16.mxu0 0
        %2210 = vmatmul.mubr.bf16.gmra.mxu0 %v1733
        %v2211 = vpop.f32.mrf.mxu0
        %v2212 = vadd.f32 %v2051, %v2211
        %v2213 = vpop.f32.mrf.mxu0
        %v2214 = vpop.f32.mrf.mxu0
        %v2215 = vadd.f32 %v2054, %v2214
        %v2216 = vpop.f32.mrf.mxu0
        %2217 = vdwg.mxu0
        %v2218 = vmax.f32 %v2092, 0.0
        %v2219 = vmax.f32 %v2095, 0.0
        %v2220 = vmax.f32 %v2100, 0.0
        %v2221 = vmax.f32 %v2103, 0.0
        %v2222 = vmax.f32 %v2108, 0.0
        %v2223 = vmax.f32 %v2111, 0.0
        %v2224 = vmax.f32 %v2116, 0.0
        %v2225 = vmax.f32 %v2119, 0.0
        %v2226 = vmax.f32 %v2124, 0.0
        %v2227 = vmax.f32 %v2127, 0.0
        %v2228 = vmax.f32 %v2132, 0.0
        %v2229 = vmax.f32 %v2135, 0.0
        %v2230 = vmax.f32 %v2140, 0.0
        %v2231 = vmax.f32 %v2143, 0.0
        %v2232 = vmax.f32 %v2148, 0.0
        %v2233 = vmax.f32 %v2151, 0.0
        %v2234 = vmax.f32 %v2156, 0.0
        %v2235 = vmax.f32 %v2159, 0.0
        %v2236 = vmax.f32 %v2164, 0.0
        %v2237 = vmax.f32 %v2167, 0.0
        %v2238 = vmax.f32 %v2172, 0.0
        %v2239 = vmax.f32 %v2175, 0.0
        %v2240 = vmax.f32 %v2180, 0.0
        %v2241 = vmax.f32 %v2183, 0.0
        %v2242 = vmax.f32 %v2188, 0.0
        %v2243 = vmax.f32 %v2191, 0.0
        %v2244 = vmax.f32 %v2196, 0.0
        %v2245 = vmax.f32 %v2199, 0.0
        %v2246 = vmax.f32 %v2204, 0.0
        %v2247 = vmax.f32 %v2207, 0.0
        %v2248 = vmax.f32 %v2212, 0.0
        %v2249 = vmax.f32 %v2215, 0.0
        %v2250 = vpack.c.bf16 %v2219, %v2218
        %v2251 = vpack.c.bf16 %v2221, %v2220
        %v2252 = vpack.c.bf16 %v2223, %v2222
        %v2253 = vpack.c.bf16 %v2225, %v2224
        %v2254 = vpack.c.bf16 %v2227, %v2226
        %v2255 = vpack.c.bf16 %v2229, %v2228
        %v2256 = vpack.c.bf16 %v2231, %v2230
        %v2257 = vpack.c.bf16 %v2233, %v2232
        %v2258 = vpack.c.bf16 %v2235, %v2234
        %v2259 = vpack.c.bf16 %v2237, %v2236
        %v2260 = vpack.c.bf16 %v2239, %v2238
        %v2261 = vpack.c.bf16 %v2241, %v2240
        %v2262 = vpack.c.bf16 %v2243, %v2242
        %v2263 = vpack.c.bf16 %v2245, %v2244
        %v2264 = vpack.c.bf16 %v2247, %v2246
        %v2265 = vpack.c.bf16 %v2249, %v2248
        %v2267 = vshrl.u32 0, 16
        %v2269 = vrot.slane %v2267, 7
        %v2270 = vshll.u32 0, 16
        %v2272 = vor.u32 %v2269, %v2270
        %v2274 = vshrl.u32 %v2250, 16
        %v2276 = vrot.slane %v2274, 7
        %v2277 = vshll.u32 %v2250, 16
        %v2279 = vor.u32 %v2276, %v2277
        %v2281 = vshrl.u32 %v2251, 16
        %v2283 = vrot.slane %v2281, 7
        %v2284 = vshll.u32 %v2251, 16
        %v2286 = vor.u32 %v2283, %v2284
        %v2288 = vshrl.u32 %v2252, 16
        %v2290 = vrot.slane %v2288, 7
        %v2291 = vshll.u32 %v2252, 16
        %v2293 = vor.u32 %v2290, %v2291
        %v2295 = vshrl.u32 %v2253, 16
        %v2297 = vrot.slane %v2295, 7
        %v2298 = vshll.u32 %v2253, 16
        %v2300 = vor.u32 %v2297, %v2298
        %v2302 = vshrl.u32 %v2254, 16
        %v2304 = vrot.slane %v2302, 7
        %v2305 = vshll.u32 %v2254, 16
        %v2307 = vor.u32 %v2304, %v2305
        %v2309 = vshrl.u32 %v2255, 16
        %v2311 = vrot.slane %v2309, 7
        %v2312 = vshll.u32 %v2255, 16
        %v2314 = vor.u32 %v2311, %v2312
        %v2316 = vshrl.u32 %v2256, 16
        %v2318 = vrot.slane %v2316, 7
        %v2319 = vshll.u32 %v2256, 16
        %v2321 = vor.u32 %v2318, %v2319
        %v2323 = vshrl.u32 %v2257, 16
        %v2325 = vrot.slane %v2323, 7
        %v2326 = vshll.u32 %v2257, 16
        %v2328 = vor.u32 %v2325, %v2326
        %v2330 = vshrl.u32 %v2258, 16
        %v2332 = vrot.slane %v2330, 7
        %v2333 = vshll.u32 %v2258, 16
        %v2335 = vor.u32 %v2332, %v2333
        %v2337 = vshrl.u32 %v2259, 16
        %v2339 = vrot.slane %v2337, 7
        %v2340 = vshll.u32 %v2259, 16
        %v2342 = vor.u32 %v2339, %v2340
        %v2344 = vshrl.u32 %v2260, 16
        %v2346 = vrot.slane %v2344, 7
        %v2347 = vshll.u32 %v2260, 16
        %v2349 = vor.u32 %v2346, %v2347
        %v2351 = vshrl.u32 %v2261, 16
        %v2353 = vrot.slane %v2351, 7
        %v2354 = vshll.u32 %v2261, 16
        %v2356 = vor.u32 %v2353, %v2354
        %v2358 = vshrl.u32 %v2262, 16
        %v2360 = vrot.slane %v2358, 7
        %v2361 = vshll.u32 %v2262, 16
        %v2363 = vor.u32 %v2360, %v2361
        %v2365 = vshrl.u32 %v2263, 16
        %v2367 = vrot.slane %v2365, 7
        %v2368 = vshll.u32 %v2263, 16
        %v2370 = vor.u32 %v2367, %v2368
        %v2372 = vshrl.u32 %v2264, 16
        %v2374 = vrot.slane %v2372, 7
        %v2375 = vshll.u32 %v2264, 16
        %v2377 = vor.u32 %v2374, %v2375
        %v2379 = vshrl.u32 %v2265, 16
        %v2381 = vrot.slane %v2379, 7
        %v2382 = vshll.u32 %v2265, 16
        %v2384 = vor.u32 %v2381, %v2382
        %vm2419 = vcmask 1040384
        %vm2420 = vsmask.f32 256
        %vm2421 = vmand %vm2419, %vm2420
        %v2422 = vsel %vm2421, 0, %v2272
        %v2423 = vsel %vm2421, 0, %v2279
        %v2424 = vsel %vm2421, 0, %v2286
        %v2425 = vsel %vm2421, 0, %v2293
        %v2426 = vsel %vm2421, 0, %v2300
        %v2427 = vsel %vm2421, 0, %v2307
        %v2428 = vsel %vm2421, 0, %v2314
        %v2429 = vsel %vm2421, 0, %v2321
        %v2430 = vsel %vm2421, 0, %v2328
        %v2431 = vsel %vm2421, 0, %v2335
        %v2432 = vsel %vm2421, 0, %v2342
        %v2433 = vsel %vm2421, 0, %v2349
        %v2434 = vsel %vm2421, 0, %v2356
        %v2435 = vsel %vm2421, 0, %v2363
        %v2436 = vsel %vm2421, 0, %v2370
        %v2437 = vsel %vm2421, 0, %v2377
        %v2438 = vsel %vm2421, 0, %v2384
        %v2439 = vsel %vm2421, %v2269, 0
        %v2440 = vsel %vm2421, %v2276, 0
        %v2441 = vsel %vm2421, %v2283, 0
        %v2442 = vsel %vm2421, %v2290, 0
        %v2443 = vsel %vm2421, %v2297, 0
        %v2444 = vsel %vm2421, %v2304, 0
        %v2445 = vsel %vm2421, %v2311, 0
        %v2446 = vsel %vm2421, %v2318, 0
        %v2447 = vsel %vm2421, %v2325, 0
        %v2448 = vsel %vm2421, %v2332, 0
        %v2449 = vsel %vm2421, %v2339, 0
        %v2450 = vsel %vm2421, %v2346, 0
        %v2451 = vsel %vm2421, %v2353, 0
        %v2452 = vsel %vm2421, %v2360, 0
        %v2453 = vsel %vm2421, %v2367, 0
        %v2454 = vsel %vm2421, %v2374, 0
        %v2455 = vsel %vm2421, %v2381, 0
        %v2456 = vld [vmem:[%s4] sm:$0xf]
        %v2457 = vld [vmem:[%s4 + $0x4] sm:$0xf]
        %v2458 = vld [vmem:[%s4 + $0x8] sm:$0xf]
        %v2459 = vld [vmem:[%s4 + $0xc] sm:$0xf]
        %v2460 = vld [vmem:[%s4 + $0x10] sm:$0xf]
        %v2461 = vld [vmem:[%s4 + $0x14] sm:$0xf]
        %v2462 = vld [vmem:[%s4 + $0x18] sm:$0xf]
        %v2463 = vld [vmem:[%s4 + $0x1c] sm:$0xf]
        %v2464 = vld [vmem:[%s4 + $0x20] sm:$0xf]
        %v2465 = vld [vmem:[%s4 + $0x24] sm:$0xf]
        %v2466 = vld [vmem:[%s4 + $0x28] sm:$0xf]
        %v2467 = vld [vmem:[%s4 + $0x2c] sm:$0xf]
        %v2468 = vld [vmem:[%s4 + $0x30] sm:$0xf]
        %v2469 = vld [vmem:[%s4 + $0x34] sm:$0xf]
        %v2470 = vld [vmem:[%s4 + $0x38] sm:$0xf]
        %v2471 = vld [vmem:[%s4 + $0x3c] sm:$0xf]
        %v2472 = vld [vmem:[%s4 + $0x40] sm:$0xf]
        %v2473 = vld [vmem:[%s4 + $0x44] sm:$0xf]
        %v2474 = vld [vmem:[%s4 + $0x48] sm:$0xf]
        %v2475 = vld [vmem:[%s4 + $0x4c] sm:$0xf]
        %v2476 = vld [vmem:[%s4 + $0x50] sm:$0xf]
        %v2477 = vld [vmem:[%s4 + $0x54] sm:$0xf]
        %v2478 = vld [vmem:[%s4 + $0x58] sm:$0xf]
        %v2479 = vld [vmem:[%s4 + $0x5c] sm:$0xf]
        %v2480 = vld [vmem:[%s4 + $0x60] sm:$0xf]
        %v2481 = vld [vmem:[%s4 + $0x64] sm:$0xf]
        %v2482 = vld [vmem:[%s4 + $0x68] sm:$0xf]
        %v2483 = vld [vmem:[%s4 + $0x6c] sm:$0xf]
        %v2484 = vld [vmem:[%s4 + $0x70] sm:$0xf]
        %v2485 = vld [vmem:[%s4 + $0x74] sm:$0xf]
        %v2486 = vld [vmem:[%s4 + $0x78] sm:$0xf]
        %v2487 = vld [vmem:[%s4 + $0x7c] sm:$0xf]
        %v2488 = vld [vmem:[%s4 + $0x80] sm:$0xf]
        %v2489 = vld [vmem:[%s4 + $0x84] sm:$0xf]
        %v2490 = vld [vmem:[%s4 + $0x88] sm:$0xf]
        %v2491 = vld [vmem:[%s4 + $0x8c] sm:$0xf]
        %v2492 = vld [vmem:[%s4 + $0x90] sm:$0xf]
        %v2493 = vld [vmem:[%s4 + $0x94] sm:$0xf]
        %v2494 = vld [vmem:[%s4 + $0x98] sm:$0xf]
        %v2495 = vld [vmem:[%s4 + $0x9c] sm:$0xf]
        %v2496 = vld [vmem:[%s4 + $0xa0] sm:$0xf]
        %v2497 = vld [vmem:[%s4 + $0xa4] sm:$0xf]
        %v2498 = vld [vmem:[%s4 + $0xa8] sm:$0xf]
        %v2499 = vld [vmem:[%s4 + $0xac] sm:$0xf]
        %v2500 = vld [vmem:[%s4 + $0xb0] sm:$0xf]
        %v2501 = vld [vmem:[%s4 + $0xb4] sm:$0xf]
        %v2502 = vld [vmem:[%s4 + $0xb8] sm:$0xf]
        %v2503 = vld [vmem:[%s4 + $0xbc] sm:$0xf]
        %v2504 = vld [vmem:[%s4 + $0xc0] sm:$0xf]
        %v2505 = vld [vmem:[%s4 + $0xc4] sm:$0xf]
        %v2506 = vld [vmem:[%s4 + $0xc8] sm:$0xf]
        %v2507 = vld [vmem:[%s4 + $0xcc] sm:$0xf]
        %v2508 = vld [vmem:[%s4 + $0xd0] sm:$0xf]
        %v2509 = vld [vmem:[%s4 + $0xd4] sm:$0xf]
        %v2510 = vld [vmem:[%s4 + $0xd8] sm:$0xf]
        %v2511 = vld [vmem:[%s4 + $0xdc] sm:$0xf]
        %v2512 = vld [vmem:[%s4 + $0xe0] sm:$0xf]
        %v2513 = vld [vmem:[%s4 + $0xe4] sm:$0xf]
        %v2514 = vld [vmem:[%s4 + $0xe8] sm:$0xf]
        %v2515 = vld [vmem:[%s4 + $0xec] sm:$0xf]
        %v2516 = vld [vmem:[%s4 + $0xf0] sm:$0xf]
        %v2517 = vld [vmem:[%s4 + $0xf4] sm:$0xf]
        %v2518 = vld [vmem:[%s4 + $0xf8] sm:$0xf]
        %v2519 = vld [vmem:[%s4 + $0xfc] sm:$0xf]
        %v2520 = vld [vmem:[%s4 + $0x100] sm:$0xf]
        %v2521 = vld [vmem:[%s4 + $0x104] sm:$0xf]
        %v2522 = vld [vmem:[%s4 + $0x108] sm:$0xf]
        %v2523 = vld [vmem:[%s4 + $0x10c] sm:$0xf]
        %v2524 = vld [vmem:[%s4 + $0x110] sm:$0xf]
        %v2525 = vld [vmem:[%s4 + $0x114] sm:$0xf]
        %v2526 = vld [vmem:[%s4 + $0x118] sm:$0xf]
        %v2527 = vld [vmem:[%s4 + $0x11c] sm:$0xf]
        %v2528 = vld [vmem:[%s5] sm:$0x1]
        %vm2529 = vsmask.f32 7424
        %v2531 = vshrl.u32 %v2422, 16
        %v2533 = vshll.u32 %v2422, 16
        %v2535 = vrot.slane %v2533, 1
        %v2536 = vor.u32 %v2531, %v2535
        %v2538 = vshll.u32 %v2439, 16
        %v2540 = vrot.slane %v2538, 1
        %v2541 = vsel %vm2529, %v2536, %v2540
        %v2543 = vshrl.u32 %v2423, 16
        %v2545 = vshll.u32 %v2423, 16
        %v2547 = vrot.slane %v2545, 1
        %v2548 = vor.u32 %v2543, %v2547
        %v2550 = vshll.u32 %v2440, 16
        %v2552 = vrot.slane %v2550, 1
        %v2553 = vsel %vm2529, %v2548, %v2552
        %v2555 = vshrl.u32 %v2424, 16
        %v2557 = vshll.u32 %v2424, 16
        %v2559 = vrot.slane %v2557, 1
        %v2560 = vor.u32 %v2555, %v2559
        %v2562 = vshll.u32 %v2441, 16
        %v2564 = vrot.slane %v2562, 1
        %v2565 = vsel %vm2529, %v2560, %v2564
        %v2567 = vshrl.u32 %v2425, 16
        %v2569 = vshll.u32 %v2425, 16
        %v2571 = vrot.slane %v2569, 1
        %v2572 = vor.u32 %v2567, %v2571
        %v2574 = vshll.u32 %v2442, 16
        %v2576 = vrot.slane %v2574, 1
        %v2577 = vsel %vm2529, %v2572, %v2576
        %v2579 = vshrl.u32 %v2426, 16
        %v2581 = vshll.u32 %v2426, 16
        %v2583 = vrot.slane %v2581, 1
        %v2584 = vor.u32 %v2579, %v2583
        %v2586 = vshll.u32 %v2443, 16
        %v2588 = vrot.slane %v2586, 1
        %v2589 = vsel %vm2529, %v2584, %v2588
        %v2591 = vshrl.u32 %v2427, 16
        %v2593 = vshll.u32 %v2427, 16
        %v2595 = vrot.slane %v2593, 1
        %v2596 = vor.u32 %v2591, %v2595
        %v2598 = vshll.u32 %v2444, 16
        %v2600 = vrot.slane %v2598, 1
        %v2601 = vsel %vm2529, %v2596, %v2600
        %v2603 = vshrl.u32 %v2428, 16
        %v2605 = vshll.u32 %v2428, 16
        %v2607 = vrot.slane %v2605, 1
        %v2608 = vor.u32 %v2603, %v2607
        %v2610 = vshll.u32 %v2445, 16
        %v2612 = vrot.slane %v2610, 1
        %v2613 = vsel %vm2529, %v2608, %v2612
        %v2615 = vshrl.u32 %v2429, 16
        %v2617 = vshll.u32 %v2429, 16
        %v2619 = vrot.slane %v2617, 1
        %v2620 = vor.u32 %v2615, %v2619
        %v2622 = vshll.u32 %v2446, 16
        %v2624 = vrot.slane %v2622, 1
        %v2625 = vsel %vm2529, %v2620, %v2624
        %v2627 = vshrl.u32 %v2430, 16
        %v2629 = vshll.u32 %v2430, 16
        %v2631 = vrot.slane %v2629, 1
        %v2632 = vor.u32 %v2627, %v2631
        %v2634 = vshll.u32 %v2447, 16
        %v2636 = vrot.slane %v2634, 1
        %v2637 = vsel %vm2529, %v2632, %v2636
        %v2639 = vshrl.u32 %v2431, 16
        %v2641 = vshll.u32 %v2431, 16
        %v2643 = vrot.slane %v2641, 1
        %v2644 = vor.u32 %v2639, %v2643
        %v2646 = vshll.u32 %v2448, 16
        %v2648 = vrot.slane %v2646, 1
        %v2649 = vsel %vm2529, %v2644, %v2648
        %v2651 = vshrl.u32 %v2432, 16
        %v2653 = vshll.u32 %v2432, 16
        %v2655 = vrot.slane %v2653, 1
        %v2656 = vor.u32 %v2651, %v2655
        %v2658 = vshll.u32 %v2449, 16
        %v2660 = vrot.slane %v2658, 1
        %v2661 = vsel %vm2529, %v2656, %v2660
        %v2663 = vshrl.u32 %v2433, 16
        %v2665 = vshll.u32 %v2433, 16
        %v2667 = vrot.slane %v2665, 1
        %v2668 = vor.u32 %v2663, %v2667
        %v2670 = vshll.u32 %v2450, 16
        %v2672 = vrot.slane %v2670, 1
        %v2673 = vsel %vm2529, %v2668, %v2672
        %v2675 = vshrl.u32 %v2434, 16
        %v2677 = vshll.u32 %v2434, 16
        %v2679 = vrot.slane %v2677, 1
        %v2680 = vor.u32 %v2675, %v2679
        %v2682 = vshll.u32 %v2451, 16
        %v2684 = vrot.slane %v2682, 1
        %v2685 = vsel %vm2529, %v2680, %v2684
        %v2687 = vshrl.u32 %v2435, 16
        %v2689 = vshll.u32 %v2435, 16
        %v2691 = vrot.slane %v2689, 1
        %v2692 = vor.u32 %v2687, %v2691
        %v2694 = vshll.u32 %v2452, 16
        %v2696 = vrot.slane %v2694, 1
        %v2697 = vsel %vm2529, %v2692, %v2696
        %v2699 = vshrl.u32 %v2436, 16
        %v2701 = vshll.u32 %v2436, 16
        %v2703 = vrot.slane %v2701, 1
        %v2704 = vor.u32 %v2699, %v2703
        %v2706 = vshll.u32 %v2453, 16
        %v2708 = vrot.slane %v2706, 1
        %v2709 = vsel %vm2529, %v2704, %v2708
        %v2711 = vshrl.u32 %v2437, 16
        %v2713 = vshll.u32 %v2437, 16
        %v2715 = vrot.slane %v2713, 1
        %v2716 = vor.u32 %v2711, %v2715
        %v2718 = vshll.u32 %v2454, 16
        %v2720 = vrot.slane %v2718, 1
        %v2721 = vsel %vm2529, %v2716, %v2720
        %vm2754 = vcmask 1046528
        %v2755 = vrot.slane %v2422, 1
        %v2756 = vrot.slane %v2439, 1
        %v2757 = vsel %vm2754, %v2755, %v2756
        %v2758 = vrot.slane %v2423, 1
        %v2759 = vrot.slane %v2440, 1
        %v2760 = vsel %vm2754, %v2758, %v2759
        %v2761 = vrot.slane %v2424, 1
        %v2762 = vrot.slane %v2441, 1
        %v2763 = vsel %vm2754, %v2761, %v2762
        %v2764 = vrot.slane %v2425, 1
        %v2765 = vrot.slane %v2442, 1
        %v2766 = vsel %vm2754, %v2764, %v2765
        %v2767 = vrot.slane %v2426, 1
        %v2768 = vrot.slane %v2443, 1
        %v2769 = vsel %vm2754, %v2767, %v2768
        %v2770 = vrot.slane %v2427, 1
        %v2771 = vrot.slane %v2444, 1
        %v2772 = vsel %vm2754, %v2770, %v2771
        %v2773 = vrot.slane %v2428, 1
        %v2774 = vrot.slane %v2445, 1
        %v2775 = vsel %vm2754, %v2773, %v2774
        %v2776 = vrot.slane %v2429, 1
        %v2777 = vrot.slane %v2446, 1
        %v2778 = vsel %vm2754, %v2776, %v2777
        %v2779 = vrot.slane %v2430, 1
        %v2780 = vrot.slane %v2447, 1
        %v2781 = vsel %vm2754, %v2779, %v2780
        %v2782 = vrot.slane %v2431, 1
        %v2783 = vrot.slane %v2448, 1
        %v2784 = vsel %vm2754, %v2782, %v2783
        %v2785 = vrot.slane %v2432, 1
        %v2786 = vrot.slane %v2449, 1
        %v2787 = vsel %vm2754, %v2785, %v2786
        %v2788 = vrot.slane %v2433, 1
        %v2789 = vrot.slane %v2450, 1
        %v2790 = vsel %vm2754, %v2788, %v2789
        %v2791 = vrot.slane %v2434, 1
        %v2792 = vrot.slane %v2451, 1
        %v2793 = vsel %vm2754, %v2791, %v2792
        %v2794 = vrot.slane %v2435, 1
        %v2795 = vrot.slane %v2452, 1
        %v2796 = vsel %vm2754, %v2794, %v2795
        %v2797 = vrot.slane %v2436, 1
        %v2798 = vrot.slane %v2453, 1
        %v2799 = vsel %vm2754, %v2797, %v2798
        %v2800 = vrot.slane %v2437, 1
        %v2801 = vrot.slane %v2454, 1
        %v2802 = vsel %vm2754, %v2800, %v2801
        %v2804 = vshrl.u32 %v2438, 16
        %v2806 = vshll.u32 %v2438, 16
        %v2808 = vrot.slane %v2806, 1
        %v2809 = vor.u32 %v2804, %v2808
        %v2811 = vshll.u32 %v2455, 16
        %v2813 = vrot.slane %v2811, 1
        %v2814 = vsel %vm2529, %v2809, %v2813
        %v2817 = vrot.slane %v2438, 1
        %v2818 = vrot.slane %v2455, 1
        %v2819 = vsel %vm2754, %v2817, %v2818
        %2820 = vrot.lane.b32.xlu0 %v2541, 64
        %v2821 = vpop.permute.xlu0 %2820
        %2822 = vrot.lane.b32.xlu0 %v2553, 64
        %v2823 = vpop.permute.xlu0 %2822
        %2824 = vrot.lane.b32.xlu0 %v2565, 64
        %v2825 = vpop.permute.xlu0 %2824
        %2826 = vrot.lane.b32.xlu0 %v2577, 64
        %v2827 = vpop.permute.xlu0 %2826
        %2828 = vrot.lane.b32.xlu0 %v2589, 64
        %v2829 = vpop.permute.xlu0 %2828
        %2830 = vrot.lane.b32.xlu0 %v2601, 64
        %v2831 = vpop.permute.xlu0 %2830
        %2832 = vrot.lane.b32.xlu0 %v2613, 64
        %v2833 = vpop.permute.xlu0 %2832
        %2834 = vrot.lane.b32.xlu0 %v2625, 64
        %v2835 = vpop.permute.xlu0 %2834
        %2836 = vrot.lane.b32.xlu0 %v2637, 64
        %v2837 = vpop.permute.xlu0 %2836
        %2838 = vrot.lane.b32.xlu0 %v2649, 64
        %v2839 = vpop.permute.xlu0 %2838
        %2840 = vrot.lane.b32.xlu0 %v2661, 64
        %v2841 = vpop.permute.xlu0 %2840
        %2842 = vrot.lane.b32.xlu0 %v2673, 64
        %v2843 = vpop.permute.xlu0 %2842
        %2844 = vrot.lane.b32.xlu0 %v2685, 64
        %v2845 = vpop.permute.xlu0 %2844
        %2846 = vrot.lane.b32.xlu0 %v2697, 64
        %v2847 = vpop.permute.xlu0 %2846
        %2848 = vrot.lane.b32.xlu0 %v2709, 64
        %v2849 = vpop.permute.xlu0 %2848
        %2850 = vrot.lane.b32.xlu0 %v2721, 64
        %v2851 = vpop.permute.xlu0 %2850
        %2852 = vrot.lane.b32.xlu0 %v2423, 64
        %v2853 = vpop.permute.xlu0 %2852
        %2854 = vrot.lane.b32.xlu0 %v2424, 64
        %v2855 = vpop.permute.xlu0 %2854
        %2856 = vrot.lane.b32.xlu0 %v2425, 64
        %v2857 = vpop.permute.xlu0 %2856
        %2858 = vrot.lane.b32.xlu0 %v2426, 64
        %v2859 = vpop.permute.xlu0 %2858
        %2860 = vrot.lane.b32.xlu0 %v2427, 64
        %v2861 = vpop.permute.xlu0 %2860
        %2862 = vrot.lane.b32.xlu0 %v2428, 64
        %v2863 = vpop.permute.xlu0 %2862
        %2864 = vrot.lane.b32.xlu0 %v2429, 64
        %v2865 = vpop.permute.xlu0 %2864
        %2866 = vrot.lane.b32.xlu0 %v2430, 64
        %v2867 = vpop.permute.xlu0 %2866
        %2868 = vrot.lane.b32.xlu0 %v2431, 64
        %v2869 = vpop.permute.xlu0 %2868
        %2870 = vrot.lane.b32.xlu0 %v2432, 64
        %v2871 = vpop.permute.xlu0 %2870
        %2872 = vrot.lane.b32.xlu0 %v2433, 64
        %v2873 = vpop.permute.xlu0 %2872
        %2874 = vrot.lane.b32.xlu0 %v2434, 64
        %v2875 = vpop.permute.xlu0 %2874
        %2876 = vrot.lane.b32.xlu0 %v2435, 64
        %v2877 = vpop.permute.xlu0 %2876
        %2878 = vrot.lane.b32.xlu0 %v2436, 64
        %v2879 = vpop.permute.xlu0 %2878
        %2880 = vrot.lane.b32.xlu0 %v2437, 64
        %v2881 = vpop.permute.xlu0 %2880
        %2882 = vrot.lane.b32.xlu0 %v2438, 64
        %v2883 = vpop.permute.xlu0 %2882
        %2884 = vrot.lane.b32.xlu0 %v2760, 64
        %v2885 = vpop.permute.xlu0 %2884
        %2886 = vrot.lane.b32.xlu0 %v2763, 64
        %v2887 = vpop.permute.xlu0 %2886
        %2888 = vrot.lane.b32.xlu0 %v2766, 64
        %v2889 = vpop.permute.xlu0 %2888
        %2890 = vrot.lane.b32.xlu0 %v2769, 64
        %v2891 = vpop.permute.xlu0 %2890
        %2892 = vrot.lane.b32.xlu0 %v2772, 64
        %v2893 = vpop.permute.xlu0 %2892
        %2894 = vrot.lane.b32.xlu0 %v2775, 64
        %v2895 = vpop.permute.xlu0 %2894
        %2896 = vrot.lane.b32.xlu0 %v2778, 64
        %v2897 = vpop.permute.xlu0 %2896
        %2898 = vrot.lane.b32.xlu0 %v2781, 64
        %v2899 = vpop.permute.xlu0 %2898
        %2900 = vrot.lane.b32.xlu0 %v2784, 64
        %v2901 = vpop.permute.xlu0 %2900
        %2902 = vrot.lane.b32.xlu0 %v2787, 64
        %v2903 = vpop.permute.xlu0 %2902
        %2904 = vrot.lane.b32.xlu0 %v2790, 64
        %v2905 = vpop.permute.xlu0 %2904
        %2906 = vrot.lane.b32.xlu0 %v2793, 64
        %v2907 = vpop.permute.xlu0 %2906
        %2908 = vrot.lane.b32.xlu0 %v2796, 64
        %v2909 = vpop.permute.xlu0 %2908
        %2910 = vrot.lane.b32.xlu0 %v2799, 64
        %v2911 = vpop.permute.xlu0 %2910
        %2912 = vrot.lane.b32.xlu0 %v2802, 64
        %v2913 = vpop.permute.xlu0 %2912
        %2914 = vrot.lane.b32.xlu0 %v2819, 64
        %v2915 = vpop.permute.xlu0 %2914
        %2916 = vrot.lane.b32.xlu0 %v2814, 64
        %v2917 = vpop.permute.xlu0 %2916
        %v2919 = vsel %vm1278, %v2422, %v2821
        %v2922 = vsel %vm1278, %v2423, %v2823
        %v2925 = vsel %vm1278, %v2424, %v2825
        %v2928 = vsel %vm1278, %v2425, %v2827
        %v2931 = vsel %vm1278, %v2426, %v2829
        %v2934 = vsel %vm1278, %v2427, %v2831
        %v2937 = vsel %vm1278, %v2428, %v2833
        %v2940 = vsel %vm1278, %v2429, %v2835
        %v2943 = vsel %vm1278, %v2430, %v2837
        %v2946 = vsel %vm1278, %v2431, %v2839
        %v2949 = vsel %vm1278, %v2432, %v2841
        %v2952 = vsel %vm1278, %v2433, %v2843
        %v2955 = vsel %vm1278, %v2434, %v2845
        %v2958 = vsel %vm1278, %v2435, %v2847
        %v2961 = vsel %vm1278, %v2436, %v2849
        %v2964 = vsel %vm1278, %v2437, %v2851
        %v2968 = vsel %vm1278, %v2757, %v2853
        %v2972 = vsel %vm1278, %v2760, %v2855
        %v2976 = vsel %vm1278, %v2763, %v2857
        %v2980 = vsel %vm1278, %v2766, %v2859
        %v2984 = vsel %vm1278, %v2769, %v2861
        %v2988 = vsel %vm1278, %v2772, %v2863
        %v2992 = vsel %vm1278, %v2775, %v2865
        %v2996 = vsel %vm1278, %v2778, %v2867
        %v3000 = vsel %vm1278, %v2781, %v2869
        %v3004 = vsel %vm1278, %v2784, %v2871
        %v3008 = vsel %vm1278, %v2787, %v2873
        %v3012 = vsel %vm1278, %v2790, %v2875
        %v3016 = vsel %vm1278, %v2793, %v2877
        %v3020 = vsel %vm1278, %v2796, %v2879
        %v3024 = vsel %vm1278, %v2799, %v2881
        %v3028 = vsel %vm1278, %v2802, %v2883
        %v3032 = vsel %vm1278, %v2553, %v2885
        %v3036 = vsel %vm1278, %v2565, %v2887
        %v3040 = vsel %vm1278, %v2577, %v2889
        %v3044 = vsel %vm1278, %v2589, %v2891
        %v3048 = vsel %vm1278, %v2601, %v2893
        %v3052 = vsel %vm1278, %v2613, %v2895
        %v3056 = vsel %vm1278, %v2625, %v2897
        %v3060 = vsel %vm1278, %v2637, %v2899
        %v3064 = vsel %vm1278, %v2649, %v2901
        %v3068 = vsel %vm1278, %v2661, %v2903
        %v3072 = vsel %vm1278, %v2673, %v2905
        %v3076 = vsel %vm1278, %v2685, %v2907
        %v3080 = vsel %vm1278, %v2697, %v2909
        %v3084 = vsel %vm1278, %v2709, %v2911
        %v3088 = vsel %vm1278, %v2721, %v2913
        %v3092 = vsel %vm1278, %v2814, %v2915
        %v3095 = vsel %vm1278, %v2438, %v2917
        %v3098 = vlaneseq
        %v3099 = vshrl.u32 %v3098, 7
        %v3100 = vsub.s32 0, %v3099
        %v3101 = vrot.slane %v2528, %v3100
        %v3175 = vunpack.c.l.b16 %v2456
        %v3176 = vunpack.c.l.b16 %v2457
        %v3177 = vunpack.c.l.b16 %v2458
        %v3178 = vunpack.c.l.b16 %v2459
        %v3179 = vunpack.c.l.b16 %v2460
        %v3180 = vunpack.c.l.b16 %v2461
        %v3181 = vunpack.c.l.b16 %v2462
        %v3182 = vunpack.c.l.b16 %v2463
        %v3183 = vunpack.c.l.b16 %v2464
        %v3184 = vunpack.c.l.b16 %v2465
        %v3185 = vunpack.c.l.b16 %v2466
        %v3186 = vunpack.c.l.b16 %v2467
        %v3187 = vunpack.c.l.b16 %v2468
        %v3188 = vunpack.c.l.b16 %v2469
        %v3189 = vunpack.c.l.b16 %v2470
        %v3190 = vunpack.c.l.b16 %v2471
        %v3191 = vunpack.c.l.b16 %v2472
        %v3192 = vunpack.c.l.b16 %v2473
        %v3193 = vunpack.c.l.b16 %v2474
        %v3194 = vunpack.c.l.b16 %v2475
        %v3195 = vunpack.c.l.b16 %v2476
        %v3196 = vunpack.c.l.b16 %v2477
        %v3197 = vunpack.c.l.b16 %v2478
        %v3198 = vunpack.c.l.b16 %v2479
        %v3199 = vunpack.c.l.b16 %v2480
        %v3200 = vunpack.c.l.b16 %v2481
        %v3201 = vunpack.c.l.b16 %v2482
        %v3202 = vunpack.c.l.b16 %v2483
        %v3203 = vunpack.c.l.b16 %v2484
        %v3204 = vunpack.c.l.b16 %v2485
        %v3205 = vunpack.c.l.b16 %v2486
        %v3206 = vunpack.c.l.b16 %v2487
        %v3207 = vunpack.c.l.b16 %v2488
        %v3208 = vunpack.c.l.b16 %v2489
        %v3209 = vunpack.c.l.b16 %v2490
        %v3210 = vunpack.c.l.b16 %v2491
        %v3211 = vunpack.c.l.b16 %v2492
        %v3212 = vunpack.c.l.b16 %v2493
        %v3213 = vunpack.c.l.b16 %v2494
        %v3214 = vunpack.c.l.b16 %v2495
        %v3215 = vunpack.c.l.b16 %v2496
        %v3216 = vunpack.c.l.b16 %v2497
        %v3217 = vunpack.c.l.b16 %v2498
        %v3218 = vunpack.c.l.b16 %v2499
        %v3219 = vunpack.c.l.b16 %v2500
        %v3220 = vunpack.c.l.b16 %v2501
        %v3221 = vunpack.c.l.b16 %v2502
        %v3222 = vunpack.c.l.b16 %v2503
        %v3223 = vunpack.c.l.b16 %v2504
        %v3224 = vunpack.c.l.b16 %v2505
        %v3225 = vunpack.c.l.b16 %v2506
        %v3226 = vunpack.c.l.b16 %v2507
        %v3227 = vunpack.c.l.b16 %v2508
        %v3228 = vunpack.c.l.b16 %v2509
        %v3229 = vunpack.c.l.b16 %v2510
        %v3230 = vunpack.c.l.b16 %v2511
        %v3231 = vunpack.c.l.b16 %v2512
        %v3232 = vunpack.c.l.b16 %v2513
        %v3233 = vunpack.c.l.b16 %v2514
        %v3234 = vunpack.c.l.b16 %v2515
        %v3235 = vunpack.c.l.b16 %v2516
        %v3236 = vunpack.c.l.b16 %v2517
        %v3237 = vunpack.c.l.b16 %v2518
        %v3238 = vunpack.c.l.b16 %v2519
        %v3239 = vunpack.c.l.b16 %v2520
        %v3240 = vunpack.c.l.b16 %v2521
        %v3241 = vunpack.c.l.b16 %v2522
        %v3242 = vunpack.c.l.b16 %v2523
        %v3243 = vunpack.c.l.b16 %v2524
        %v3244 = vunpack.c.l.b16 %v2525
        %v3245 = vunpack.c.l.b16 %v2526
        %v3246 = vunpack.c.l.b16 %v2527
        %v3247 = vpack.c.b16 %v3176, %v3175
        %v3248 = vpack.c.b16 %v3178, %v3177
        %v3249 = vpack.c.b16 %v3180, %v3179
        %v3250 = vpack.c.b16 %v3182, %v3181
        %v3251 = vpack.c.b16 %v3184, %v3183
        %v3252 = vpack.c.b16 %v3186, %v3185
        %v3253 = vpack.c.b16 %v3188, %v3187
        %v3254 = vpack.c.b16 %v3190, %v3189
        %v3255 = vpack.c.b16 %v3192, %v3191
        %v3256 = vpack.c.b16 %v3194, %v3193
        %v3257 = vpack.c.b16 %v3196, %v3195
        %v3258 = vpack.c.b16 %v3198, %v3197
        %v3259 = vpack.c.b16 %v3200, %v3199
        %v3260 = vpack.c.b16 %v3202, %v3201
        %v3261 = vpack.c.b16 %v3204, %v3203
        %v3262 = vpack.c.b16 %v3206, %v3205
        %v3263 = vpack.c.b16 %v3208, %v3207
        %v3264 = vpack.c.b16 %v3210, %v3209
        %v3265 = vpack.c.b16 %v3212, %v3211
        %v3266 = vpack.c.b16 %v3214, %v3213
        %v3267 = vpack.c.b16 %v3216, %v3215
        %v3268 = vpack.c.b16 %v3218, %v3217
        %v3269 = vpack.c.b16 %v3220, %v3219
        %v3270 = vpack.c.b16 %v3222, %v3221
        %v3271 = vpack.c.b16 %v3224, %v3223
        %v3272 = vpack.c.b16 %v3226, %v3225
        %v3273 = vpack.c.b16 %v3228, %v3227
        %v3274 = vpack.c.b16 %v3230, %v3229
        %v3275 = vpack.c.b16 %v3232, %v3231
        %v3276 = vpack.c.b16 %v3234, %v3233
        %v3277 = vpack.c.b16 %v3236, %v3235
        %v3278 = vpack.c.b16 %v3238, %v3237
        %v3279 = vpack.c.b16 %v3240, %v3239
        %v3280 = vpack.c.b16 %v3242, %v3241
        %v3281 = vpack.c.b16 %v3244, %v3243
        %v3282 = vpack.c.b16 %v3246, %v3245
        %v3319 = vsel %vm1278, %v2763, 0
        %v3321 = vsel %vm1278, %v2766, 0
        %v3323 = vsel %vm1278, %v2769, 0
        %v3325 = vsel %vm1278, %v2772, 0
        %v3327 = vsel %vm1278, %v2775, 0
        %v3329 = vsel %vm1278, %v2778, 0
        %v3331 = vsel %vm1278, %v2781, 0
        %v3333 = vsel %vm1278, %v2784, 0
        %v3335 = vsel %vm1278, %v2787, 0
        %v3337 = vsel %vm1278, %v2790, 0
        %v3339 = vsel %vm1278, %v2793, 0
        %v3341 = vsel %vm1278, %v2796, 0
        %v3343 = vsel %vm1278, %v2799, 0
        %v3345 = vsel %vm1278, %v2802, 0
        %v3348 = vsel %vm1278, %v2819, 0
        %v3350 = vsel %vm1278, %v2757, 0
        %3352 = vmatprep.subr.bf16.mxu0 0
        %3353 = vmatpush1.bf16.msra.mxu0 %v3254
        %3354 = vmatprep.subr.bf16.mxu0 0
        %3355 = vmatpush1.bf16.msra.mxu0 %v3253
        %3356 = vmatprep.subr.bf16.mxu0 0
        %3357 = vmatpush1.bf16.msra.mxu0 %v3252
        %3358 = vmatprep.subr.bf16.mxu0 0
        %3359 = vmatpush1.bf16.msra.mxu0 %v3251
        %3360 = vmatprep.subr.bf16.mxu0 0
        %3361 = vmatpush1.bf16.msra.mxu0 %v3250
        %3362 = vmatprep.subr.bf16.mxu0 0
        %3363 = vmatpush1.bf16.msra.mxu0 %v3249
        %3364 = vmatprep.subr.bf16.mxu0 0
        %3365 = vmatpush1.bf16.msra.mxu0 %v3248
        %3366 = vmatprep.subr.bf16.mxu0 0
        %3367 = vmatpush1.bf16.msra.mxu0 %v3247
        %3368 = vmatprep.subr.bf16.mxu0 0
        %3369 = vmatpush2.bf16.msra.mxu0 %v3262
        %3370 = vmatprep.subr.bf16.mxu0 0
        %3371 = vmatpush2.bf16.msra.mxu0 %v3261
        %3372 = vmatprep.subr.bf16.mxu0 0
        %3373 = vmatpush2.bf16.msra.mxu0 %v3260
        %3374 = vmatprep.subr.bf16.mxu0 0
        %3375 = vmatpush2.bf16.msra.mxu0 %v3259
        %3376 = vmatprep.subr.bf16.mxu0 0
        %3377 = vmatpush2.bf16.msra.mxu0 %v3258
        %3378 = vmatprep.subr.bf16.mxu0 0
        %3379 = vmatpush2.bf16.msra.mxu0 %v3257
        %3380 = vmatprep.subr.bf16.mxu0 0
        %3381 = vmatpush2.bf16.msra.mxu0 %v3256
        %3382 = vmatprep.subr.bf16.mxu0 0
        %3383 = vmatpush2.bf16.msra.mxu0 %v3255
        %3384 = vmatprep.mubr.bf16.mxu0 %v2968
        %3385 = vmatmul.mubr.bf16.gmra.mxu0 %v2919
        %v3386 = vpop.f32.mrf.mxu0
        %v3387 = vadd.f32 %v3101, %v3386
        %v3388 = vpop.f32.mrf.mxu0
        %v3389 = vpop.f32.mrf.mxu0
        %v3390 = vadd.f32 %v3101, %v3389
        %v3391 = vpop.f32.mrf.mxu0
        %3392 = vmatprep.mubr.bf16.mxu0 %v2972
        %3393 = vmatmul.mubr.bf16.gmra.mxu0 %v2922
        %v3394 = vpop.f32.mrf.mxu0
        %v3395 = vadd.f32 %v3101, %v3394
        %v3396 = vpop.f32.mrf.mxu0
        %v3397 = vpop.f32.mrf.mxu0
        %v3398 = vadd.f32 %v3101, %v3397
        %v3399 = vpop.f32.mrf.mxu0
        %3400 = vmatprep.mubr.bf16.mxu0 %v2976
        %3401 = vmatmul.mubr.bf16.gmra.mxu0 %v2925
        %v3402 = vpop.f32.mrf.mxu0
        %v3403 = vadd.f32 %v3101, %v3402
        %v3404 = vpop.f32.mrf.mxu0
        %v3405 = vpop.f32.mrf.mxu0
        %v3406 = vadd.f32 %v3101, %v3405
        %v3407 = vpop.f32.mrf.mxu0
        %3408 = vmatprep.mubr.bf16.mxu0 %v2980
        %3409 = vmatmul.mubr.bf16.gmra.mxu0 %v2928
        %v3410 = vpop.f32.mrf.mxu0
        %v3411 = vadd.f32 %v3101, %v3410
        %v3412 = vpop.f32.mrf.mxu0
        %v3413 = vpop.f32.mrf.mxu0
        %v3414 = vadd.f32 %v3101, %v3413
        %v3415 = vpop.f32.mrf.mxu0
        %3416 = vmatprep.mubr.bf16.mxu0 %v2984
        %3417 = vmatmul.mubr.bf16.gmra.mxu0 %v2931
        %v3418 = vpop.f32.mrf.mxu0
        %v3419 = vadd.f32 %v3101, %v3418
        %v3420 = vpop.f32.mrf.mxu0
        %v3421 = vpop.f32.mrf.mxu0
        %v3422 = vadd.f32 %v3101, %v3421
        %v3423 = vpop.f32.mrf.mxu0
        %3424 = vmatprep.mubr.bf16.mxu0 %v2988
        %3425 = vmatmul.mubr.bf16.gmra.mxu0 %v2934
        %v3426 = vpop.f32.mrf.mxu0
        %v3427 = vadd.f32 %v3101, %v3426
        %v3428 = vpop.f32.mrf.mxu0
        %v3429 = vpop.f32.mrf.mxu0
        %v3430 = vadd.f32 %v3101, %v3429
        %v3431 = vpop.f32.mrf.mxu0
        %3432 = vmatprep.mubr.bf16.mxu0 %v2992
        %3433 = vmatmul.mubr.bf16.gmra.mxu0 %v2937
        %v3434 = vpop.f32.mrf.mxu0
        %v3435 = vadd.f32 %v3101, %v3434
        %v3436 = vpop.f32.mrf.mxu0
        %v3437 = vpop.f32.mrf.mxu0
        %v3438 = vadd.f32 %v3101, %v3437
        %v3439 = vpop.f32.mrf.mxu0
        %3440 = vmatprep.mubr.bf16.mxu0 %v2996
        %3441 = vmatmul.mubr.bf16.gmra.mxu0 %v2940
        %v3442 = vpop.f32.mrf.mxu0
        %v3443 = vadd.f32 %v3101, %v3442
        %v3444 = vpop.f32.mrf.mxu0
        %v3445 = vpop.f32.mrf.mxu0
        %v3446 = vadd.f32 %v3101, %v3445
        %v3447 = vpop.f32.mrf.mxu0
        %3448 = vmatprep.mubr.bf16.mxu0 %v3000
        %3449 = vmatmul.mubr.bf16.gmra.mxu0 %v2943
        %v3450 = vpop.f32.mrf.mxu0
        %v3451 = vadd.f32 %v3101, %v3450
        %v3452 = vpop.f32.mrf.mxu0
        %v3453 = vpop.f32.mrf.mxu0
        %v3454 = vadd.f32 %v3101, %v3453
        %v3455 = vpop.f32.mrf.mxu0
        %3456 = vmatprep.mubr.bf16.mxu0 %v3004
        %3457 = vmatmul.mubr.bf16.gmra.mxu0 %v2946
        %v3458 = vpop.f32.mrf.mxu0
        %v3459 = vadd.f32 %v3101, %v3458
        %v3460 = vpop.f32.mrf.mxu0
        %v3461 = vpop.f32.mrf.mxu0
        %v3462 = vadd.f32 %v3101, %v3461
        %v3463 = vpop.f32.mrf.mxu0
        %3464 = vmatprep.mubr.bf16.mxu0 %v3008
        %3465 = vmatmul.mubr.bf16.gmra.mxu0 %v2949
        %v3466 = vpop.f32.mrf.mxu0
        %v3467 = vadd.f32 %v3101, %v3466
        %v3468 = vpop.f32.mrf.mxu0
        %v3469 = vpop.f32.mrf.mxu0
        %v3470 = vadd.f32 %v3101, %v3469
        %v3471 = vpop.f32.mrf.mxu0
        %3472 = vmatprep.mubr.bf16.mxu0 %v3012
        %3473 = vmatmul.mubr.bf16.gmra.mxu0 %v2952
        %v3474 = vpop.f32.mrf.mxu0
        %v3475 = vadd.f32 %v3101, %v3474
        %v3476 = vpop.f32.mrf.mxu0
        %v3477 = vpop.f32.mrf.mxu0
        %v3478 = vadd.f32 %v3101, %v3477
        %v3479 = vpop.f32.mrf.mxu0
        %3480 = vmatprep.mubr.bf16.mxu0 %v3016
        %3481 = vmatmul.mubr.bf16.gmra.mxu0 %v2955
        %v3482 = vpop.f32.mrf.mxu0
        %v3483 = vadd.f32 %v3101, %v3482
        %v3484 = vpop.f32.mrf.mxu0
        %v3485 = vpop.f32.mrf.mxu0
        %v3486 = vadd.f32 %v3101, %v3485
        %v3487 = vpop.f32.mrf.mxu0
        %3488 = vmatprep.mubr.bf16.mxu0 %v3020
        %3489 = vmatmul.mubr.bf16.gmra.mxu0 %v2958
        %v3490 = vpop.f32.mrf.mxu0
        %v3491 = vadd.f32 %v3101, %v3490
        %v3492 = vpop.f32.mrf.mxu0
        %v3493 = vpop.f32.mrf.mxu0
        %v3494 = vadd.f32 %v3101, %v3493
        %v3495 = vpop.f32.mrf.mxu0
        %3496 = vmatprep.mubr.bf16.mxu0 %v3024
        %3497 = vmatmul.mubr.bf16.gmra.mxu0 %v2961
        %v3498 = vpop.f32.mrf.mxu0
        %v3499 = vadd.f32 %v3101, %v3498
        %v3500 = vpop.f32.mrf.mxu0
        %v3501 = vpop.f32.mrf.mxu0
        %v3502 = vadd.f32 %v3101, %v3501
        %v3503 = vpop.f32.mrf.mxu0
        %3504 = vmatprep.mubr.bf16.mxu0 %v3028
        %3505 = vmatmul.mubr.bf16.gmra.mxu0 %v2964
        %v3506 = vpop.f32.mrf.mxu0
        %v3507 = vadd.f32 %v3101, %v3506
        %v3508 = vpop.f32.mrf.mxu0
        %v3509 = vpop.f32.mrf.mxu0
        %v3510 = vadd.f32 %v3101, %v3509
        %v3511 = vpop.f32.mrf.mxu0
        %3512 = vdwg.mxu0
        %3513 = vmatprep.subr.bf16.mxu0 0
        %3514 = vmatpush1.bf16.msra.mxu0 %v3270
        %3515 = vmatprep.subr.bf16.mxu0 0
        %3516 = vmatpush1.bf16.msra.mxu0 %v3269
        %3517 = vmatprep.subr.bf16.mxu0 0
        %3518 = vmatpush1.bf16.msra.mxu0 %v3268
        %3519 = vmatprep.subr.bf16.mxu0 0
        %3520 = vmatpush1.bf16.msra.mxu0 %v3267
        %3521 = vmatprep.subr.bf16.mxu0 0
        %3522 = vmatpush1.bf16.msra.mxu0 %v3266
        %3523 = vmatprep.subr.bf16.mxu0 0
        %3524 = vmatpush1.bf16.msra.mxu0 %v3265
        %3525 = vmatprep.subr.bf16.mxu0 0
        %3526 = vmatpush1.bf16.msra.mxu0 %v3264
        %3527 = vmatprep.subr.bf16.mxu0 0
        %3528 = vmatpush1.bf16.msra.mxu0 %v3263
        %3529 = vmatprep.subr.bf16.mxu0 0
        %3530 = vmatpush2.bf16.msra.mxu0 %v3278
        %3531 = vmatprep.subr.bf16.mxu0 0
        %3532 = vmatpush2.bf16.msra.mxu0 %v3277
        %3533 = vmatprep.subr.bf16.mxu0 0
        %3534 = vmatpush2.bf16.msra.mxu0 %v3276
        %3535 = vmatprep.subr.bf16.mxu0 0
        %3536 = vmatpush2.bf16.msra.mxu0 %v3275
        %3537 = vmatprep.subr.bf16.mxu0 0
        %3538 = vmatpush2.bf16.msra.mxu0 %v3274
        %3539 = vmatprep.subr.bf16.mxu0 0
        %3540 = vmatpush2.bf16.msra.mxu0 %v3273
        %3541 = vmatprep.subr.bf16.mxu0 0
        %3542 = vmatpush2.bf16.msra.mxu0 %v3272
        %3543 = vmatprep.subr.bf16.mxu0 0
        %3544 = vmatpush2.bf16.msra.mxu0 %v3271
        %3545 = vmatprep.mubr.bf16.mxu0 %v2925
        %3546 = vmatmul.mubr.bf16.gmra.mxu0 %v3032
        %v3547 = vpop.f32.mrf.mxu0
        %v3548 = vadd.f32 %v3387, %v3547
        %v3549 = vpop.f32.mrf.mxu0
        %v3550 = vpop.f32.mrf.mxu0
        %v3551 = vadd.f32 %v3390, %v3550
        %v3552 = vpop.f32.mrf.mxu0
        %3553 = vmatprep.mubr.bf16.mxu0 %v2928
        %3554 = vmatmul.mubr.bf16.gmra.mxu0 %v3036
        %v3555 = vpop.f32.mrf.mxu0
        %v3556 = vadd.f32 %v3395, %v3555
        %v3557 = vpop.f32.mrf.mxu0
        %v3558 = vpop.f32.mrf.mxu0
        %v3559 = vadd.f32 %v3398, %v3558
        %v3560 = vpop.f32.mrf.mxu0
        %3561 = vmatprep.mubr.bf16.mxu0 %v2931
        %3562 = vmatmul.mubr.bf16.gmra.mxu0 %v3040
        %v3563 = vpop.f32.mrf.mxu0
        %v3564 = vadd.f32 %v3403, %v3563
        %v3565 = vpop.f32.mrf.mxu0
        %v3566 = vpop.f32.mrf.mxu0
        %v3567 = vadd.f32 %v3406, %v3566
        %v3568 = vpop.f32.mrf.mxu0
        %3569 = vmatprep.mubr.bf16.mxu0 %v2934
        %3570 = vmatmul.mubr.bf16.gmra.mxu0 %v3044
        %v3571 = vpop.f32.mrf.mxu0
        %v3572 = vadd.f32 %v3411, %v3571
        %v3573 = vpop.f32.mrf.mxu0
        %v3574 = vpop.f32.mrf.mxu0
        %v3575 = vadd.f32 %v3414, %v3574
        %v3576 = vpop.f32.mrf.mxu0
        %3577 = vmatprep.mubr.bf16.mxu0 %v2937
        %3578 = vmatmul.mubr.bf16.gmra.mxu0 %v3048
        %v3579 = vpop.f32.mrf.mxu0
        %v3580 = vadd.f32 %v3419, %v3579
        %v3581 = vpop.f32.mrf.mxu0
        %v3582 = vpop.f32.mrf.mxu0
        %v3583 = vadd.f32 %v3422, %v3582
        %v3584 = vpop.f32.mrf.mxu0
        %3585 = vmatprep.mubr.bf16.mxu0 %v2940
        %3586 = vmatmul.mubr.bf16.gmra.mxu0 %v3052
        %v3587 = vpop.f32.mrf.mxu0
        %v3588 = vadd.f32 %v3427, %v3587
        %v3589 = vpop.f32.mrf.mxu0
        %v3590 = vpop.f32.mrf.mxu0
        %v3591 = vadd.f32 %v3430, %v3590
        %v3592 = vpop.f32.mrf.mxu0
        %3593 = vmatprep.mubr.bf16.mxu0 %v2943
        %3594 = vmatmul.mubr.bf16.gmra.mxu0 %v3056
        %v3595 = vpop.f32.mrf.mxu0
        %v3596 = vadd.f32 %v3435, %v3595
        %v3597 = vpop.f32.mrf.mxu0
        %v3598 = vpop.f32.mrf.mxu0
        %v3599 = vadd.f32 %v3438, %v3598
        %v3600 = vpop.f32.mrf.mxu0
        %3601 = vmatprep.mubr.bf16.mxu0 %v2946
        %3602 = vmatmul.mubr.bf16.gmra.mxu0 %v3060
        %v3603 = vpop.f32.mrf.mxu0
        %v3604 = vadd.f32 %v3443, %v3603
        %v3605 = vpop.f32.mrf.mxu0
        %v3606 = vpop.f32.mrf.mxu0
        %v3607 = vadd.f32 %v3446, %v3606
        %v3608 = vpop.f32.mrf.mxu0
        %3609 = vmatprep.mubr.bf16.mxu0 %v2949
        %3610 = vmatmul.mubr.bf16.gmra.mxu0 %v3064
        %v3611 = vpop.f32.mrf.mxu0
        %v3612 = vadd.f32 %v3451, %v3611
        %v3613 = vpop.f32.mrf.mxu0
        %v3614 = vpop.f32.mrf.mxu0
        %v3615 = vadd.f32 %v3454, %v3614
        %v3616 = vpop.f32.mrf.mxu0
        %3617 = vmatprep.mubr.bf16.mxu0 %v2952
        %3618 = vmatmul.mubr.bf16.gmra.mxu0 %v3068
        %v3619 = vpop.f32.mrf.mxu0
        %v3620 = vadd.f32 %v3459, %v3619
        %v3621 = vpop.f32.mrf.mxu0
        %v3622 = vpop.f32.mrf.mxu0
        %v3623 = vadd.f32 %v3462, %v3622
        %v3624 = vpop.f32.mrf.mxu0
        %3625 = vmatprep.mubr.bf16.mxu0 %v2955
        %3626 = vmatmul.mubr.bf16.gmra.mxu0 %v3072
        %v3627 = vpop.f32.mrf.mxu0
        %v3628 = vadd.f32 %v3467, %v3627
        %v3629 = vpop.f32.mrf.mxu0
        %v3630 = vpop.f32.mrf.mxu0
        %v3631 = vadd.f32 %v3470, %v3630
        %v3632 = vpop.f32.mrf.mxu0
        %3633 = vmatprep.mubr.bf16.mxu0 %v2958
        %3634 = vmatmul.mubr.bf16.gmra.mxu0 %v3076
        %v3635 = vpop.f32.mrf.mxu0
        %v3636 = vadd.f32 %v3475, %v3635
        %v3637 = vpop.f32.mrf.mxu0
        %v3638 = vpop.f32.mrf.mxu0
        %v3639 = vadd.f32 %v3478, %v3638
        %v3640 = vpop.f32.mrf.mxu0
        %3641 = vmatprep.mubr.bf16.mxu0 %v2961
        %3642 = vmatmul.mubr.bf16.gmra.mxu0 %v3080
        %v3643 = vpop.f32.mrf.mxu0
        %v3644 = vadd.f32 %v3483, %v3643
        %v3645 = vpop.f32.mrf.mxu0
        %v3646 = vpop.f32.mrf.mxu0
        %v3647 = vadd.f32 %v3486, %v3646
        %v3648 = vpop.f32.mrf.mxu0
        %3649 = vmatprep.mubr.bf16.mxu0 %v2964
        %3650 = vmatmul.mubr.bf16.gmra.mxu0 %v3084
        %v3651 = vpop.f32.mrf.mxu0
        %v3652 = vadd.f32 %v3491, %v3651
        %v3653 = vpop.f32.mrf.mxu0
        %v3654 = vpop.f32.mrf.mxu0
        %v3655 = vadd.f32 %v3494, %v3654
        %v3656 = vpop.f32.mrf.mxu0
        %3657 = vmatprep.mubr.bf16.mxu0 %v3095
        %3658 = vmatmul.mubr.bf16.gmra.mxu0 %v3088
        %v3659 = vpop.f32.mrf.mxu0
        %v3660 = vadd.f32 %v3499, %v3659
        %v3661 = vpop.f32.mrf.mxu0
        %v3662 = vpop.f32.mrf.mxu0
        %v3663 = vadd.f32 %v3502, %v3662
        %v3664 = vpop.f32.mrf.mxu0
        %3665 = vmatprep.mubr.bf16.mxu0 %v2919
        %3666 = vmatmul.mubr.bf16.gmra.mxu0 %v3092
        %v3667 = vpop.f32.mrf.mxu0
        %v3668 = vadd.f32 %v3507, %v3667
        %v3669 = vpop.f32.mrf.mxu0
        %v3670 = vpop.f32.mrf.mxu0
        %v3671 = vadd.f32 %v3510, %v3670
        %v3672 = vpop.f32.mrf.mxu0
        %3673 = vdwg.mxu0
        %3674 = vmatprep.subr.bf16.mxu0 0
        %3675 = vmatpush1.bf16.msra.mxu0 0
        %3676 = vmatprep.subr.bf16.mxu0 0
        %3677 = vmatpush1.bf16.msra.mxu0 0
        %3678 = vmatprep.subr.bf16.mxu0 0
        %3679 = vmatpush1.bf16.msra.mxu0 0
        %3680 = vmatprep.subr.bf16.mxu0 0
        %3681 = vmatpush1.bf16.msra.mxu0 0
        %3682 = vmatprep.subr.bf16.mxu0 0
        %3683 = vmatpush1.bf16.msra.mxu0 %v3282
        %3684 = vmatprep.subr.bf16.mxu0 0
        %3685 = vmatpush1.bf16.msra.mxu0 %v3281
        %3686 = vmatprep.subr.bf16.mxu0 0
        %3687 = vmatpush1.bf16.msra.mxu0 %v3280
        %3688 = vmatprep.subr.bf16.mxu0 0
        %3689 = vmatpush1.bf16.msra.mxu0 %v3279
        %3690 = vmatprep.subr.bf16.mxu0 0
        %3691 = vmatpush2.bf16.msra.mxu0 0
        %3692 = vmatprep.subr.bf16.mxu0 0
        %3693 = vmatpush2.bf16.msra.mxu0 0
        %3694 = vmatprep.subr.bf16.mxu0 0
        %3695 = vmatpush2.bf16.msra.mxu0 0
        %3696 = vmatprep.subr.bf16.mxu0 0
        %3697 = vmatpush2.bf16.msra.mxu0 0
        %3698 = vmatprep.subr.bf16.mxu0 0
        %3699 = vmatpush2.bf16.msra.mxu0 0
        %3700 = vmatprep.subr.bf16.mxu0 0
        %3701 = vmatpush2.bf16.msra.mxu0 0
        %3702 = vmatprep.subr.bf16.mxu0 0
        %3703 = vmatpush2.bf16.msra.mxu0 0
        %3704 = vmatprep.subr.bf16.mxu0 0
        %3705 = vmatpush2.bf16.msra.mxu0 0
        %3706 = vmatprep.mubr.bf16.mxu0 0
        %3707 = vmatmul.mubr.bf16.gmra.mxu0 %v3319
        %v3708 = vpop.f32.mrf.mxu0
        %v3709 = vadd.f32 %v3548, %v3708
        %v3710 = vpop.f32.mrf.mxu0
        %v3711 = vpop.f32.mrf.mxu0
        %v3712 = vadd.f32 %v3551, %v3711
        %v3713 = vpop.f32.mrf.mxu0
        %3714 = vmatprep.mubr.bf16.mxu0 0
        %3715 = vmatmul.mubr.bf16.gmra.mxu0 %v3321
        %v3716 = vpop.f32.mrf.mxu0
        %v3717 = vadd.f32 %v3556, %v3716
        %v3718 = vpop.f32.mrf.mxu0
        %v3719 = vpop.f32.mrf.mxu0
        %v3720 = vadd.f32 %v3559, %v3719
        %v3721 = vpop.f32.mrf.mxu0
        %3722 = vmatprep.mubr.bf16.mxu0 0
        %3723 = vmatmul.mubr.bf16.gmra.mxu0 %v3323
        %v3724 = vpop.f32.mrf.mxu0
        %v3725 = vadd.f32 %v3564, %v3724
        %v3726 = vpop.f32.mrf.mxu0
        %v3727 = vpop.f32.mrf.mxu0
        %v3728 = vadd.f32 %v3567, %v3727
        %v3729 = vpop.f32.mrf.mxu0
        %3730 = vmatprep.mubr.bf16.mxu0 0
        %3731 = vmatmul.mubr.bf16.gmra.mxu0 %v3325
        %v3732 = vpop.f32.mrf.mxu0
        %v3733 = vadd.f32 %v3572, %v3732
        %v3734 = vpop.f32.mrf.mxu0
        %v3735 = vpop.f32.mrf.mxu0
        %v3736 = vadd.f32 %v3575, %v3735
        %v3737 = vpop.f32.mrf.mxu0
        %3738 = vmatprep.mubr.bf16.mxu0 0
        %3739 = vmatmul.mubr.bf16.gmra.mxu0 %v3327
        %v3740 = vpop.f32.mrf.mxu0
        %v3741 = vadd.f32 %v3580, %v3740
        %v3742 = vpop.f32.mrf.mxu0
        %v3743 = vpop.f32.mrf.mxu0
        %v3744 = vadd.f32 %v3583, %v3743
        %v3745 = vpop.f32.mrf.mxu0
        %3746 = vmatprep.mubr.bf16.mxu0 0
        %3747 = vmatmul.mubr.bf16.gmra.mxu0 %v3329
        %v3748 = vpop.f32.mrf.mxu0
        %v3749 = vadd.f32 %v3588, %v3748
        %v3750 = vpop.f32.mrf.mxu0
        %v3751 = vpop.f32.mrf.mxu0
        %v3752 = vadd.f32 %v3591, %v3751
        %v3753 = vpop.f32.mrf.mxu0
        %3754 = vmatprep.mubr.bf16.mxu0 0
        %3755 = vmatmul.mubr.bf16.gmra.mxu0 %v3331
        %v3756 = vpop.f32.mrf.mxu0
        %v3757 = vadd.f32 %v3596, %v3756
        %v3758 = vpop.f32.mrf.mxu0
        %v3759 = vpop.f32.mrf.mxu0
        %v3760 = vadd.f32 %v3599, %v3759
        %v3761 = vpop.f32.mrf.mxu0
        %3762 = vmatprep.mubr.bf16.mxu0 0
        %3763 = vmatmul.mubr.bf16.gmra.mxu0 %v3333
        %v3764 = vpop.f32.mrf.mxu0
        %v3765 = vadd.f32 %v3604, %v3764
        %v3766 = vpop.f32.mrf.mxu0
        %v3767 = vpop.f32.mrf.mxu0
        %v3768 = vadd.f32 %v3607, %v3767
        %v3769 = vpop.f32.mrf.mxu0
        %3770 = vmatprep.mubr.bf16.mxu0 0
        %3771 = vmatmul.mubr.bf16.gmra.mxu0 %v3335
        %v3772 = vpop.f32.mrf.mxu0
        %v3773 = vadd.f32 %v3612, %v3772
        %v3774 = vpop.f32.mrf.mxu0
        %v3775 = vpop.f32.mrf.mxu0
        %v3776 = vadd.f32 %v3615, %v3775
        %v3777 = vpop.f32.mrf.mxu0
        %3778 = vmatprep.mubr.bf16.mxu0 0
        %3779 = vmatmul.mubr.bf16.gmra.mxu0 %v3337
        %v3780 = vpop.f32.mrf.mxu0
        %v3781 = vadd.f32 %v3620, %v3780
        %v3782 = vpop.f32.mrf.mxu0
        %v3783 = vpop.f32.mrf.mxu0
        %v3784 = vadd.f32 %v3623, %v3783
        %v3785 = vpop.f32.mrf.mxu0
        %3786 = vmatprep.mubr.bf16.mxu0 0
        %3787 = vmatmul.mubr.bf16.gmra.mxu0 %v3339
        %v3788 = vpop.f32.mrf.mxu0
        %v3789 = vadd.f32 %v3628, %v3788
        %v3790 = vpop.f32.mrf.mxu0
        %v3791 = vpop.f32.mrf.mxu0
        %v3792 = vadd.f32 %v3631, %v3791
        %v3793 = vpop.f32.mrf.mxu0
        %3794 = vmatprep.mubr.bf16.mxu0 0
        %3795 = vmatmul.mubr.bf16.gmra.mxu0 %v3341
        %v3796 = vpop.f32.mrf.mxu0
        %v3797 = vadd.f32 %v3636, %v3796
        %v3798 = vpop.f32.mrf.mxu0
        %v3799 = vpop.f32.mrf.mxu0
        %v3800 = vadd.f32 %v3639, %v3799
        %v3801 = vpop.f32.mrf.mxu0
        %3802 = vmatprep.mubr.bf16.mxu0 0
        %3803 = vmatmul.mubr.bf16.gmra.mxu0 %v3343
        %v3804 = vpop.f32.mrf.mxu0
        %v3805 = vadd.f32 %v3644, %v3804
        %v3806 = vpop.f32.mrf.mxu0
        %v3807 = vpop.f32.mrf.mxu0
        %v3808 = vadd.f32 %v3647, %v3807
        %v3809 = vpop.f32.mrf.mxu0
        %3810 = vmatprep.mubr.bf16.mxu0 0
        %3811 = vmatmul.mubr.bf16.gmra.mxu0 %v3345
        %v3812 = vpop.f32.mrf.mxu0
        %v3813 = vadd.f32 %v3652, %v3812
        %v3814 = vpop.f32.mrf.mxu0
        %v3815 = vpop.f32.mrf.mxu0
        %v3816 = vadd.f32 %v3655, %v3815
        %v3817 = vpop.f32.mrf.mxu0
        %3818 = vmatprep.mubr.bf16.mxu0 0
        %3819 = vmatmul.mubr.bf16.gmra.mxu0 %v3348
        %v3820 = vpop.f32.mrf.mxu0
        %v3821 = vadd.f32 %v3660, %v3820
        %v3822 = vpop.f32.mrf.mxu0
        %v3823 = vpop.f32.mrf.mxu0
        %v3824 = vadd.f32 %v3663, %v3823
        %v3825 = vpop.f32.mrf.mxu0
        %3826 = vmatprep.mubr.bf16.mxu0 0
        %3827 = vmatmul.mubr.bf16.gmra.mxu0 %v3350
        %v3828 = vpop.f32.mrf.mxu0
        %v3829 = vadd.f32 %v3668, %v3828
        %v3830 = vpop.f32.mrf.mxu0
        %v3831 = vpop.f32.mrf.mxu0
        %v3832 = vadd.f32 %v3671, %v3831
        %v3833 = vpop.f32.mrf.mxu0
        %3834 = vdwg.mxu0
        %v3835 = vld [vmem:[%s269] sm:$0xff]
        %v3836 = vld [vmem:[%s269 + $0x8] sm:$0xff]
        %v3837 = vld [vmem:[%s269 + $0x10] sm:$0xff]
        %v3838 = vld [vmem:[%s269 + $0x18] sm:$0xff]
        %v3839 = vld [vmem:[%s269 + $0x20] sm:$0xff]
        %v3840 = vld [vmem:[%s269 + $0x28] sm:$0xff]
        %v3841 = vld [vmem:[%s269 + $0x30] sm:$0xff]
        %v3842 = vld [vmem:[%s269 + $0x38] sm:$0xff]
        %v3843 = vld [vmem:[%s269 + $0x40] sm:$0xff]
        %v3844 = vld [vmem:[%s269 + $0x48] sm:$0xff]
        %v3845 = vld [vmem:[%s269 + $0x50] sm:$0xff]
        %v3846 = vld [vmem:[%s269 + $0x58] sm:$0xff]
        %v3847 = vld [vmem:[%s269 + $0x60] sm:$0xff]
        %v3848 = vld [vmem:[%s269 + $0x68] sm:$0xff]
        %v3849 = vld [vmem:[%s269 + $0x70] sm:$0xff]
        %v3850 = vld [vmem:[%s269 + $0x78] sm:$0xff]
        %v3851 = vld [vmem:[%s269 + $0x80] sm:$0xff]
        %v3852 = vld [vmem:[%s269 + $0x88] sm:$0xff]
        %v3853 = vld [vmem:[%s269 + $0x90] sm:$0xff]
        %v3854 = vld [vmem:[%s269 + $0x98] sm:$0xff]
        %v3855 = vld [vmem:[%s269 + $0xa0] sm:$0xff]
        %v3856 = vld [vmem:[%s269 + $0xa8] sm:$0xff]
        %v3857 = vld [vmem:[%s269 + $0xb0] sm:$0xff]
        %v3858 = vld [vmem:[%s269 + $0xb8] sm:$0xff]
        %v3859 = vld [vmem:[%s269 + $0xc0] sm:$0xff]
        %v3860 = vld [vmem:[%s269 + $0xc8] sm:$0xff]
        %v3861 = vld [vmem:[%s269 + $0xd0] sm:$0xff]
        %v3862 = vld [vmem:[%s269 + $0xd8] sm:$0xff]
        %v3863 = vld [vmem:[%s269 + $0xe0] sm:$0xff]
        %v3864 = vld [vmem:[%s269 + $0xe8] sm:$0xff]
        %v3865 = vld [vmem:[%s269 + $0xf0] sm:$0xff]
        %v3866 = vld [vmem:[%s269 + $0xf8] sm:$0xff]
        %v3867 = vadd.f32 %v3835, %v3709
        %v3868 = vadd.f32 %v3836, %v3712
        %v3869 = vadd.f32 %v3837, %v3717
        %v3870 = vadd.f32 %v3838, %v3720
        %v3871 = vadd.f32 %v3839, %v3725
        %v3872 = vadd.f32 %v3840, %v3728
        %v3873 = vadd.f32 %v3841, %v3733
        %v3874 = vadd.f32 %v3842, %v3736
        %v3875 = vadd.f32 %v3843, %v3741
        %v3876 = vadd.f32 %v3844, %v3744
        %v3877 = vadd.f32 %v3845, %v3749
        %v3878 = vadd.f32 %v3846, %v3752
        %v3879 = vadd.f32 %v3847, %v3757
        %v3880 = vadd.f32 %v3848, %v3760
        %v3881 = vadd.f32 %v3849, %v3765
        %v3882 = vadd.f32 %v3850, %v3768
        %v3883 = vadd.f32 %v3851, %v3773
        %v3884 = vadd.f32 %v3852, %v3776
        %v3885 = vadd.f32 %v3853, %v3781
        %v3886 = vadd.f32 %v3854, %v3784
        %v3887 = vadd.f32 %v3855, %v3789
        %v3888 = vadd.f32 %v3856, %v3792
        %v3889 = vadd.f32 %v3857, %v3797
        %v3890 = vadd.f32 %v3858, %v3800
        %v3891 = vadd.f32 %v3859, %v3805
        %v3892 = vadd.f32 %v3860, %v3808
        %v3893 = vadd.f32 %v3861, %v3813
        %v3894 = vadd.f32 %v3862, %v3816
        %v3895 = vadd.f32 %v3863, %v3821
        %v3896 = vadd.f32 %v3864, %v3824
        %v3897 = vadd.f32 %v3865, %v3829
        %v3898 = vadd.f32 %v3866, %v3832
        %3899 = vst.msk [vmem:[%s259] sm:$0xff] %vm1278, %v3867
        %3900 = vst.msk [vmem:[%s259 + $0x8] sm:$0xff] %vm1278, %v3868
        %3901 = vst.msk [vmem:[%s259 + $0x10] sm:$0xff] %vm1278, %v3869
        %3902 = vst.msk [vmem:[%s259 + $0x18] sm:$0xff] %vm1278, %v3870
        %3903 = vst.msk [vmem:[%s259 + $0x20] sm:$0xff] %vm1278, %v3871
        %3904 = vst.msk [vmem:[%s259 + $0x28] sm:$0xff] %vm1278, %v3872
        %3905 = vst.msk [vmem:[%s259 + $0x30] sm:$0xff] %vm1278, %v3873
        %3906 = vst.msk [vmem:[%s259 + $0x38] sm:$0xff] %vm1278, %v3874
        %3907 = vst.msk [vmem:[%s259 + $0x40] sm:$0xff] %vm1278, %v3875
        %3908 = vst.msk [vmem:[%s259 + $0x48] sm:$0xff] %vm1278, %v3876
        %3909 = vst.msk [vmem:[%s259 + $0x50] sm:$0xff] %vm1278, %v3877
        %3910 = vst.msk [vmem:[%s259 + $0x58] sm:$0xff] %vm1278, %v3878
        %3911 = vst.msk [vmem:[%s259 + $0x60] sm:$0xff] %vm1278, %v3879
        %3912 = vst.msk [vmem:[%s259 + $0x68] sm:$0xff] %vm1278, %v3880
        %3913 = vst.msk [vmem:[%s259 + $0x70] sm:$0xff] %vm1278, %v3881
        %3914 = vst.msk [vmem:[%s259 + $0x78] sm:$0xff] %vm1278, %v3882
        %3915 = vst.msk [vmem:[%s259 + $0x80] sm:$0xff] %vm1278, %v3883
        %3916 = vst.msk [vmem:[%s259 + $0x88] sm:$0xff] %vm1278, %v3884
        %3917 = vst.msk [vmem:[%s259 + $0x90] sm:$0xff] %vm1278, %v3885
        %3918 = vst.msk [vmem:[%s259 + $0x98] sm:$0xff] %vm1278, %v3886
        %3919 = vst.msk [vmem:[%s259 + $0xa0] sm:$0xff] %vm1278, %v3887
        %3920 = vst.msk [vmem:[%s259 + $0xa8] sm:$0xff] %vm1278, %v3888
        %3921 = vst.msk [vmem:[%s259 + $0xb0] sm:$0xff] %vm1278, %v3889
        %3922 = vst.msk [vmem:[%s259 + $0xb8] sm:$0xff] %vm1278, %v3890
        %3923 = vst.msk [vmem:[%s259 + $0xc0] sm:$0xff] %vm1278, %v3891
        %3924 = vst.msk [vmem:[%s259 + $0xc8] sm:$0xff] %vm1278, %v3892
        %3925 = vst.msk [vmem:[%s259 + $0xd0] sm:$0xff] %vm1278, %v3893
        %3926 = vst.msk [vmem:[%s259 + $0xd8] sm:$0xff] %vm1278, %v3894
        %3927 = vst.msk [vmem:[%s259 + $0xe0] sm:$0xff] %vm1278, %v3895
        %3928 = vst.msk [vmem:[%s259 + $0xe8] sm:$0xff] %vm1278, %v3896
        %3929 = vst.msk [vmem:[%s259 + $0xf0] sm:$0xff] %vm1278, %v3897
        %3930 = vst.msk [vmem:[%s259 + $0xf8] sm:$0xff] %vm1278, %v3898
        %s3931 = sand.u32 %s164, 1
        %s3932 = scalar_lea.sflag [#allocation3], %s3931
        %s3933 = sand.u32 %s164, 1
        %s3934 = smul.addr %s3933, 256
        %s3935 = scalar_lea.vmem [#allocation2], %s3934
        // Predicated region
        $region45: #{residual_block_nobn.1} parent=43 // pred_check
          %p3936 = pneg %p174
        $region46: #{residual_block_nobn.1} parent=43 // pred_check_branch
          %3938 = sbr.rel (%p3936) target = $region48
        $region47: #{residual_block_nobn.1} parent=43 // pred_region
          %s3940 = ssub.s32 4096, 4096
          %3941 = vsyncadd %s3932, %s3940
          %s3942 = smul.addr %s20, 32
          %s3943 = smul.addr %s3942, 128
          %s3944 = scalar_lea.hbm %s6, %s3943
          %s3945 = sshll.u32 %s3935, 4
          %s3946 = int_to_ptr.vmem [resolvable:$true] %s3945
          %3951 = dma.vmem_to_hbm [thread:$0]  %s3946, 4096, %s3944, %s3932, 128, 128, 8
        $region48: #{residual_block_nobn.1} parent=43 // pred_fallthru
          _
      $region44: #{residual_block_nobn.1} parent=5 // pred_fallthru
        _
      %p3952 = scmp.le.s32.totalorder 2, %s15
      // Predicated region
      $region49: #{residual_block_nobn.1} parent=5 // pred_check
        %p3953 = pneg %p3952
      $region50: #{residual_block_nobn.1} parent=5 // pred_check_branch
        %3955 = sbr.rel (%p3953) target = $region52
      $region51: #{residual_block_nobn.1} parent=5 // pred_region
        %s3956 = ssub.s32 %s15, 2
        // Predicated region
        $region53: #{residual_block_nobn.1} parent=51 // pred_check
          %p3957 = pneg %p180
        $region54: #{residual_block_nobn.1} parent=51 // pred_check_branch
          %3959 = sbr.rel (%p3957) target = $region56
        $region55: #{residual_block_nobn.1} parent=51 // pred_region
          %s3960 = sand.u32 %s165, 1
          %s3961 = scalar_lea.sflag [#allocation3], %s3960
          %s3962 = sand.u32 %s165, 1
          %s3963 = smul.addr %s3962, 256
          %s3964 = scalar_lea.vmem [#allocation2], %s3963
          %3965 = dma.done %s3961, 4096
        $region56: #{residual_block_nobn.1} parent=51 // pred_fallthru
          _
      $region52: #{residual_block_nobn.1} parent=5 // pred_fallthru
        _
    $region6: #{residual_block_nobn.1} parent=1 // loop_footer
      %s19 = sadd.s32 1, %s15
    $region7: #{residual_block_nobn.1} parent=1 // loop_footer_branch
      %14 = sbr.rel target = $region3
    $region8: #{residual_block_nobn.1} parent=1 // loop_exit
      _
    %3966 = vsyncpa [#allocation3], 1
    %s3967 = scalar_lea.sflag [#allocation3], 1
    %3968 = vsyncpa %s3967, 1

</llo_original>
